<compile_context>
chip_gen: v7x
topology: tpu7x:2x2x1
jax: 0.10.0
libtpu: 0.0.40
codegen_flags: <defaults>
</compile_context>

<pallas_src>
import functools

import numpy as np

import jax
import jax.numpy as jnp
from jax.experimental import pallas as pl
from jax.experimental.pallas import tpu as pltpu

_KW = 4
_PAD = 1
_LRELU_SLOPE = 0.2
_IN_EPS = 1e-5


def _vmem_limit_bytes():
    """Generation-aware scoped-VMEM limit (v7x: 64 MiB physical per core)."""
    try:
        cap = int(pltpu.get_tpu_info().vmem_capacity_bytes)
    except Exception:
        return 32 * 1024 * 1024
    return int(min(max(cap - 16 * 1024 * 1024, 16 * 1024 * 1024),
                   100 * 1024 * 1024))


# ----------------------------- fused kernel --------------------------------

def _make_fused_kernel(layer_meta):
    """layer_meta: list of dict(norm=bool, act=bool, k=int), one per conv."""

    def instance_norm(acc, m_ref):
        # acc: (OH, OW*OC) f32.  Channels are interleaved on lanes as
        # (ow, oc); per-channel reduce/broadcast is a tiny precomputed
        # averaging matmul (m already carries the 1/(OH*OW) factor).
        mean_b = jnp.dot(jnp.sum(acc, axis=0, keepdims=True), m_ref[...],
                         preferred_element_type=jnp.float32)
        cen = acc - mean_b
        var_b = jnp.dot(jnp.sum(cen * cen, axis=0, keepdims=True), m_ref[...],
                        preferred_element_type=jnp.float32)
        return cen * jax.lax.rsqrt(var_b + _IN_EPS)

    def kernel(x_ref, *refs):
        o_ref = refs[-1]
        opnds = refs[:-1]
        a = x_ref[0].astype(jnp.bfloat16)            # (H, W*C), lanes = W*C
        idx = 0
        n_layers_total = len(layer_meta)
        for li, meta in enumerate(layer_meta):
            g_ref, s_ref, b_ref = opnds[idx], opnds[idx + 1], opnds[idx + 2]
            idx += 3
            # Conv2d(k=4, pad=1, stride s) as a sum over kernel rows i of
            #   (0/1 row-gather)  @  a  @  (weight-scatter matrix).
            acc = None
            for i in range(meta["k"]):
                rows = jnp.dot(g_ref[i], a,
                               preferred_element_type=jnp.float32)
                rows = rows.astype(jnp.bfloat16)      # exact (0/1 gather)
                part = jnp.dot(rows, s_ref[i],
                               preferred_element_type=jnp.float32)
                acc = part if acc is None else acc + part
            acc = acc + b_ref[...]                    # f32 epilogue
            if meta["norm"]:
                m_ref = opnds[idx]
                idx += 1
                acc = instance_norm(acc, m_ref)
            if meta["act"]:
                acc = jnp.where(acc >= 0.0, acc, _LRELU_SLOPE * acc)
            if li + 1 < n_layers_total:
                a = acc.astype(jnp.bfloat16)          # stays on-chip
            else:
                o_ref[0] = acc                        # final (OH, OW*1) map

    return kernel


# ------------------------ host-side operand packing ------------------------

def _build_conv_operands(w, b, h, w_sp, c, stride, with_norm):
    """w: (OC, C, 4, 4) f32, b: (OC,).  Activation layout is (H, W*C)."""
    oc = int(w.shape[0])
    k = int(w.shape[2])
    oh = (h + 2 * _PAD - k) // stride + 1
    ow = (w_sp + 2 * _PAD - k) // stride + 1

    # Row-gather matrices (per kernel row i): g[i] selects input row
    # oh*stride + i - pad (all-zero row => zero padding in H).
    g = np.zeros((k, oh, h), np.float32)
    for i in range(k):
        for r in range(oh):
            src = r * stride + i - _PAD
            if 0 <= src < h:
                g[i, r, src] = 1.0

    # Weight-scatter matrices: s[i][w*C + c, ow*OC + oc] = weight[oc, c, i, j]
    # where j is the kernel column matching (w, ow); zero => padding in W.
    s = np.zeros((k, w_sp * c, ow * oc), np.float32)
    for i in range(k):
        for col in range(ow):
            for j in range(k):
                src = col * stride + j - _PAD
                if 0 <= src < w_sp:
                    s[i, src * c:(src + 1) * c,
                      col * oc:(col + 1) * oc] = w[:, :, i, j].T

    bias_row = np.tile(np.asarray(b, np.float32), ow)[None, :]   # (1, OW*OC)

    m = None
    if with_norm:
        # Per-channel averaging matrix over the (ow, oc) lane interleave.
        m = np.tile(np.eye(oc, dtype=np.float32), (ow, ow)) / float(oh * ow)

    return g, s, bias_row, m, oh, ow


def pack_discriminator_params(layers, h, w_sp, c):
    packed = []
    for lyr in layers:
        w_np = np.asarray(lyr["w"], np.float32)
        b_np = np.asarray(lyr["b"], np.float32)
        g, s, brow, m, oh, ow = _build_conv_operands(
            w_np, b_np, h, w_sp, c, lyr["stride"], lyr["norm"])
        packed.append(dict(
            g=jnp.asarray(g, jnp.bfloat16),
            s=jnp.asarray(s, jnp.bfloat16),
            bias=jnp.asarray(brow, jnp.float32),
            m=None if m is None else jnp.asarray(m, jnp.float32),
            norm=lyr["norm"], act=lyr["act"], k=int(w_np.shape[2])))
        h, w_sp, c = oh, ow, int(w_np.shape[0])
    return dict(layers=packed, out_h=h, out_w=w_sp, out_c=c)


# ------------------------------- forward -----------------------------------

def _const_spec(arr):
    nd = arr.ndim
    return pl.BlockSpec(arr.shape, lambda i, _nd=nd: (0,) * _nd)


def nlayer_discriminator_forward(x_nchw, packed):
    b, c, h, w_sp = x_nchw.shape
    # NCHW -> (B, H, W*C) exactly once at model entry.
    x = jnp.transpose(x_nchw, (0, 2, 3, 1)).reshape(b, h, w_sp * c)

    layer_meta = [dict(norm=l["norm"], act=l["act"], k=l["k"])
                  for l in packed["layers"]]

    operands = []
    in_specs = [pl.BlockSpec((1, h, w_sp * c), lambda i: (i, 0, 0))]
    for lyr in packed["layers"]:
        arrs = (lyr["g"], lyr["s"], lyr["bias"])
        if lyr["norm"]:
            arrs = arrs + (lyr["m"],)
        for arr in arrs:
            operands.append(arr)
            in_specs.append(_const_spec(arr))

    oh = packed["out_h"]
    owoc = packed["out_w"] * packed["out_c"]
    out = pl.pallas_call(
        _make_fused_kernel(layer_meta),
        out_shape=jax.ShapeDtypeStruct((b, oh, owoc), jnp.float32),
        grid=(b,),
        in_specs=in_specs,
        out_specs=pl.BlockSpec((1, oh, owoc), lambda i: (i, 0, 0)),
        compiler_params=pltpu.CompilerParams(
            dimension_semantics=("parallel",),
            vmem_limit_bytes=_vmem_limit_bytes()),
    )(x, *operands)

    # (B, OH, OW*1) -> NCHW (B, 1, OH, OW) exactly once at model exit.
    return out.reshape(b, oh, packed["out_w"], packed["out_c"]).transpose(0, 3, 1, 2)


# ----------------------- parameter init (deterministic) --------------------

def init_nlayer_discriminator_params(key, input_nc, ndf, n_layers):
    """Mirrors NLayerDiscriminator.__init__ with Norm_layer='instance'
    (=> use_bias=True on all convs). Returns a list of layer dicts."""
    kw = 4

    def conv_params(k, oc, ic):
        k1, k2 = jax.random.split(k)
        fan_in = ic * kw * kw
        bound = 1.0 / float(np.sqrt(fan_in))
        w = jax.random.uniform(k1, (oc, ic, kw, kw), jnp.float32, -bound, bound)
        b = jax.random.uniform(k2, (oc,), jnp.float32, -bound, bound)
        return w, b

    keys = jax.random.split(key, n_layers + 2)
    layers = []

    # first conv: stride 2, LeakyReLU, no norm
    w, b = conv_params(keys[0], ndf, input_nc)
    layers.append(dict(w=w, b=b, stride=2, norm=False, act=True))

    nf_mult = 1
    for n in range(1, n_layers):
        nf_mult_prev = nf_mult
        nf_mult = min(2 ** n, 8)
        w, b = conv_params(keys[n], ndf * nf_mult, ndf * nf_mult_prev)
        layers.append(dict(w=w, b=b, stride=2, norm=True, act=True))

    nf_mult_prev = nf_mult
    nf_mult = min(2 ** n_layers, 8)
    w, b = conv_params(keys[n_layers], ndf * nf_mult, ndf * nf_mult_prev)
    layers.append(dict(w=w, b=b, stride=1, norm=True, act=True))

    # final 1-channel prediction map
    w, b = conv_params(keys[n_layers + 1], 1, ndf * nf_mult)
    layers.append(dict(w=w, b=b, stride=1, norm=False, act=False))
    return layers


# --------------------------- pure-JAX reference -----------------------------

def reference_forward(x_nchw, layers):
    a = x_nchw
    for lyr in layers:
        s = lyr["stride"]
        a = jax.lax.conv_general_dilated(
            a, lyr["w"], window_strides=(s, s), padding=((1, 1), (1, 1)),
            dimension_numbers=("NCHW", "OIHW", "NCHW"),
            precision=jax.lax.Precision.HIGHEST)
        a = a + lyr["b"][None, :, None, None]
        if lyr["norm"]:
            mean = jnp.mean(a, axis=(2, 3), keepdims=True)
            var = jnp.mean(jnp.square(a - mean), axis=(2, 3), keepdims=True)
            a = (a - mean) * jax.lax.rsqrt(var + _IN_EPS)
        if lyr["act"]:
            a = jnp.where(a >= 0.0, a, _LRELU_SLOPE * a)
    return a


# --------------------------------- main ------------------------------------

if __name__ == "__main__":
    # cfg: Input_nc=2 -> input_nc=4, Ndf=8, N_layers=2, Norm_layer='instance'
    B, INPUT_NC, H, W = 2, 4, 16, 16
    NDF, N_LAYERS = 8, 2

    key = jax.random.PRNGKey(0)
    kx, kp = jax.random.split(key)
    x = jax.random.normal(kx, (B, INPUT_NC, H, W), jnp.float32)
    params = init_nlayer_discriminator_params(kp, INPUT_NC, NDF, N_LAYERS)
    packed = pack_discriminator_params(params, H, W, INPUT_NC)

    # Close over packed operands so strides / flags stay static under jit.
    fwd = jax.jit(lambda inp: nlayer_discriminator_forward(inp, packed))
    out = jax.block_until_ready(fwd(x))

    # spatial chain: 16 -(s2)-> 8 -(s2)-> 4 -(s1,k4,p1)-> 3 -(s1,k4,p1)-> 2
    assert out.shape == (B, 1, 2, 2), out.shape
    assert out.dtype == jnp.float32

    # Correctness vs f32 XLA reference (bf16 MXU operands => ~1e-2 drift).
    ref = jax.block_until_ready(reference_forward(x, params))
    max_err = float(jnp.max(jnp.abs(out - ref)))
    assert max_err < 0.15, f"max abs err vs f32 reference: {max_err}"

    print("KERNEL_OK")
</pallas_src>

<mosaic_0001>
module attributes {stable_mosaic.version = 11 : i64} {
  func.func @kernel(%arg0: i32, %arg1: memref<1x16x64xf32, #tpu.memory_space<vmem>>, %arg2: memref<4x8x16xbf16, #tpu.memory_space<vmem>>, %arg3: memref<4x64x64xbf16, #tpu.memory_space<vmem>>, %arg4: memref<1x64xf32, #tpu.memory_space<vmem>>, %arg5: memref<4x4x8xbf16, #tpu.memory_space<vmem>>, %arg6: memref<4x64x64xbf16, #tpu.memory_space<vmem>>, %arg7: memref<1x64xf32, #tpu.memory_space<vmem>>, %arg8: memref<64x64xf32, #tpu.memory_space<vmem>>, %arg9: memref<4x3x4xbf16, #tpu.memory_space<vmem>>, %arg10: memref<4x64x96xbf16, #tpu.memory_space<vmem>>, %arg11: memref<1x96xf32, #tpu.memory_space<vmem>>, %arg12: memref<96x96xf32, #tpu.memory_space<vmem>>, %arg13: memref<4x2x3xbf16, #tpu.memory_space<vmem>>, %arg14: memref<4x96x2xbf16, #tpu.memory_space<vmem>>, %arg15: memref<1x2xf32, #tpu.memory_space<vmem>>, %arg16: memref<1x2x2xf32, #tpu.memory_space<vmem>>) attributes {dimension_semantics = [#tpu.dimension_semantics<parallel>], iteration_bounds = array<i64: 2>, scalar_prefetch = 0 : i64, scratch_operands = 0 : i64, tpu.core_type = #tpu.core_type<tc>, window_params = [{transform_indices = @transform_0, window_bounds = array<i64: 1, 16, 64>}, {pipeline_mode = #tpu.pipeline_mode<synchronous>, transform_indices = @transform_1, window_bounds = array<i64: 4, 8, 16>}, {pipeline_mode = #tpu.pipeline_mode<synchronous>, transform_indices = @transform_2, window_bounds = array<i64: 4, 64, 64>}, {pipeline_mode = #tpu.pipeline_mode<synchronous>, transform_indices = @transform_3, window_bounds = array<i64: 1, 64>}, {pipeline_mode = #tpu.pipeline_mode<synchronous>, transform_indices = @transform_4, window_bounds = array<i64: 4, 4, 8>}, {pipeline_mode = #tpu.pipeline_mode<synchronous>, transform_indices = @transform_5, window_bounds = array<i64: 4, 64, 64>}, {pipeline_mode = #tpu.pipeline_mode<synchronous>, transform_indices = @transform_6, window_bounds = array<i64: 1, 64>}, {pipeline_mode = #tpu.pipeline_mode<synchronous>, transform_indices = @transform_7, window_bounds = array<i64: 64, 64>}, {pipeline_mode = #tpu.pipeline_mode<synchronous>, transform_indices = @transform_8, window_bounds = array<i64: 4, 3, 4>}, {pipeline_mode = #tpu.pipeline_mode<synchronous>, transform_indices = @transform_9, window_bounds = array<i64: 4, 64, 96>}, {pipeline_mode = #tpu.pipeline_mode<synchronous>, transform_indices = @transform_10, window_bounds = array<i64: 1, 96>}, {pipeline_mode = #tpu.pipeline_mode<synchronous>, transform_indices = @transform_11, window_bounds = array<i64: 96, 96>}, {pipeline_mode = #tpu.pipeline_mode<synchronous>, transform_indices = @transform_12, window_bounds = array<i64: 4, 2, 3>}, {pipeline_mode = #tpu.pipeline_mode<synchronous>, transform_indices = @transform_13, window_bounds = array<i64: 4, 96, 2>}, {pipeline_mode = #tpu.pipeline_mode<synchronous>, transform_indices = @transform_14, window_bounds = array<i64: 1, 2>}, {transform_indices = @transform_15, window_bounds = array<i64: 1, 2, 2>}]} {
    %c0 = arith.constant 0 : index
    %c0_0 = arith.constant 0 : index
    %c0_1 = arith.constant 0 : index
    %0 = vector.load %arg1[%c0, %c0_0, %c0_1] : memref<1x16x64xf32, #tpu.memory_space<vmem>>, vector<1x16x64xf32>
    %1 = vector.shape_cast %0 : vector<1x16x64xf32> to vector<16x64xf32>
    %2 = arith.truncf %1 : vector<16x64xf32> to vector<16x64xbf16>
    %c0_2 = arith.constant 0 : index
    %c0_3 = arith.constant 0 : index
    %c0_4 = arith.constant 0 : index
    %3 = vector.load %arg2[%c0_2, %c0_3, %c0_4] : memref<4x8x16xbf16, #tpu.memory_space<vmem>>, vector<1x8x16xbf16>
    %4 = vector.shape_cast %3 : vector<1x8x16xbf16> to vector<8x16xbf16>
    %cst = arith.constant dense<0.000000e+00> : vector<8x64xf32>
    %5 = tpu.matmul %4, %2, %cst {dimension_numbers = #tpu.dot_dimension_numbers<[1], [0], [0], [1], [0, 0, 1, 1], [], []>} : vector<8x16xbf16>, vector<16x64xbf16>, vector<8x64xf32> -> vector<8x64xf32>
    %6 = arith.truncf %5 : vector<8x64xf32> to vector<8x64xbf16>
    %c0_5 = arith.constant 0 : index
    %c0_6 = arith.constant 0 : index
    %c0_7 = arith.constant 0 : index
    %7 = vector.load %arg3[%c0_5, %c0_6, %c0_7] : memref<4x64x64xbf16, #tpu.memory_space<vmem>>, vector<1x64x64xbf16>
    %8 = vector.shape_cast %7 : vector<1x64x64xbf16> to vector<64x64xbf16>
    %cst_8 = arith.constant dense<0.000000e+00> : vector<8x64xf32>
    %9 = tpu.matmul %6, %8, %cst_8 {dimension_numbers = #tpu.dot_dimension_numbers<[1], [0], [0], [1], [0, 0, 1, 1], [], []>} : vector<8x64xbf16>, vector<64x64xbf16>, vector<8x64xf32> -> vector<8x64xf32>
    %c1 = arith.constant 1 : index
    %c0_9 = arith.constant 0 : index
    %c0_10 = arith.constant 0 : index
    %10 = vector.load %arg2[%c1, %c0_9, %c0_10] : memref<4x8x16xbf16, #tpu.memory_space<vmem>>, vector<1x8x16xbf16>
    %11 = vector.shape_cast %10 : vector<1x8x16xbf16> to vector<8x16xbf16>
    %cst_11 = arith.constant dense<0.000000e+00> : vector<8x64xf32>
    %12 = tpu.matmul %11, %2, %cst_11 {dimension_numbers = #tpu.dot_dimension_numbers<[1], [0], [0], [1], [0, 0, 1, 1], [], []>} : vector<8x16xbf16>, vector<16x64xbf16>, vector<8x64xf32> -> vector<8x64xf32>
    %13 = arith.truncf %12 : vector<8x64xf32> to vector<8x64xbf16>
    %c1_12 = arith.constant 1 : index
    %c0_13 = arith.constant 0 : index
    %c0_14 = arith.constant 0 : index
    %14 = vector.load %arg3[%c1_12, %c0_13, %c0_14] : memref<4x64x64xbf16, #tpu.memory_space<vmem>>, vector<1x64x64xbf16>
    %15 = vector.shape_cast %14 : vector<1x64x64xbf16> to vector<64x64xbf16>
    %cst_15 = arith.constant dense<0.000000e+00> : vector<8x64xf32>
    %16 = tpu.matmul %13, %15, %cst_15 {dimension_numbers = #tpu.dot_dimension_numbers<[1], [0], [0], [1], [0, 0, 1, 1], [], []>} : vector<8x64xbf16>, vector<64x64xbf16>, vector<8x64xf32> -> vector<8x64xf32>
    %17 = arith.addf %9, %16 : vector<8x64xf32>
    %c2 = arith.constant 2 : index
    %c0_16 = arith.constant 0 : index
    %c0_17 = arith.constant 0 : index
    %18 = vector.load %arg2[%c2, %c0_16, %c0_17] : memref<4x8x16xbf16, #tpu.memory_space<vmem>>, vector<1x8x16xbf16>
    %19 = vector.shape_cast %18 : vector<1x8x16xbf16> to vector<8x16xbf16>
    %cst_18 = arith.constant dense<0.000000e+00> : vector<8x64xf32>
    %20 = tpu.matmul %19, %2, %cst_18 {dimension_numbers = #tpu.dot_dimension_numbers<[1], [0], [0], [1], [0, 0, 1, 1], [], []>} : vector<8x16xbf16>, vector<16x64xbf16>, vector<8x64xf32> -> vector<8x64xf32>
    %21 = arith.truncf %20 : vector<8x64xf32> to vector<8x64xbf16>
    %c2_19 = arith.constant 2 : index
    %c0_20 = arith.constant 0 : index
    %c0_21 = arith.constant 0 : index
    %22 = vector.load %arg3[%c2_19, %c0_20, %c0_21] : memref<4x64x64xbf16, #tpu.memory_space<vmem>>, vector<1x64x64xbf16>
    %23 = vector.shape_cast %22 : vector<1x64x64xbf16> to vector<64x64xbf16>
    %cst_22 = arith.constant dense<0.000000e+00> : vector<8x64xf32>
    %24 = tpu.matmul %21, %23, %cst_22 {dimension_numbers = #tpu.dot_dimension_numbers<[1], [0], [0], [1], [0, 0, 1, 1], [], []>} : vector<8x64xbf16>, vector<64x64xbf16>, vector<8x64xf32> -> vector<8x64xf32>
    %25 = arith.addf %17, %24 : vector<8x64xf32>
    %c3 = arith.constant 3 : index
    %c0_23 = arith.constant 0 : index
    %c0_24 = arith.constant 0 : index
    %26 = vector.load %arg2[%c3, %c0_23, %c0_24] : memref<4x8x16xbf16, #tpu.memory_space<vmem>>, vector<1x8x16xbf16>
    %27 = vector.shape_cast %26 : vector<1x8x16xbf16> to vector<8x16xbf16>
    %cst_25 = arith.constant dense<0.000000e+00> : vector<8x64xf32>
    %28 = tpu.matmul %27, %2, %cst_25 {dimension_numbers = #tpu.dot_dimension_numbers<[1], [0], [0], [1], [0, 0, 1, 1], [], []>} : vector<8x16xbf16>, vector<16x64xbf16>, vector<8x64xf32> -> vector<8x64xf32>
    %29 = arith.truncf %28 : vector<8x64xf32> to vector<8x64xbf16>
    %c3_26 = arith.constant 3 : index
    %c0_27 = arith.constant 0 : index
    %c0_28 = arith.constant 0 : index
    %30 = vector.load %arg3[%c3_26, %c0_27, %c0_28] : memref<4x64x64xbf16, #tpu.memory_space<vmem>>, vector<1x64x64xbf16>
    %31 = vector.shape_cast %30 : vector<1x64x64xbf16> to vector<64x64xbf16>
    %cst_29 = arith.constant dense<0.000000e+00> : vector<8x64xf32>
    %32 = tpu.matmul %29, %31, %cst_29 {dimension_numbers = #tpu.dot_dimension_numbers<[1], [0], [0], [1], [0, 0, 1, 1], [], []>} : vector<8x64xbf16>, vector<64x64xbf16>, vector<8x64xf32> -> vector<8x64xf32>
    %33 = arith.addf %25, %32 : vector<8x64xf32>
    %c0_30 = arith.constant 0 : index
    %c0_31 = arith.constant 0 : index
    %34 = vector.load %arg4[%c0_30, %c0_31] : memref<1x64xf32, #tpu.memory_space<vmem>>, vector<1x64xf32>
    %35 = vector.broadcast %34 : vector<1x64xf32> to vector<8x64xf32>
    %36 = arith.addf %33, %35 : vector<8x64xf32>
    %cst_32 = arith.constant 0.000000e+00 : f32
    %37 = vector.broadcast %cst_32 : f32 to vector<8x64xf32>
    %38 = arith.cmpf oge, %36, %37 : vector<8x64xf32>
    %cst_33 = arith.constant 2.000000e-01 : f32
    %39 = vector.broadcast %cst_33 : f32 to vector<8x64xf32>
    %40 = arith.mulf %39, %36 : vector<8x64xf32>
    %41 = arith.select %38, %36, %40 : vector<8x64xi1>, vector<8x64xf32>
    %42 = arith.truncf %41 : vector<8x64xf32> to vector<8x64xbf16>
    %c0_34 = arith.constant 0 : index
    %c0_35 = arith.constant 0 : index
    %c0_36 = arith.constant 0 : index
    %43 = vector.load %arg5[%c0_34, %c0_35, %c0_36] : memref<4x4x8xbf16, #tpu.memory_space<vmem>>, vector<1x4x8xbf16>
    %44 = vector.shape_cast %43 : vector<1x4x8xbf16> to vector<4x8xbf16>
    %cst_37 = arith.constant dense<0.000000e+00> : vector<4x64xf32>
    %45 = tpu.matmul %44, %42, %cst_37 {dimension_numbers = #tpu.dot_dimension_numbers<[1], [0], [0], [1], [0, 0, 1, 1], [], []>} : vector<4x8xbf16>, vector<8x64xbf16>, vector<4x64xf32> -> vector<4x64xf32>
    %46 = arith.truncf %45 : vector<4x64xf32> to vector<4x64xbf16>
    %c0_38 = arith.constant 0 : index
    %c0_39 = arith.constant 0 : index
    %c0_40 = arith.constant 0 : index
    %47 = vector.load %arg6[%c0_38, %c0_39, %c0_40] : memref<4x64x64xbf16, #tpu.memory_space<vmem>>, vector<1x64x64xbf16>
    %48 = vector.shape_cast %47 : vector<1x64x64xbf16> to vector<64x64xbf16>
    %cst_41 = arith.constant dense<0.000000e+00> : vector<4x64xf32>
    %49 = tpu.matmul %46, %48, %cst_41 {dimension_numbers = #tpu.dot_dimension_numbers<[1], [0], [0], [1], [0, 0, 1, 1], [], []>} : vector<4x64xbf16>, vector<64x64xbf16>, vector<4x64xf32> -> vector<4x64xf32>
    %c1_42 = arith.constant 1 : index
    %c0_43 = arith.constant 0 : index
    %c0_44 = arith.constant 0 : index
    %50 = vector.load %arg5[%c1_42, %c0_43, %c0_44] : memref<4x4x8xbf16, #tpu.memory_space<vmem>>, vector<1x4x8xbf16>
    %51 = vector.shape_cast %50 : vector<1x4x8xbf16> to vector<4x8xbf16>
    %cst_45 = arith.constant dense<0.000000e+00> : vector<4x64xf32>
    %52 = tpu.matmul %51, %42, %cst_45 {dimension_numbers = #tpu.dot_dimension_numbers<[1], [0], [0], [1], [0, 0, 1, 1], [], []>} : vector<4x8xbf16>, vector<8x64xbf16>, vector<4x64xf32> -> vector<4x64xf32>
    %53 = arith.truncf %52 : vector<4x64xf32> to vector<4x64xbf16>
    %c1_46 = arith.constant 1 : index
    %c0_47 = arith.constant 0 : index
    %c0_48 = arith.constant 0 : index
    %54 = vector.load %arg6[%c1_46, %c0_47, %c0_48] : memref<4x64x64xbf16, #tpu.memory_space<vmem>>, vector<1x64x64xbf16>
    %55 = vector.shape_cast %54 : vector<1x64x64xbf16> to vector<64x64xbf16>
    %cst_49 = arith.constant dense<0.000000e+00> : vector<4x64xf32>
    %56 = tpu.matmul %53, %55, %cst_49 {dimension_numbers = #tpu.dot_dimension_numbers<[1], [0], [0], [1], [0, 0, 1, 1], [], []>} : vector<4x64xbf16>, vector<64x64xbf16>, vector<4x64xf32> -> vector<4x64xf32>
    %57 = arith.addf %49, %56 : vector<4x64xf32>
    %c2_50 = arith.constant 2 : index
    %c0_51 = arith.constant 0 : index
    %c0_52 = arith.constant 0 : index
    %58 = vector.load %arg5[%c2_50, %c0_51, %c0_52] : memref<4x4x8xbf16, #tpu.memory_space<vmem>>, vector<1x4x8xbf16>
    %59 = vector.shape_cast %58 : vector<1x4x8xbf16> to vector<4x8xbf16>
    %cst_53 = arith.constant dense<0.000000e+00> : vector<4x64xf32>
    %60 = tpu.matmul %59, %42, %cst_53 {dimension_numbers = #tpu.dot_dimension_numbers<[1], [0], [0], [1], [0, 0, 1, 1], [], []>} : vector<4x8xbf16>, vector<8x64xbf16>, vector<4x64xf32> -> vector<4x64xf32>
    %61 = arith.truncf %60 : vector<4x64xf32> to vector<4x64xbf16>
    %c2_54 = arith.constant 2 : index
    %c0_55 = arith.constant 0 : index
    %c0_56 = arith.constant 0 : index
    %62 = vector.load %arg6[%c2_54, %c0_55, %c0_56] : memref<4x64x64xbf16, #tpu.memory_space<vmem>>, vector<1x64x64xbf16>
    %63 = vector.shape_cast %62 : vector<1x64x64xbf16> to vector<64x64xbf16>
    %cst_57 = arith.constant dense<0.000000e+00> : vector<4x64xf32>
    %64 = tpu.matmul %61, %63, %cst_57 {dimension_numbers = #tpu.dot_dimension_numbers<[1], [0], [0], [1], [0, 0, 1, 1], [], []>} : vector<4x64xbf16>, vector<64x64xbf16>, vector<4x64xf32> -> vector<4x64xf32>
    %65 = arith.addf %57, %64 : vector<4x64xf32>
    %c3_58 = arith.constant 3 : index
    %c0_59 = arith.constant 0 : index
    %c0_60 = arith.constant 0 : index
    %66 = vector.load %arg5[%c3_58, %c0_59, %c0_60] : memref<4x4x8xbf16, #tpu.memory_space<vmem>>, vector<1x4x8xbf16>
    %67 = vector.shape_cast %66 : vector<1x4x8xbf16> to vector<4x8xbf16>
    %cst_61 = arith.constant dense<0.000000e+00> : vector<4x64xf32>
    %68 = tpu.matmul %67, %42, %cst_61 {dimension_numbers = #tpu.dot_dimension_numbers<[1], [0], [0], [1], [0, 0, 1, 1], [], []>} : vector<4x8xbf16>, vector<8x64xbf16>, vector<4x64xf32> -> vector<4x64xf32>
    %69 = arith.truncf %68 : vector<4x64xf32> to vector<4x64xbf16>
    %c3_62 = arith.constant 3 : index
    %c0_63 = arith.constant 0 : index
    %c0_64 = arith.constant 0 : index
    %70 = vector.load %arg6[%c3_62, %c0_63, %c0_64] : memref<4x64x64xbf16, #tpu.memory_space<vmem>>, vector<1x64x64xbf16>
    %71 = vector.shape_cast %70 : vector<1x64x64xbf16> to vector<64x64xbf16>
    %cst_65 = arith.constant dense<0.000000e+00> : vector<4x64xf32>
    %72 = tpu.matmul %69, %71, %cst_65 {dimension_numbers = #tpu.dot_dimension_numbers<[1], [0], [0], [1], [0, 0, 1, 1], [], []>} : vector<4x64xbf16>, vector<64x64xbf16>, vector<4x64xf32> -> vector<4x64xf32>
    %73 = arith.addf %65, %72 : vector<4x64xf32>
    %c0_66 = arith.constant 0 : index
    %c0_67 = arith.constant 0 : index
    %74 = vector.load %arg7[%c0_66, %c0_67] : memref<1x64xf32, #tpu.memory_space<vmem>>, vector<1x64xf32>
    %75 = vector.broadcast %74 : vector<1x64xf32> to vector<4x64xf32>
    %76 = arith.addf %73, %75 : vector<4x64xf32>
    %cst_68 = arith.constant dense<0.000000e+00> : vector<64xf32>
    %77 = vector.multi_reduction <add>, %76, %cst_68 [0] : vector<4x64xf32> to vector<64xf32>
    %78 = vector.shape_cast %77 : vector<64xf32> to vector<1x64xf32>
    %c0_69 = arith.constant 0 : index
    %c0_70 = arith.constant 0 : index
    %79 = vector.load %arg8[%c0_69, %c0_70] : memref<64x64xf32, #tpu.memory_space<vmem>>, vector<64x64xf32>
    %cst_71 = arith.constant dense<0.000000e+00> : vector<1x64xf32>
    %80 = tpu.matmul %78, %79, %cst_71 {dimension_numbers = #tpu.dot_dimension_numbers<[1], [0], [0], [1], [0, 0, 1, 1], [], []>} : vector<1x64xf32>, vector<64x64xf32>, vector<1x64xf32> -> vector<1x64xf32>
    %81 = vector.broadcast %80 : vector<1x64xf32> to vector<4x64xf32>
    %82 = arith.subf %76, %81 : vector<4x64xf32>
    %83 = arith.mulf %82, %82 : vector<4x64xf32>
    %cst_72 = arith.constant dense<0.000000e+00> : vector<64xf32>
    %84 = vector.multi_reduction <add>, %83, %cst_72 [0] : vector<4x64xf32> to vector<64xf32>
    %85 = vector.shape_cast %84 : vector<64xf32> to vector<1x64xf32>
    %c0_73 = arith.constant 0 : index
    %c0_74 = arith.constant 0 : index
    %86 = vector.load %arg8[%c0_73, %c0_74] : memref<64x64xf32, #tpu.memory_space<vmem>>, vector<64x64xf32>
    %cst_75 = arith.constant dense<0.000000e+00> : vector<1x64xf32>
    %87 = tpu.matmul %85, %86, %cst_75 {dimension_numbers = #tpu.dot_dimension_numbers<[1], [0], [0], [1], [0, 0, 1, 1], [], []>} : vector<1x64xf32>, vector<64x64xf32>, vector<1x64xf32> -> vector<1x64xf32>
    %cst_76 = arith.constant 9.99999974E-6 : f32
    %88 = vector.broadcast %cst_76 : f32 to vector<1x64xf32>
    %89 = arith.addf %87, %88 : vector<1x64xf32>
    %90 = math.rsqrt %89 : vector<1x64xf32>
    %91 = vector.broadcast %90 : vector<1x64xf32> to vector<4x64xf32>
    %92 = arith.mulf %82, %91 : vector<4x64xf32>
    %cst_77 = arith.constant 0.000000e+00 : f32
    %93 = vector.broadcast %cst_77 : f32 to vector<4x64xf32>
    %94 = arith.cmpf oge, %92, %93 : vector<4x64xf32>
    %cst_78 = arith.constant 2.000000e-01 : f32
    %95 = vector.broadcast %cst_78 : f32 to vector<4x64xf32>
    %96 = arith.mulf %95, %92 : vector<4x64xf32>
    %97 = arith.select %94, %92, %96 : vector<4x64xi1>, vector<4x64xf32>
    %98 = arith.truncf %97 : vector<4x64xf32> to vector<4x64xbf16>
    %c0_79 = arith.constant 0 : index
    %c0_80 = arith.constant 0 : index
    %c0_81 = arith.constant 0 : index
    %99 = vector.load %arg9[%c0_79, %c0_80, %c0_81] : memref<4x3x4xbf16, #tpu.memory_space<vmem>>, vector<1x3x4xbf16>
    %100 = vector.shape_cast %99 : vector<1x3x4xbf16> to vector<3x4xbf16>
    %cst_82 = arith.constant dense<0.000000e+00> : vector<3x64xf32>
    %101 = tpu.matmul %100, %98, %cst_82 {dimension_numbers = #tpu.dot_dimension_numbers<[1], [0], [0], [1], [0, 0, 1, 1], [], []>} : vector<3x4xbf16>, vector<4x64xbf16>, vector<3x64xf32> -> vector<3x64xf32>
    %102 = arith.truncf %101 : vector<3x64xf32> to vector<3x64xbf16>
    %c0_83 = arith.constant 0 : index
    %c0_84 = arith.constant 0 : index
    %c0_85 = arith.constant 0 : index
    %103 = vector.load %arg10[%c0_83, %c0_84, %c0_85] : memref<4x64x96xbf16, #tpu.memory_space<vmem>>, vector<1x64x96xbf16>
    %104 = vector.shape_cast %103 : vector<1x64x96xbf16> to vector<64x96xbf16>
    %cst_86 = arith.constant dense<0.000000e+00> : vector<3x96xf32>
    %105 = tpu.matmul %102, %104, %cst_86 {dimension_numbers = #tpu.dot_dimension_numbers<[1], [0], [0], [1], [0, 0, 1, 1], [], []>} : vector<3x64xbf16>, vector<64x96xbf16>, vector<3x96xf32> -> vector<3x96xf32>
    %c1_87 = arith.constant 1 : index
    %c0_88 = arith.constant 0 : index
    %c0_89 = arith.constant 0 : index
    %106 = vector.load %arg9[%c1_87, %c0_88, %c0_89] : memref<4x3x4xbf16, #tpu.memory_space<vmem>>, vector<1x3x4xbf16>
    %107 = vector.shape_cast %106 : vector<1x3x4xbf16> to vector<3x4xbf16>
    %cst_90 = arith.constant dense<0.000000e+00> : vector<3x64xf32>
    %108 = tpu.matmul %107, %98, %cst_90 {dimension_numbers = #tpu.dot_dimension_numbers<[1], [0], [0], [1], [0, 0, 1, 1], [], []>} : vector<3x4xbf16>, vector<4x64xbf16>, vector<3x64xf32> -> vector<3x64xf32>
    %109 = arith.truncf %108 : vector<3x64xf32> to vector<3x64xbf16>
    %c1_91 = arith.constant 1 : index
    %c0_92 = arith.constant 0 : index
    %c0_93 = arith.constant 0 : index
    %110 = vector.load %arg10[%c1_91, %c0_92, %c0_93] : memref<4x64x96xbf16, #tpu.memory_space<vmem>>, vector<1x64x96xbf16>
    %111 = vector.shape_cast %110 : vector<1x64x96xbf16> to vector<64x96xbf16>
    %cst_94 = arith.constant dense<0.000000e+00> : vector<3x96xf32>
    %112 = tpu.matmul %109, %111, %cst_94 {dimension_numbers = #tpu.dot_dimension_numbers<[1], [0], [0], [1], [0, 0, 1, 1], [], []>} : vector<3x64xbf16>, vector<64x96xbf16>, vector<3x96xf32> -> vector<3x96xf32>
    %113 = arith.addf %105, %112 : vector<3x96xf32>
    %c2_95 = arith.constant 2 : index
    %c0_96 = arith.constant 0 : index
    %c0_97 = arith.constant 0 : index
    %114 = vector.load %arg9[%c2_95, %c0_96, %c0_97] : memref<4x3x4xbf16, #tpu.memory_space<vmem>>, vector<1x3x4xbf16>
    %115 = vector.shape_cast %114 : vector<1x3x4xbf16> to vector<3x4xbf16>
    %cst_98 = arith.constant dense<0.000000e+00> : vector<3x64xf32>
    %116 = tpu.matmul %115, %98, %cst_98 {dimension_numbers = #tpu.dot_dimension_numbers<[1], [0], [0], [1], [0, 0, 1, 1], [], []>} : vector<3x4xbf16>, vector<4x64xbf16>, vector<3x64xf32> -> vector<3x64xf32>
    %117 = arith.truncf %116 : vector<3x64xf32> to vector<3x64xbf16>
    %c2_99 = arith.constant 2 : index
    %c0_100 = arith.constant 0 : index
    %c0_101 = arith.constant 0 : index
    %118 = vector.load %arg10[%c2_99, %c0_100, %c0_101] : memref<4x64x96xbf16, #tpu.memory_space<vmem>>, vector<1x64x96xbf16>
    %119 = vector.shape_cast %118 : vector<1x64x96xbf16> to vector<64x96xbf16>
    %cst_102 = arith.constant dense<0.000000e+00> : vector<3x96xf32>
    %120 = tpu.matmul %117, %119, %cst_102 {dimension_numbers = #tpu.dot_dimension_numbers<[1], [0], [0], [1], [0, 0, 1, 1], [], []>} : vector<3x64xbf16>, vector<64x96xbf16>, vector<3x96xf32> -> vector<3x96xf32>
    %121 = arith.addf %113, %120 : vector<3x96xf32>
    %c3_103 = arith.constant 3 : index
    %c0_104 = arith.constant 0 : index
    %c0_105 = arith.constant 0 : index
    %122 = vector.load %arg9[%c3_103, %c0_104, %c0_105] : memref<4x3x4xbf16, #tpu.memory_space<vmem>>, vector<1x3x4xbf16>
    %123 = vector.shape_cast %122 : vector<1x3x4xbf16> to vector<3x4xbf16>
    %cst_106 = arith.constant dense<0.000000e+00> : vector<3x64xf32>
    %124 = tpu.matmul %123, %98, %cst_106 {dimension_numbers = #tpu.dot_dimension_numbers<[1], [0], [0], [1], [0, 0, 1, 1], [], []>} : vector<3x4xbf16>, vector<4x64xbf16>, vector<3x64xf32> -> vector<3x64xf32>
    %125 = arith.truncf %124 : vector<3x64xf32> to vector<3x64xbf16>
    %c3_107 = arith.constant 3 : index
    %c0_108 = arith.constant 0 : index
    %c0_109 = arith.constant 0 : index
    %126 = vector.load %arg10[%c3_107, %c0_108, %c0_109] : memref<4x64x96xbf16, #tpu.memory_space<vmem>>, vector<1x64x96xbf16>
    %127 = vector.shape_cast %126 : vector<1x64x96xbf16> to vector<64x96xbf16>
    %cst_110 = arith.constant dense<0.000000e+00> : vector<3x96xf32>
    %128 = tpu.matmul %125, %127, %cst_110 {dimension_numbers = #tpu.dot_dimension_numbers<[1], [0], [0], [1], [0, 0, 1, 1], [], []>} : vector<3x64xbf16>, vector<64x96xbf16>, vector<3x96xf32> -> vector<3x96xf32>
    %129 = arith.addf %121, %128 : vector<3x96xf32>
    %c0_111 = arith.constant 0 : index
    %c0_112 = arith.constant 0 : index
    %130 = vector.load %arg11[%c0_111, %c0_112] : memref<1x96xf32, #tpu.memory_space<vmem>>, vector<1x96xf32>
    %131 = vector.broadcast %130 : vector<1x96xf32> to vector<3x96xf32>
    %132 = arith.addf %129, %131 : vector<3x96xf32>
    %cst_113 = arith.constant dense<0.000000e+00> : vector<96xf32>
    %133 = vector.multi_reduction <add>, %132, %cst_113 [0] : vector<3x96xf32> to vector<96xf32>
    %134 = vector.shape_cast %133 : vector<96xf32> to vector<1x96xf32>
    %c0_114 = arith.constant 0 : index
    %c0_115 = arith.constant 0 : index
    %135 = vector.load %arg12[%c0_114, %c0_115] : memref<96x96xf32, #tpu.memory_space<vmem>>, vector<96x96xf32>
    %cst_116 = arith.constant dense<0.000000e+00> : vector<1x96xf32>
    %136 = tpu.matmul %134, %135, %cst_116 {dimension_numbers = #tpu.dot_dimension_numbers<[1], [0], [0], [1], [0, 0, 1, 1], [], []>} : vector<1x96xf32>, vector<96x96xf32>, vector<1x96xf32> -> vector<1x96xf32>
    %137 = vector.broadcast %136 : vector<1x96xf32> to vector<3x96xf32>
    %138 = arith.subf %132, %137 : vector<3x96xf32>
    %139 = arith.mulf %138, %138 : vector<3x96xf32>
    %cst_117 = arith.constant dense<0.000000e+00> : vector<96xf32>
    %140 = vector.multi_reduction <add>, %139, %cst_117 [0] : vector<3x96xf32> to vector<96xf32>
    %141 = vector.shape_cast %140 : vector<96xf32> to vector<1x96xf32>
    %c0_118 = arith.constant 0 : index
    %c0_119 = arith.constant 0 : index
    %142 = vector.load %arg12[%c0_118, %c0_119] : memref<96x96xf32, #tpu.memory_space<vmem>>, vector<96x96xf32>
    %cst_120 = arith.constant dense<0.000000e+00> : vector<1x96xf32>
    %143 = tpu.matmul %141, %142, %cst_120 {dimension_numbers = #tpu.dot_dimension_numbers<[1], [0], [0], [1], [0, 0, 1, 1], [], []>} : vector<1x96xf32>, vector<96x96xf32>, vector<1x96xf32> -> vector<1x96xf32>
    %cst_121 = arith.constant 9.99999974E-6 : f32
    %144 = vector.broadcast %cst_121 : f32 to vector<1x96xf32>
    %145 = arith.addf %143, %144 : vector<1x96xf32>
    %146 = math.rsqrt %145 : vector<1x96xf32>
    %147 = vector.broadcast %146 : vector<1x96xf32> to vector<3x96xf32>
    %148 = arith.mulf %138, %147 : vector<3x96xf32>
    %cst_122 = arith.constant 0.000000e+00 : f32
    %149 = vector.broadcast %cst_122 : f32 to vector<3x96xf32>
    %150 = arith.cmpf oge, %148, %149 : vector<3x96xf32>
    %cst_123 = arith.constant 2.000000e-01 : f32
    %151 = vector.broadcast %cst_123 : f32 to vector<3x96xf32>
    %152 = arith.mulf %151, %148 : vector<3x96xf32>
    %153 = arith.select %150, %148, %152 : vector<3x96xi1>, vector<3x96xf32>
    %154 = arith.truncf %153 : vector<3x96xf32> to vector<3x96xbf16>
    %c0_124 = arith.constant 0 : index
    %c0_125 = arith.constant 0 : index
    %c0_126 = arith.constant 0 : index
    %155 = vector.load %arg13[%c0_124, %c0_125, %c0_126] : memref<4x2x3xbf16, #tpu.memory_space<vmem>>, vector<1x2x3xbf16>
    %156 = vector.shape_cast %155 : vector<1x2x3xbf16> to vector<2x3xbf16>
    %cst_127 = arith.constant dense<0.000000e+00> : vector<2x96xf32>
    %157 = tpu.matmul %156, %154, %cst_127 {dimension_numbers = #tpu.dot_dimension_numbers<[1], [0], [0], [1], [0, 0, 1, 1], [], []>} : vector<2x3xbf16>, vector<3x96xbf16>, vector<2x96xf32> -> vector<2x96xf32>
    %158 = arith.truncf %157 : vector<2x96xf32> to vector<2x96xbf16>
    %c0_128 = arith.constant 0 : index
    %c0_129 = arith.constant 0 : index
    %c0_130 = arith.constant 0 : index
    %159 = vector.load %arg14[%c0_128, %c0_129, %c0_130] : memref<4x96x2xbf16, #tpu.memory_space<vmem>>, vector<1x96x2xbf16>
    %160 = vector.shape_cast %159 : vector<1x96x2xbf16> to vector<96x2xbf16>
    %cst_131 = arith.constant dense<0.000000e+00> : vector<2x2xf32>
    %161 = tpu.matmul %158, %160, %cst_131 {dimension_numbers = #tpu.dot_dimension_numbers<[1], [0], [0], [1], [0, 0, 1, 1], [], []>} : vector<2x96xbf16>, vector<96x2xbf16>, vector<2x2xf32> -> vector<2x2xf32>
    %c1_132 = arith.constant 1 : index
    %c0_133 = arith.constant 0 : index
    %c0_134 = arith.constant 0 : index
    %162 = vector.load %arg13[%c1_132, %c0_133, %c0_134] : memref<4x2x3xbf16, #tpu.memory_space<vmem>>, vector<1x2x3xbf16>
    %163 = vector.shape_cast %162 : vector<1x2x3xbf16> to vector<2x3xbf16>
    %cst_135 = arith.constant dense<0.000000e+00> : vector<2x96xf32>
    %164 = tpu.matmul %163, %154, %cst_135 {dimension_numbers = #tpu.dot_dimension_numbers<[1], [0], [0], [1], [0, 0, 1, 1], [], []>} : vector<2x3xbf16>, vector<3x96xbf16>, vector<2x96xf32> -> vector<2x96xf32>
    %165 = arith.truncf %164 : vector<2x96xf32> to vector<2x96xbf16>
    %c1_136 = arith.constant 1 : index
    %c0_137 = arith.constant 0 : index
    %c0_138 = arith.constant 0 : index
    %166 = vector.load %arg14[%c1_136, %c0_137, %c0_138] : memref<4x96x2xbf16, #tpu.memory_space<vmem>>, vector<1x96x2xbf16>
    %167 = vector.shape_cast %166 : vector<1x96x2xbf16> to vector<96x2xbf16>
    %cst_139 = arith.constant dense<0.000000e+00> : vector<2x2xf32>
    %168 = tpu.matmul %165, %167, %cst_139 {dimension_numbers = #tpu.dot_dimension_numbers<[1], [0], [0], [1], [0, 0, 1, 1], [], []>} : vector<2x96xbf16>, vector<96x2xbf16>, vector<2x2xf32> -> vector<2x2xf32>
    %169 = arith.addf %161, %168 : vector<2x2xf32>
    %c2_140 = arith.constant 2 : index
    %c0_141 = arith.constant 0 : index
    %c0_142 = arith.constant 0 : index
    %170 = vector.load %arg13[%c2_140, %c0_141, %c0_142] : memref<4x2x3xbf16, #tpu.memory_space<vmem>>, vector<1x2x3xbf16>
    %171 = vector.shape_cast %170 : vector<1x2x3xbf16> to vector<2x3xbf16>
    %cst_143 = arith.constant dense<0.000000e+00> : vector<2x96xf32>
    %172 = tpu.matmul %171, %154, %cst_143 {dimension_numbers = #tpu.dot_dimension_numbers<[1], [0], [0], [1], [0, 0, 1, 1], [], []>} : vector<2x3xbf16>, vector<3x96xbf16>, vector<2x96xf32> -> vector<2x96xf32>
    %173 = arith.truncf %172 : vector<2x96xf32> to vector<2x96xbf16>
    %c2_144 = arith.constant 2 : index
    %c0_145 = arith.constant 0 : index
    %c0_146 = arith.constant 0 : index
    %174 = vector.load %arg14[%c2_144, %c0_145, %c0_146] : memref<4x96x2xbf16, #tpu.memory_space<vmem>>, vector<1x96x2xbf16>
    %175 = vector.shape_cast %174 : vector<1x96x2xbf16> to vector<96x2xbf16>
    %cst_147 = arith.constant dense<0.000000e+00> : vector<2x2xf32>
    %176 = tpu.matmul %173, %175, %cst_147 {dimension_numbers = #tpu.dot_dimension_numbers<[1], [0], [0], [1], [0, 0, 1, 1], [], []>} : vector<2x96xbf16>, vector<96x2xbf16>, vector<2x2xf32> -> vector<2x2xf32>
    %177 = arith.addf %169, %176 : vector<2x2xf32>
    %c3_148 = arith.constant 3 : index
    %c0_149 = arith.constant 0 : index
    %c0_150 = arith.constant 0 : index
    %178 = vector.load %arg13[%c3_148, %c0_149, %c0_150] : memref<4x2x3xbf16, #tpu.memory_space<vmem>>, vector<1x2x3xbf16>
    %179 = vector.shape_cast %178 : vector<1x2x3xbf16> to vector<2x3xbf16>
    %cst_151 = arith.constant dense<0.000000e+00> : vector<2x96xf32>
    %180 = tpu.matmul %179, %154, %cst_151 {dimension_numbers = #tpu.dot_dimension_numbers<[1], [0], [0], [1], [0, 0, 1, 1], [], []>} : vector<2x3xbf16>, vector<3x96xbf16>, vector<2x96xf32> -> vector<2x96xf32>
    %181 = arith.truncf %180 : vector<2x96xf32> to vector<2x96xbf16>
    %c3_152 = arith.constant 3 : index
    %c0_153 = arith.constant 0 : index
    %c0_154 = arith.constant 0 : index
    %182 = vector.load %arg14[%c3_152, %c0_153, %c0_154] : memref<4x96x2xbf16, #tpu.memory_space<vmem>>, vector<1x96x2xbf16>
    %183 = vector.shape_cast %182 : vector<1x96x2xbf16> to vector<96x2xbf16>
    %cst_155 = arith.constant dense<0.000000e+00> : vector<2x2xf32>
    %184 = tpu.matmul %181, %183, %cst_155 {dimension_numbers = #tpu.dot_dimension_numbers<[1], [0], [0], [1], [0, 0, 1, 1], [], []>} : vector<2x96xbf16>, vector<96x2xbf16>, vector<2x2xf32> -> vector<2x2xf32>
    %185 = arith.addf %177, %184 : vector<2x2xf32>
    %c0_156 = arith.constant 0 : index
    %c0_157 = arith.constant 0 : index
    %186 = vector.load %arg15[%c0_156, %c0_157] : memref<1x2xf32, #tpu.memory_space<vmem>>, vector<1x2xf32>
    %187 = vector.broadcast %186 : vector<1x2xf32> to vector<2x2xf32>
    %188 = arith.addf %185, %187 : vector<2x2xf32>
    %c0_158 = arith.constant 0 : index
    %c0_159 = arith.constant 0 : index
    %c0_160 = arith.constant 0 : index
    %189 = vector.load %arg16[%c0_158, %c0_159, %c0_160] : memref<1x2x2xf32, #tpu.memory_space<vmem>>, vector<1x2x2xf32>
    %190 = vector.shape_cast %189 : vector<1x2x2xf32> to vector<2x2xf32>
    %191 = vector.shape_cast %188 : vector<2x2xf32> to vector<1x2x2xf32>
    tpu.vector_store %arg16[%c0_158, %c0_159, %c0_160], %191 {strides = array<i32>} : memref<1x2x2xf32, #tpu.memory_space<vmem>>, vector<1x2x2xf32>,
    return
  }
  func.func @transform_0(%arg0: i32) -> (i32, i32, i32) {
    %c0_i32 = arith.constant 0 : i32
    %c0_i32_0 = arith.constant 0 : i32
    %c0_i32_1 = arith.constant 0 : i32
    return %arg0, %c0_i32, %c0_i32_0 : i32, i32, i32
  }
  func.func @transform_1(%arg0: i32) -> (i32, i32, i32) {
    %c0_i32 = arith.constant 0 : i32
    %c0_i32_0 = arith.constant 0 : i32
    %c0_i32_1 = arith.constant 0 : i32
    %c0_i32_2 = arith.constant 0 : i32
    return %c0_i32, %c0_i32_0, %c0_i32_1 : i32, i32, i32
  }
  func.func @transform_2(%arg0: i32) -> (i32, i32, i32) {
    %c0_i32 = arith.constant 0 : i32
    %c0_i32_0 = arith.constant 0 : i32
    %c0_i32_1 = arith.constant 0 : i32
    %c0_i32_2 = arith.constant 0 : i32
    return %c0_i32, %c0_i32_0, %c0_i32_1 : i32, i32, i32
  }
  func.func @transform_3(%arg0: i32) -> (i32, i32) {
    %c0_i32 = arith.constant 0 : i32
    %c0_i32_0 = arith.constant 0 : i32
    %c0_i32_1 = arith.constant 0 : i32
    return %c0_i32, %c0_i32_0 : i32, i32
  }
  func.func @transform_4(%arg0: i32) -> (i32, i32, i32) {
    %c0_i32 = arith.constant 0 : i32
    %c0_i32_0 = arith.constant 0 : i32
    %c0_i32_1 = arith.constant 0 : i32
    %c0_i32_2 = arith.constant 0 : i32
    return %c0_i32, %c0_i32_0, %c0_i32_1 : i32, i32, i32
  }
  func.func @transform_5(%arg0: i32) -> (i32, i32, i32) {
    %c0_i32 = arith.constant 0 : i32
    %c0_i32_0 = arith.constant 0 : i32
    %c0_i32_1 = arith.constant 0 : i32
    %c0_i32_2 = arith.constant 0 : i32
    return %c0_i32, %c0_i32_0, %c0_i32_1 : i32, i32, i32
  }
  func.func @transform_6(%arg0: i32) -> (i32, i32) {
    %c0_i32 = arith.constant 0 : i32
    %c0_i32_0 = arith.constant 0 : i32
    %c0_i32_1 = arith.constant 0 : i32
    return %c0_i32, %c0_i32_0 : i32, i32
  }
  func.func @transform_7(%arg0: i32) -> (i32, i32) {
    %c0_i32 = arith.constant 0 : i32
    %c0_i32_0 = arith.constant 0 : i32
    %c0_i32_1 = arith.constant 0 : i32
    return %c0_i32, %c0_i32_0 : i32, i32
  }
  func.func @transform_8(%arg0: i32) -> (i32, i32, i32) {
    %c0_i32 = arith.constant 0 : i32
    %c0_i32_0 = arith.constant 0 : i32
    %c0_i32_1 = arith.constant 0 : i32
    %c0_i32_2 = arith.constant 0 : i32
    return %c0_i32, %c0_i32_0, %c0_i32_1 : i32, i32, i32
  }
  func.func @transform_9(%arg0: i32) -> (i32, i32, i32) {
    %c0_i32 = arith.constant 0 : i32
    %c0_i32_0 = arith.constant 0 : i32
    %c0_i32_1 = arith.constant 0 : i32
    %c0_i32_2 = arith.constant 0 : i32
    return %c0_i32, %c0_i32_0, %c0_i32_1 : i32, i32, i32
  }
  func.func @transform_10(%arg0: i32) -> (i32, i32) {
    %c0_i32 = arith.constant 0 : i32
    %c0_i32_0 = arith.constant 0 : i32
    %c0_i32_1 = arith.constant 0 : i32
    return %c0_i32, %c0_i32_0 : i32, i32
  }
  func.func @transform_11(%arg0: i32) -> (i32, i32) {
    %c0_i32 = arith.constant 0 : i32
    %c0_i32_0 = arith.constant 0 : i32
    %c0_i32_1 = arith.constant 0 : i32
    return %c0_i32, %c0_i32_0 : i32, i32
  }
  func.func @transform_12(%arg0: i32) -> (i32, i32, i32) {
    %c0_i32 = arith.constant 0 : i32
    %c0_i32_0 = arith.constant 0 : i32
    %c0_i32_1 = arith.constant 0 : i32
    %c0_i32_2 = arith.constant 0 : i32
    return %c0_i32, %c0_i32_0, %c0_i32_1 : i32, i32, i32
  }
  func.func @transform_13(%arg0: i32) -> (i32, i32, i32) {
    %c0_i32 = arith.constant 0 : i32
    %c0_i32_0 = arith.constant 0 : i32
    %c0_i32_1 = arith.constant 0 : i32
    %c0_i32_2 = arith.constant 0 : i32
    return %c0_i32, %c0_i32_0, %c0_i32_1 : i32, i32, i32
  }
  func.func @transform_14(%arg0: i32) -> (i32, i32) {
    %c0_i32 = arith.constant 0 : i32
    %c0_i32_0 = arith.constant 0 : i32
    %c0_i32_1 = arith.constant 0 : i32
    return %c0_i32, %c0_i32_0 : i32, i32
  }
  func.func @transform_15(%arg0: i32) -> (i32, i32, i32) {
    %c0_i32 = arith.constant 0 : i32
    %c0_i32_0 = arith.constant 0 : i32
    %c0_i32_1 = arith.constant 0 : i32
    return %arg0, %c0_i32, %c0_i32_0 : i32, i32, i32
  }
}

</mosaic_0001>

<llo_original>
// kernel: _lambda_.1
$region0: #{_lambda_.1}
  #allocation0 [shape = 'u32[]', space=smem, size = 0x4, offset = 0x4, fixed_abs, tag = 'smem constant byte address 0x4 - core index']
  #allocation1 [shape = 'u32[144,128]{1,0:T(1,128)}', space=vmem, size = 0x12000, scoped, tag = 'internal scratch']
  %s0 = inlined_call_operand.vmem [shape: f32[2,16,64], index: 0, kind: input, shape index: {}]
  %s1 = inlined_call_operand.vmem [shape: bf16[4,8,16], index: 1, kind: input, shape index: {}]
  %s2 = inlined_call_operand.vmem [shape: bf16[4,64,64], index: 2, kind: input, shape index: {}]
  %s3 = inlined_call_operand.vmem [shape: f32[1,64], index: 3, kind: input, shape index: {}]
  %s4 = inlined_call_operand.hbm [shape: bf16[4,4,8], index: 4, kind: input, shape index: {}]
  %s5 = inlined_call_operand.vmem [shape: bf16[4,64,64], index: 5, kind: input, shape index: {}]
  %s6 = inlined_call_operand.hbm [shape: f32[1,64], index: 6, kind: input, shape index: {}]
  %s7 = inlined_call_operand.hbm [shape: f32[64,64], index: 7, kind: input, shape index: {}]
  %s8 = inlined_call_operand.hbm [shape: bf16[4,3,4], index: 8, kind: input, shape index: {}]
  %s9 = inlined_call_operand.hbm [shape: bf16[4,64,96], index: 9, kind: input, shape index: {}]
  %s10 = inlined_call_operand.hbm [shape: f32[1,96], index: 10, kind: input, shape index: {}]
  %s11 = inlined_call_operand.hbm [shape: f32[96,96], index: 11, kind: input, shape index: {}]
  %s12 = inlined_call_operand.vmem [shape: bf16[4,2,3], index: 12, kind: input, shape index: {}]
  %s13 = inlined_call_operand.vmem [shape: bf16[4,96,2], index: 13, kind: input, shape index: {}]
  %s14 = inlined_call_operand.vmem [shape: f32[1,2], index: 14, kind: input, shape index: {}]
  %s15 = inlined_call_operand.hbm [shape: f32[2,2,2], index: 15, kind: output, shape index: {}]
  %s16 = sld [smem:[#allocation0]]
  $region121: #{_lambda_.1} parent=0
    _
  %s18 = ssub.s32 1, %s16
  %s19 = scalar_select 0, %s18, %s16
  $region1: #{_lambda_.1} parent=0
    #allocation2 [shape = 'u8[4096]{0}', space=vmem, size = 0x1000, scoped, tag = 'input window, operand 4, single buffered']
    #allocation3 [shape = 's32[2]{0}', space=sflag, size = 0x8, scoped, tag = 'scoped memory for _lambda_.1']
    #allocation4 [shape = 's32[2]{0}', space=sflag, size = 0x8, scoped, tag = 'scoped memory for _lambda_.1']
    #allocation5 [shape = 'u8[512]{0}', space=vmem, size = 0x400, scoped, tag = 'input window, operand 6, single buffered']
    #allocation6 [shape = 's32[1]{0}', space=sflag, size = 0x4, scoped, tag = 'scoped memory for _lambda_.1']
    #allocation7 [shape = 'u8[32768]{0}', space=vmem, size = 0x8000, scoped, tag = 'input window, operand 7, single buffered']
    #allocation8 [shape = 'u8[4096]{0}', space=vmem, size = 0x1000, scoped, tag = 'input window, operand 8, single buffered']
    #allocation9 [shape = 's32[1]{0}', space=sflag, size = 0x4, scoped, tag = 'scoped memory for _lambda_.1']
    #allocation10 [shape = 'u8[65536]{0}', space=vmem, size = 0x10000, scoped, tag = 'input window, operand 9, single buffered']
    #allocation11 [shape = 'u8[512]{0}', space=vmem, size = 0x400, scoped, tag = 'input window, operand 10, single buffered']
    #allocation12 [shape = 's32[1]{0}', space=sflag, size = 0x4, scoped, tag = 'scoped memory for _lambda_.1']
    #allocation13 [shape = 'u8[49152]{0}', space=vmem, size = 0xc000, scoped, tag = 'input window, operand 11, single buffered']
    #allocation14 [shape = 'u8[2048]{0}', space=vmem, size = 0x800, scoped, tag = 'output window, operand 0']
    %20 = vsyncpa [#allocation3], 0
    %21 = vsyncpa [#allocation6], 0
    %22 = vsyncpa [#allocation9], 0
    %23 = vsyncpa [#allocation12], 0
    %24 = vsyncpa [#allocation4], 0
    %s25 = scalar_lea.sflag [#allocation4], 1
    %26 = vsyncpa %s25, 0
    loop: start=0, step=1, limit=4
    $region2: #{_lambda_.1} parent=1 // loop_pre_header
      _
    $region3: #{_lambda_.1} parent=1 // loop_header
      %s28 = sphi 0, %s32
      %p29 = scmp.ge.s32.totalorder %s28, 4
      %s38 = sphi 0, %s40
      %s41 = sphi 0, %s38
      %s42 = sphi 0, %s41
      %s58 = sphi 0, %s42
      %s62 = sphi 0, %s62
      %s64 = sphi 0, %s62
      %s65 = sphi 0, %s64
      %s79 = sphi 0, %s65
      %s83 = sphi 0, %s83
      %s85 = sphi 0, %s83
      %s86 = sphi 0, %s85
      %s100 = sphi 0, %s86
      %s104 = sphi 0, %s104
      %s106 = sphi 0, %s104
      %s107 = sphi 0, %s106
      %s121 = sphi 0, %s107
      %s125 = sphi 0, %s125
      %s127 = sphi 0, %s125
      %s128 = sphi 0, %s127
      %s142 = sphi 0, %s128
      %s146 = sphi 0, %s146
      %s148 = sphi 0, %s146
      %s149 = sphi 0, %s148
      %s163 = sphi 0, %s149
      %s167 = sphi 0, %s167
      %s169 = sphi 0, %s167
      %s170 = sphi 0, %s169
      %s184 = sphi 0, %s170
      %s188 = sphi 0, %s188
      %s190 = sphi 0, %s188
      %s191 = sphi 0, %s190
      %s205 = sphi 0, %s191
      %s209 = sphi 0, %s209
      %s211 = sphi 0, %s209
      %s212 = sphi 0, %s211
      %s226 = sphi 0, %s212
      %s230 = sphi 0, %s230
      %s232 = sphi 0, %s230
      %s233 = sphi 0, %s232
      %s247 = sphi 0, %s233
      %s251 = sphi 0, %s251
      %s253 = sphi 0, %s251
      %s254 = sphi 0, %s253
      %s268 = sphi 0, %s254
      %s272 = sphi 0, %s272
      %s274 = sphi 0, %s272
      %s275 = sphi 0, %s274
      %s289 = sphi 0, %s275
      %s293 = sphi 0, %s293
      %s295 = sphi 0, %s293
      %s296 = sphi 0, %s295
      %s310 = sphi 0, %s296
      %s314 = sphi 0, %s314
      %s316 = sphi 0, %s314
      %s317 = sphi 0, %s316
      %s331 = sphi 0, %s317
      %s335 = sphi 0, %s335
      %s337 = sphi 0, %s335
      %s338 = sphi 0, %s337
      %s352 = sphi 0, %s338
      %s358 = sphi 0, %s360
      %s361 = sphi 0, %s358
      %s362 = sphi 0, %s361
      %s378 = sphi 0, %s362
    $region4: #{_lambda_.1} parent=1 // loop_header_branch
      %31 = sbr.rel (%p29) target = $region8
    $region5: #{_lambda_.1} parent=1 // loop_body
      %s33 = ssub.s32 %s28, 1
      %s34 = ssub.s32 %s28, 2
      %s35 = sadd.s32 %s28, 1
      %s36 = ssub.s32 %s28, %s35
      %p37 = scmp.eq.s32.totalorder %s36, 0
      %s39 = sadd.s32 %s38, 1
      %s40 = scalar_select %p37, %s38, %s39
      %p43 = pneg %p37
      %p44 = scmp.eq.s32.totalorder %s28, 1
      %p45 = por %p43, %p44
      %p46 = scmp.ne.s32.totalorder %s38, %s41
      %p47 = scmp.eq.s32.totalorder %s28, 0
      %p48 = por %p46, %p47
      %p49 = scmp.ne.s32.totalorder %s38, %s41
      %p50 = scmp.eq.s32.totalorder %s33, 1
      %p51 = por %p49, %p50
      %p52 = scmp.ne.s32.totalorder %s41, %s42
      %p53 = scmp.eq.s32.totalorder %s33, 0
      %p54 = por %p52, %p53
      %p55 = scmp.ne.s32.totalorder %s41, %s42
      %p56 = scmp.eq.s32.totalorder %s34, 1
      %p57 = por %p55, %p56
      %p59 = scmp.ne.s32.totalorder %s42, %s58
      %p60 = scmp.eq.s32.totalorder %s34, 0
      %p61 = por %p59, %p60
      %s63 = sadd.s32 %s62, 1
      %p66 = scmp.eq.s32.totalorder %s28, 1
      %p67 = scmp.ne.s32.totalorder %s62, %s64
      %p68 = scmp.eq.s32.totalorder %s28, 0
      %p69 = por %p67, %p68
      %p70 = scmp.ne.s32.totalorder %s62, %s64
      %p71 = scmp.eq.s32.totalorder %s33, 1
      %p72 = por %p70, %p71
      %p73 = scmp.ne.s32.totalorder %s64, %s65
      %p74 = scmp.eq.s32.totalorder %s33, 0
      %p75 = por %p73, %p74
      %p76 = scmp.ne.s32.totalorder %s64, %s65
      %p77 = scmp.eq.s32.totalorder %s34, 1
      %p78 = por %p76, %p77
      %p80 = scmp.ne.s32.totalorder %s65, %s79
      %p81 = scmp.eq.s32.totalorder %s34, 0
      %p82 = por %p80, %p81
      %s84 = sadd.s32 %s83, 1
      %p87 = scmp.eq.s32.totalorder %s28, 1
      %p88 = scmp.ne.s32.totalorder %s83, %s85
      %p89 = scmp.eq.s32.totalorder %s28, 0
      %p90 = por %p88, %p89
      %p91 = scmp.ne.s32.totalorder %s83, %s85
      %p92 = scmp.eq.s32.totalorder %s33, 1
      %p93 = por %p91, %p92
      %p94 = scmp.ne.s32.totalorder %s85, %s86
      %p95 = scmp.eq.s32.totalorder %s33, 0
      %p96 = por %p94, %p95
      %p97 = scmp.ne.s32.totalorder %s85, %s86
      %p98 = scmp.eq.s32.totalorder %s34, 1
      %p99 = por %p97, %p98
      %p101 = scmp.ne.s32.totalorder %s86, %s100
      %p102 = scmp.eq.s32.totalorder %s34, 0
      %p103 = por %p101, %p102
      %s105 = sadd.s32 %s104, 1
      %p108 = scmp.eq.s32.totalorder %s28, 1
      %p109 = scmp.ne.s32.totalorder %s104, %s106
      %p110 = scmp.eq.s32.totalorder %s28, 0
      %p111 = por %p109, %p110
      %p112 = scmp.ne.s32.totalorder %s104, %s106
      %p113 = scmp.eq.s32.totalorder %s33, 1
      %p114 = por %p112, %p113
      %p115 = scmp.ne.s32.totalorder %s106, %s107
      %p116 = scmp.eq.s32.totalorder %s33, 0
      %p117 = por %p115, %p116
      %p118 = scmp.ne.s32.totalorder %s106, %s107
      %p119 = scmp.eq.s32.totalorder %s34, 1
      %p120 = por %p118, %p119
      %p122 = scmp.ne.s32.totalorder %s107, %s121
      %p123 = scmp.eq.s32.totalorder %s34, 0
      %p124 = por %p122, %p123
      %s126 = sadd.s32 %s125, 1
      %p129 = scmp.eq.s32.totalorder %s28, 1
      %p130 = scmp.ne.s32.totalorder %s125, %s127
      %p131 = scmp.eq.s32.totalorder %s28, 0
      %p132 = por %p130, %p131
      %p133 = scmp.ne.s32.totalorder %s125, %s127
      %p134 = scmp.eq.s32.totalorder %s33, 1
      %p135 = por %p133, %p134
      %p136 = scmp.ne.s32.totalorder %s127, %s128
      %p137 = scmp.eq.s32.totalorder %s33, 0
      %p138 = por %p136, %p137
      %p139 = scmp.ne.s32.totalorder %s127, %s128
      %p140 = scmp.eq.s32.totalorder %s34, 1
      %p141 = por %p139, %p140
      %p143 = scmp.ne.s32.totalorder %s128, %s142
      %p144 = scmp.eq.s32.totalorder %s34, 0
      %p145 = por %p143, %p144
      %s147 = sadd.s32 %s146, 1
      %p150 = scmp.eq.s32.totalorder %s28, 1
      %p151 = scmp.ne.s32.totalorder %s146, %s148
      %p152 = scmp.eq.s32.totalorder %s28, 0
      %p153 = por %p151, %p152
      %p154 = scmp.ne.s32.totalorder %s146, %s148
      %p155 = scmp.eq.s32.totalorder %s33, 1
      %p156 = por %p154, %p155
      %p157 = scmp.ne.s32.totalorder %s148, %s149
      %p158 = scmp.eq.s32.totalorder %s33, 0
      %p159 = por %p157, %p158
      %p160 = scmp.ne.s32.totalorder %s148, %s149
      %p161 = scmp.eq.s32.totalorder %s34, 1
      %p162 = por %p160, %p161
      %p164 = scmp.ne.s32.totalorder %s149, %s163
      %p165 = scmp.eq.s32.totalorder %s34, 0
      %p166 = por %p164, %p165
      %s168 = sadd.s32 %s167, 1
      %p171 = scmp.eq.s32.totalorder %s28, 1
      %p172 = scmp.ne.s32.totalorder %s167, %s169
      %p173 = scmp.eq.s32.totalorder %s28, 0
      %p174 = por %p172, %p173
      %p175 = scmp.ne.s32.totalorder %s167, %s169
      %p176 = scmp.eq.s32.totalorder %s33, 1
      %p177 = por %p175, %p176
      %p178 = scmp.ne.s32.totalorder %s169, %s170
      %p179 = scmp.eq.s32.totalorder %s33, 0
      %p180 = por %p178, %p179
      %p181 = scmp.ne.s32.totalorder %s169, %s170
      %p182 = scmp.eq.s32.totalorder %s34, 1
      %p183 = por %p181, %p182
      %p185 = scmp.ne.s32.totalorder %s170, %s184
      %p186 = scmp.eq.s32.totalorder %s34, 0
      %p187 = por %p185, %p186
      %s189 = sadd.s32 %s188, 1
      %p192 = scmp.eq.s32.totalorder %s28, 1
      %p193 = scmp.ne.s32.totalorder %s188, %s190
      %p194 = scmp.eq.s32.totalorder %s28, 0
      %p195 = por %p193, %p194
      %p196 = scmp.ne.s32.totalorder %s188, %s190
      %p197 = scmp.eq.s32.totalorder %s33, 1
      %p198 = por %p196, %p197
      %p199 = scmp.ne.s32.totalorder %s190, %s191
      %p200 = scmp.eq.s32.totalorder %s33, 0
      %p201 = por %p199, %p200
      %p202 = scmp.ne.s32.totalorder %s190, %s191
      %p203 = scmp.eq.s32.totalorder %s34, 1
      %p204 = por %p202, %p203
      %p206 = scmp.ne.s32.totalorder %s191, %s205
      %p207 = scmp.eq.s32.totalorder %s34, 0
      %p208 = por %p206, %p207
      %s210 = sadd.s32 %s209, 1
      %p213 = scmp.eq.s32.totalorder %s28, 1
      %p214 = scmp.ne.s32.totalorder %s209, %s211
      %p215 = scmp.eq.s32.totalorder %s28, 0
      %p216 = por %p214, %p215
      %p217 = scmp.ne.s32.totalorder %s209, %s211
      %p218 = scmp.eq.s32.totalorder %s33, 1
      %p219 = por %p217, %p218
      %p220 = scmp.ne.s32.totalorder %s211, %s212
      %p221 = scmp.eq.s32.totalorder %s33, 0
      %p222 = por %p220, %p221
      %p223 = scmp.ne.s32.totalorder %s211, %s212
      %p224 = scmp.eq.s32.totalorder %s34, 1
      %p225 = por %p223, %p224
      %p227 = scmp.ne.s32.totalorder %s212, %s226
      %p228 = scmp.eq.s32.totalorder %s34, 0
      %p229 = por %p227, %p228
      %s231 = sadd.s32 %s230, 1
      %p234 = scmp.eq.s32.totalorder %s28, 1
      %p235 = scmp.ne.s32.totalorder %s230, %s232
      %p236 = scmp.eq.s32.totalorder %s28, 0
      %p237 = por %p235, %p236
      %p238 = scmp.ne.s32.totalorder %s230, %s232
      %p239 = scmp.eq.s32.totalorder %s33, 1
      %p240 = por %p238, %p239
      %p241 = scmp.ne.s32.totalorder %s232, %s233
      %p242 = scmp.eq.s32.totalorder %s33, 0
      %p243 = por %p241, %p242
      %p244 = scmp.ne.s32.totalorder %s232, %s233
      %p245 = scmp.eq.s32.totalorder %s34, 1
      %p246 = por %p244, %p245
      %p248 = scmp.ne.s32.totalorder %s233, %s247
      %p249 = scmp.eq.s32.totalorder %s34, 0
      %p250 = por %p248, %p249
      %s252 = sadd.s32 %s251, 1
      %p255 = scmp.eq.s32.totalorder %s28, 1
      %p256 = scmp.ne.s32.totalorder %s251, %s253
      %p257 = scmp.eq.s32.totalorder %s28, 0
      %p258 = por %p256, %p257
      %p259 = scmp.ne.s32.totalorder %s251, %s253
      %p260 = scmp.eq.s32.totalorder %s33, 1
      %p261 = por %p259, %p260
      %p262 = scmp.ne.s32.totalorder %s253, %s254
      %p263 = scmp.eq.s32.totalorder %s33, 0
      %p264 = por %p262, %p263
      %p265 = scmp.ne.s32.totalorder %s253, %s254
      %p266 = scmp.eq.s32.totalorder %s34, 1
      %p267 = por %p265, %p266
      %p269 = scmp.ne.s32.totalorder %s254, %s268
      %p270 = scmp.eq.s32.totalorder %s34, 0
      %p271 = por %p269, %p270
      %s273 = sadd.s32 %s272, 1
      %p276 = scmp.eq.s32.totalorder %s28, 1
      %p277 = scmp.ne.s32.totalorder %s272, %s274
      %p278 = scmp.eq.s32.totalorder %s28, 0
      %p279 = por %p277, %p278
      %p280 = scmp.ne.s32.totalorder %s272, %s274
      %p281 = scmp.eq.s32.totalorder %s33, 1
      %p282 = por %p280, %p281
      %p283 = scmp.ne.s32.totalorder %s274, %s275
      %p284 = scmp.eq.s32.totalorder %s33, 0
      %p285 = por %p283, %p284
      %p286 = scmp.ne.s32.totalorder %s274, %s275
      %p287 = scmp.eq.s32.totalorder %s34, 1
      %p288 = por %p286, %p287
      %p290 = scmp.ne.s32.totalorder %s275, %s289
      %p291 = scmp.eq.s32.totalorder %s34, 0
      %p292 = por %p290, %p291
      %s294 = sadd.s32 %s293, 1
      %p297 = scmp.eq.s32.totalorder %s28, 1
      %p298 = scmp.ne.s32.totalorder %s293, %s295
      %p299 = scmp.eq.s32.totalorder %s28, 0
      %p300 = por %p298, %p299
      %p301 = scmp.ne.s32.totalorder %s293, %s295
      %p302 = scmp.eq.s32.totalorder %s33, 1
      %p303 = por %p301, %p302
      %p304 = scmp.ne.s32.totalorder %s295, %s296
      %p305 = scmp.eq.s32.totalorder %s33, 0
      %p306 = por %p304, %p305
      %p307 = scmp.ne.s32.totalorder %s295, %s296
      %p308 = scmp.eq.s32.totalorder %s34, 1
      %p309 = por %p307, %p308
      %p311 = scmp.ne.s32.totalorder %s296, %s310
      %p312 = scmp.eq.s32.totalorder %s34, 0
      %p313 = por %p311, %p312
      %s315 = sadd.s32 %s314, 1
      %p318 = scmp.eq.s32.totalorder %s28, 1
      %p319 = scmp.ne.s32.totalorder %s314, %s316
      %p320 = scmp.eq.s32.totalorder %s28, 0
      %p321 = por %p319, %p320
      %p322 = scmp.ne.s32.totalorder %s314, %s316
      %p323 = scmp.eq.s32.totalorder %s33, 1
      %p324 = por %p322, %p323
      %p325 = scmp.ne.s32.totalorder %s316, %s317
      %p326 = scmp.eq.s32.totalorder %s33, 0
      %p327 = por %p325, %p326
      %p328 = scmp.ne.s32.totalorder %s316, %s317
      %p329 = scmp.eq.s32.totalorder %s34, 1
      %p330 = por %p328, %p329
      %p332 = scmp.ne.s32.totalorder %s317, %s331
      %p333 = scmp.eq.s32.totalorder %s34, 0
      %p334 = por %p332, %p333
      %s336 = sadd.s32 %s335, 1
      %p339 = scmp.eq.s32.totalorder %s28, 1
      %p340 = scmp.ne.s32.totalorder %s335, %s337
      %p341 = scmp.eq.s32.totalorder %s28, 0
      %p342 = por %p340, %p341
      %p343 = scmp.ne.s32.totalorder %s335, %s337
      %p344 = scmp.eq.s32.totalorder %s33, 1
      %p345 = por %p343, %p344
      %p346 = scmp.ne.s32.totalorder %s337, %s338
      %p347 = scmp.eq.s32.totalorder %s33, 0
      %p348 = por %p346, %p347
      %p349 = scmp.ne.s32.totalorder %s337, %s338
      %p350 = scmp.eq.s32.totalorder %s34, 1
      %p351 = por %p349, %p350
      %p353 = scmp.ne.s32.totalorder %s338, %s352
      %p354 = scmp.eq.s32.totalorder %s34, 0
      %p355 = por %p353, %p354
      %s356 = ssub.s32 %s28, %s35
      %p357 = scmp.eq.s32.totalorder %s356, 0
      %s359 = sadd.s32 %s358, 1
      %s360 = scalar_select %p357, %s358, %s359
      %p363 = pneg %p357
      %p364 = scmp.eq.s32.totalorder %s28, 1
      %p365 = por %p363, %p364
      %p366 = scmp.ne.s32.totalorder %s358, %s361
      %p367 = scmp.eq.s32.totalorder %s28, 0
      %p368 = por %p366, %p367
      %p369 = scmp.ne.s32.totalorder %s358, %s361
      %p370 = scmp.eq.s32.totalorder %s33, 1
      %p371 = por %p369, %p370
      %p372 = scmp.ne.s32.totalorder %s361, %s362
      %p373 = scmp.eq.s32.totalorder %s33, 0
      %p374 = por %p372, %p373
      %p375 = scmp.ne.s32.totalorder %s361, %s362
      %p376 = scmp.eq.s32.totalorder %s34, 1
      %p377 = por %p375, %p376
      %p379 = scmp.ne.s32.totalorder %s362, %s378
      %p380 = scmp.eq.s32.totalorder %s34, 0
      %p381 = por %p379, %p380
      %p382 = scmp.le.s32.totalorder 1, %s28
      %p383 = scmp.lt.s32.totalorder %s28, 3
      %p384 = pnand %p382, %p383
      %p385 = pneg %p384
      // Predicated region
      $region9: #{_lambda_.1} parent=5 // pred_check
        _
      $region10: #{_lambda_.1} parent=5 // pred_check_branch
        %387 = sbr.rel (%p384) target = $region12
      $region11: #{_lambda_.1} parent=5 // pred_region
        %s388 = ssub.s32 %s28, 1
        // Predicated region
        $region13: #{_lambda_.1} parent=11 // pred_check
          %p389 = pneg %p75
        $region14: #{_lambda_.1} parent=11 // pred_check_branch
          %391 = sbr.rel (%p389) target = $region16
        $region15: #{_lambda_.1} parent=11 // pred_region
          _
        $region16: #{_lambda_.1} parent=11 // pred_fallthru
          _
        // Predicated region
        $region17: #{_lambda_.1} parent=11 // pred_check
          %p392 = pneg %p96
        $region18: #{_lambda_.1} parent=11 // pred_check_branch
          %394 = sbr.rel (%p392) target = $region20
        $region19: #{_lambda_.1} parent=11 // pred_region
          _
        $region20: #{_lambda_.1} parent=11 // pred_fallthru
          _
        // Predicated region
        $region21: #{_lambda_.1} parent=11 // pred_check
          %p395 = pneg %p117
        $region22: #{_lambda_.1} parent=11 // pred_check_branch
          %397 = sbr.rel (%p395) target = $region24
        $region23: #{_lambda_.1} parent=11 // pred_region
          _
        $region24: #{_lambda_.1} parent=11 // pred_fallthru
          _
        // Predicated region
        $region25: #{_lambda_.1} parent=11 // pred_check
          %p398 = pneg %p138
        $region26: #{_lambda_.1} parent=11 // pred_check_branch
          %400 = sbr.rel (%p398) target = $region28
        $region27: #{_lambda_.1} parent=11 // pred_region
          %s402 = ssub.s32 128, 128
          %403 = vsyncadd [#allocation3], %s402
          %s404 = sshll.u32 [#allocation2], 4
          %s405 = int_to_ptr.vmem [resolvable:$true] %s404
          %410 = dma.hbm_to_vmem [thread:$0]  %s4, 128, %s405, [#allocation3], 32, 32, 2
        $region28: #{_lambda_.1} parent=11 // pred_fallthru
          _
        // Predicated region
        $region29: #{_lambda_.1} parent=11 // pred_check
          %p411 = pneg %p159
        $region30: #{_lambda_.1} parent=11 // pred_check_branch
          %413 = sbr.rel (%p411) target = $region32
        $region31: #{_lambda_.1} parent=11 // pred_region
          _
        $region32: #{_lambda_.1} parent=11 // pred_fallthru
          _
        // Predicated region
        $region33: #{_lambda_.1} parent=11 // pred_check
          %p414 = pneg %p180
        $region34: #{_lambda_.1} parent=11 // pred_check_branch
          %416 = sbr.rel (%p414) target = $region36
        $region35: #{_lambda_.1} parent=11 // pred_region
          %s418 = ssub.s32 16, 16
          %419 = vsyncadd [#allocation6], %s418
          %s421 = sshll.u32 [#allocation5], 4
          %s422 = int_to_ptr.vmem [resolvable:$true] %s421
          %424 = dma.hbm_to_vmem [thread:$0]  %s6, 16, %s422, [#allocation6]
        $region36: #{_lambda_.1} parent=11 // pred_fallthru
          _
        // Predicated region
        $region37: #{_lambda_.1} parent=11 // pred_check
          %p425 = pneg %p201
        $region38: #{_lambda_.1} parent=11 // pred_check_branch
          %427 = sbr.rel (%p425) target = $region40
        $region39: #{_lambda_.1} parent=11 // pred_region
          %s429 = ssub.s32 1024, 1024
          %430 = vsyncadd [#allocation6], %s429
          %s431 = sshll.u32 [#allocation7], 4
          %s432 = int_to_ptr.vmem [resolvable:$true] %s431
          %437 = dma.hbm_to_vmem [thread:$0]  %s7, 1024, %s432, [#allocation6], 128, 128, 8
        $region40: #{_lambda_.1} parent=11 // pred_fallthru
          _
        // Predicated region
        $region41: #{_lambda_.1} parent=11 // pred_check
          %p438 = pneg %p222
        $region42: #{_lambda_.1} parent=11 // pred_check_branch
          %440 = sbr.rel (%p438) target = $region44
        $region43: #{_lambda_.1} parent=11 // pred_region
          %s442 = ssub.s32 128, 128
          %443 = vsyncadd [#allocation9], %s442
          %s444 = sshll.u32 [#allocation8], 4
          %s445 = int_to_ptr.vmem [resolvable:$true] %s444
          %450 = dma.hbm_to_vmem [thread:$0]  %s8, 128, %s445, [#allocation9], 32, 32, 2
        $region44: #{_lambda_.1} parent=11 // pred_fallthru
          _
        // Predicated region
        $region45: #{_lambda_.1} parent=11 // pred_check
          %p451 = pneg %p243
        $region46: #{_lambda_.1} parent=11 // pred_check_branch
          %453 = sbr.rel (%p451) target = $region48
        $region47: #{_lambda_.1} parent=11 // pred_region
          %s455 = ssub.s32 2048, 2048
          %456 = vsyncadd [#allocation9], %s455
          %s457 = sshll.u32 [#allocation10], 4
          %s458 = int_to_ptr.vmem [resolvable:$true] %s457
          %463 = dma.hbm_to_vmem [thread:$0]  %s9, 2048, %s458, [#allocation9], 64, 64, 4
        $region48: #{_lambda_.1} parent=11 // pred_fallthru
          _
        // Predicated region
        $region49: #{_lambda_.1} parent=11 // pred_check
          %p464 = pneg %p264
        $region50: #{_lambda_.1} parent=11 // pred_check_branch
          %466 = sbr.rel (%p464) target = $region52
        $region51: #{_lambda_.1} parent=11 // pred_region
          %s468 = ssub.s32 16, 16
          %469 = vsyncadd [#allocation12], %s468
          %s471 = sshll.u32 [#allocation11], 4
          %s472 = int_to_ptr.vmem [resolvable:$true] %s471
          %474 = dma.hbm_to_vmem [thread:$0]  %s10, 16, %s472, [#allocation12]
        $region52: #{_lambda_.1} parent=11 // pred_fallthru
          _
        // Predicated region
        $region53: #{_lambda_.1} parent=11 // pred_check
          %p475 = pneg %p285
        $region54: #{_lambda_.1} parent=11 // pred_check_branch
          %477 = sbr.rel (%p475) target = $region56
        $region55: #{_lambda_.1} parent=11 // pred_region
          %s479 = ssub.s32 1536, 1536
          %480 = vsyncadd [#allocation12], %s479
          %s481 = sshll.u32 [#allocation13], 4
          %s482 = int_to_ptr.vmem [resolvable:$true] %s481
          %487 = dma.hbm_to_vmem [thread:$0]  %s11, 1536, %s482, [#allocation12], 128, 128, 8
        $region56: #{_lambda_.1} parent=11 // pred_fallthru
          _
        // Predicated region
        $region57: #{_lambda_.1} parent=11 // pred_check
          %p488 = pneg %p306
        $region58: #{_lambda_.1} parent=11 // pred_check_branch
          %490 = sbr.rel (%p488) target = $region60
        $region59: #{_lambda_.1} parent=11 // pred_region
          _
        $region60: #{_lambda_.1} parent=11 // pred_fallthru
          _
        // Predicated region
        $region61: #{_lambda_.1} parent=11 // pred_check
          %p491 = pneg %p327
        $region62: #{_lambda_.1} parent=11 // pred_check_branch
          %493 = sbr.rel (%p491) target = $region64
        $region63: #{_lambda_.1} parent=11 // pred_region
          _
        $region64: #{_lambda_.1} parent=11 // pred_fallthru
          _
        // Predicated region
        $region65: #{_lambda_.1} parent=11 // pred_check
          %p494 = pneg %p348
        $region66: #{_lambda_.1} parent=11 // pred_check_branch
          %496 = sbr.rel (%p494) target = $region68
        $region67: #{_lambda_.1} parent=11 // pred_region
          _
        $region68: #{_lambda_.1} parent=11 // pred_fallthru
          _
      $region12: #{_lambda_.1} parent=5 // pred_fallthru
        _
      %p497 = scmp.lt.s32.totalorder %s28, 2
      // Predicated region
      $region69: #{_lambda_.1} parent=5 // pred_check
        %p498 = pneg %p497
      $region70: #{_lambda_.1} parent=5 // pred_check_branch
        %500 = sbr.rel (%p498) target = $region72
      $region71: #{_lambda_.1} parent=5 // pred_region
        // Predicated region
        $region73: #{_lambda_.1} parent=71 // pred_check
          %p501 = pneg %p48
        $region74: #{_lambda_.1} parent=71 // pred_check_branch
          %503 = sbr.rel (%p501) target = $region76
        $region75: #{_lambda_.1} parent=71 // pred_region
          %p504 = scmp.lt.s32.totalorder %s28, 1
          %s505 = scalar_select %p504, %s28, 1
          %s506 = smul.addr %s505, 2
          %s507 = smul.addr %s506, 8
          %s508 = scalar_lea.vmem %s0, %s507
        $region76: #{_lambda_.1} parent=71 // pred_fallthru
          _
      $region72: #{_lambda_.1} parent=5 // pred_fallthru
        _
      %p509 = scmp.le.s32.totalorder 1, %s28
      %p510 = scmp.lt.s32.totalorder %s28, 3
      %p511 = pnand %p509, %p510
      %p512 = pneg %p511
      // Predicated region
      $region77: #{_lambda_.1} parent=5 // pred_check
        _
      $region78: #{_lambda_.1} parent=5 // pred_check_branch
        %514 = sbr.rel (%p511) target = $region80
      $region79: #{_lambda_.1} parent=5 // pred_region
        %s515 = ssub.s32 %s28, 1
        // Predicated region
        $region81: #{_lambda_.1} parent=79 // pred_check
          %p516 = pneg %p138
        $region82: #{_lambda_.1} parent=79 // pred_check_branch
          %518 = sbr.rel (%p516) target = $region84
        $region83: #{_lambda_.1} parent=79 // pred_region
          %519 = dma.done [#allocation3], 128
        $region84: #{_lambda_.1} parent=79 // pred_fallthru
          _
        // Predicated region
        $region85: #{_lambda_.1} parent=79 // pred_check
          %p520 = pneg %p180
        $region86: #{_lambda_.1} parent=79 // pred_check_branch
          %522 = sbr.rel (%p520) target = $region88
        $region87: #{_lambda_.1} parent=79 // pred_region
          %523 = dma.done [#allocation6], 16
        $region88: #{_lambda_.1} parent=79 // pred_fallthru
          _
        // Predicated region
        $region89: #{_lambda_.1} parent=79 // pred_check
          %p524 = pneg %p201
        $region90: #{_lambda_.1} parent=79 // pred_check_branch
          %526 = sbr.rel (%p524) target = $region92
        $region91: #{_lambda_.1} parent=79 // pred_region
          %527 = dma.done [#allocation6], 1024
        $region92: #{_lambda_.1} parent=79 // pred_fallthru
          _
        // Predicated region
        $region93: #{_lambda_.1} parent=79 // pred_check
          %p528 = pneg %p222
        $region94: #{_lambda_.1} parent=79 // pred_check_branch
          %530 = sbr.rel (%p528) target = $region96
        $region95: #{_lambda_.1} parent=79 // pred_region
          %531 = dma.done [#allocation9], 128
        $region96: #{_lambda_.1} parent=79 // pred_fallthru
          _
        // Predicated region
        $region97: #{_lambda_.1} parent=79 // pred_check
          %p532 = pneg %p243
        $region98: #{_lambda_.1} parent=79 // pred_check_branch
          %534 = sbr.rel (%p532) target = $region100
        $region99: #{_lambda_.1} parent=79 // pred_region
          %535 = dma.done [#allocation9], 2048
        $region100: #{_lambda_.1} parent=79 // pred_fallthru
          _
        // Predicated region
        $region101: #{_lambda_.1} parent=79 // pred_check
          %p536 = pneg %p264
        $region102: #{_lambda_.1} parent=79 // pred_check_branch
          %538 = sbr.rel (%p536) target = $region104
        $region103: #{_lambda_.1} parent=79 // pred_region
          %539 = dma.done [#allocation12], 16
        $region104: #{_lambda_.1} parent=79 // pred_fallthru
          _
        // Predicated region
        $region105: #{_lambda_.1} parent=79 // pred_check
          %p540 = pneg %p285
        $region106: #{_lambda_.1} parent=79 // pred_check_branch
          %542 = sbr.rel (%p540) target = $region108
        $region107: #{_lambda_.1} parent=79 // pred_region
          %543 = dma.done [#allocation12], 1536
        $region108: #{_lambda_.1} parent=79 // pred_fallthru
          _
        %p544 = scmp.lt.s32.totalorder %s33, 1
        %s545 = scalar_select %p544, %s33, 1
        %s546 = smul.addr %s545, 2
        %s547 = smul.addr %s546, 8
        %s548 = scalar_lea.vmem %s0, %s547
        %p549 = pneg %p54
        %p550 = pneg %p51
        %p551 = pneg %p75
        %p552 = pneg %p72
        %p553 = pneg %p96
        %p554 = pneg %p93
        %p555 = pneg %p117
        %p556 = pneg %p114
        %p557 = pneg %p138
        %p558 = pneg %p135
        %p559 = pneg %p159
        %p560 = pneg %p156
        %p561 = pneg %p180
        %p562 = pneg %p177
        %p563 = pneg %p201
        %p564 = pneg %p198
        %p565 = pneg %p222
        %p566 = pneg %p219
        %p567 = pneg %p243
        %p568 = pneg %p240
        %p569 = pneg %p264
        %p570 = pneg %p261
        %p571 = pneg %p285
        %p572 = pneg %p282
        %p573 = pneg %p306
        %p574 = pneg %p303
        %p575 = pneg %p327
        %p576 = pneg %p324
        %p577 = pneg %p348
        %p578 = pneg %p345
        %p579 = pneg %p374
        %p580 = pneg %p371
        %s581 = sand.u32 %s361, 1
        %s582 = scalar_lea.sflag [#allocation4], %s581
        %s583 = sand.u32 %s361, 1
        %s584 = smul.addr %s583, 2
        %s585 = scalar_lea.vmem [#allocation14], %s584
        %p586 = scmp.lt.s32.totalorder %s33, 1
        %s587 = scalar_select %p586, %s33, 1
        %s588 = smul.addr %s587, 2
        %s589 = smul.addr %s588, 8
        %s590 = scalar_lea.vmem %s0, %s589
        %v592 = vld [vmem:[%s590] sm:$0xff]
        %v593 = vld [vmem:[%s590 + $0x8] sm:$0xff]
        %v594 = vpack.c.bf16 %v593, %v592
        %v595 = vld [vmem:[%s1] sm:$0xf]
        %vm596 = vcmask 130048
        %v598 = vsel %vm596, %v595, 0
        %600 = vmatprep.subr.bf16.mxu0 0
        %601 = vmatpush1.bf16.msra.mxu0 %v594
        %602 = vmatprep.subr.bf16.mxu0 0
        %603 = vmatpush1.bf16.msra.mxu0 0
        %604 = vmatprep.subr.bf16.mxu0 0
        %605 = vmatpush1.bf16.msra.mxu0 0
        %606 = vmatprep.subr.bf16.mxu0 0
        %607 = vmatpush1.bf16.msra.mxu0 0
        %608 = vmatprep.subr.bf16.mxu0 0
        %609 = vmatpush1.bf16.msra.mxu0 0
        %610 = vmatprep.subr.bf16.mxu0 0
        %611 = vmatpush1.bf16.msra.mxu0 0
        %612 = vmatprep.subr.bf16.mxu0 0
        %613 = vmatpush1.bf16.msra.mxu0 0
        %614 = vmatprep.subr.bf16.mxu0 0
        %615 = vmatpush1.bf16.msra.mxu0 0
        %616 = vmatprep.subr.bf16.mxu0 0
        %617 = vmatpush1.bf16.msra.mxu0 0
        %618 = vmatprep.subr.bf16.mxu0 0
        %619 = vmatpush1.bf16.msra.mxu0 0
        %620 = vmatprep.subr.bf16.mxu0 0
        %621 = vmatpush1.bf16.msra.mxu0 0
        %622 = vmatprep.subr.bf16.mxu0 0
        %623 = vmatpush1.bf16.msra.mxu0 0
        %624 = vmatprep.subr.bf16.mxu0 0
        %625 = vmatpush1.bf16.msra.mxu0 0
        %626 = vmatprep.subr.bf16.mxu0 0
        %627 = vmatpush1.bf16.msra.mxu0 0
        %628 = vmatprep.subr.bf16.mxu0 0
        %629 = vmatpush1.bf16.msra.mxu0 0
        %630 = vmatprep.subr.bf16.mxu0 0
        %631 = vmatpush1.bf16.msra.mxu0 0
        %632 = vmatprep.mubr.bf16.mxu0 0
        %633 = vmatmul.mubr.bf16.gmra.mrb[0].mxu0 %v598
        %v634 = vpop.f32.mrb[0].mxu0
        %v635 = vadd.f32 0.0, %v634
        %v636 = vpop.f32.mrb[0].mxu0
        %v637 = vpop.f32.mrb[0].mxu0
        %v638 = vpop.f32.mrb[0].mxu0
        %639 = vdwg.mxu0
        %v640 = vpack.c.bf16 %v635, %v635
        %v641 = vld [vmem:[%s2] sm:$0xf]
        %v642 = vld [vmem:[%s2 + $0x4] sm:$0xf]
        %v643 = vld [vmem:[%s2 + $0x8] sm:$0xf]
        %v644 = vld [vmem:[%s2 + $0xc] sm:$0xf]
        %v645 = vld [vmem:[%s2 + $0x10] sm:$0xf]
        %v646 = vld [vmem:[%s2 + $0x14] sm:$0xf]
        %v647 = vld [vmem:[%s2 + $0x18] sm:$0xf]
        %v648 = vld [vmem:[%s2 + $0x1c] sm:$0xf]
        %s649 = scalar_lea.vmem %s1, 4
        %v650 = vld [vmem:[%s649] sm:$0xf]
        %v652 = vsel %vm596, %v650, 0
        %654 = vmatprep.subr.bf16.mxu0 0
        %655 = vmatpush1.bf16.msra.mxu0 %v594
        %656 = vmatprep.subr.bf16.mxu0 0
        %657 = vmatpush1.bf16.msra.mxu0 0
        %658 = vmatprep.subr.bf16.mxu0 0
        %659 = vmatpush1.bf16.msra.mxu0 0
        %660 = vmatprep.subr.bf16.mxu0 0
        %661 = vmatpush1.bf16.msra.mxu0 0
        %662 = vmatprep.subr.bf16.mxu0 0
        %663 = vmatpush1.bf16.msra.mxu0 0
        %664 = vmatprep.subr.bf16.mxu0 0
        %665 = vmatpush1.bf16.msra.mxu0 0
        %666 = vmatprep.subr.bf16.mxu0 0
        %667 = vmatpush1.bf16.msra.mxu0 0
        %668 = vmatprep.subr.bf16.mxu0 0
        %669 = vmatpush1.bf16.msra.mxu0 0
        %670 = vmatprep.subr.bf16.mxu0 0
        %671 = vmatpush1.bf16.msra.mxu0 0
        %672 = vmatprep.subr.bf16.mxu0 0
        %673 = vmatpush1.bf16.msra.mxu0 0
        %674 = vmatprep.subr.bf16.mxu0 0
        %675 = vmatpush1.bf16.msra.mxu0 0
        %676 = vmatprep.subr.bf16.mxu0 0
        %677 = vmatpush1.bf16.msra.mxu0 0
        %678 = vmatprep.subr.bf16.mxu0 0
        %679 = vmatpush1.bf16.msra.mxu0 0
        %680 = vmatprep.subr.bf16.mxu0 0
        %681 = vmatpush1.bf16.msra.mxu0 0
        %682 = vmatprep.subr.bf16.mxu0 0
        %683 = vmatpush1.bf16.msra.mxu0 0
        %684 = vmatprep.subr.bf16.mxu0 0
        %685 = vmatpush1.bf16.msra.mxu0 0
        %686 = vmatprep.mubr.bf16.mxu0 0
        %687 = vmatmul.mubr.bf16.gmra.mrb[0].mxu0 %v652
        %v688 = vpop.f32.mrb[0].mxu0
        %v689 = vadd.f32 0.0, %v688
        %v690 = vpop.f32.mrb[0].mxu0
        %v691 = vpop.f32.mrb[0].mxu0
        %v692 = vpop.f32.mrb[0].mxu0
        %693 = vdwg.mxu0
        %v694 = vpack.c.bf16 %v689, %v689
        %s695 = scalar_lea.vmem %s2, 32
        %v696 = vld [vmem:[%s695] sm:$0xf]
        %v697 = vld [vmem:[%s695 + $0x4] sm:$0xf]
        %v698 = vld [vmem:[%s695 + $0x8] sm:$0xf]
        %v699 = vld [vmem:[%s695 + $0xc] sm:$0xf]
        %v700 = vld [vmem:[%s695 + $0x10] sm:$0xf]
        %v701 = vld [vmem:[%s695 + $0x14] sm:$0xf]
        %v702 = vld [vmem:[%s695 + $0x18] sm:$0xf]
        %v703 = vld [vmem:[%s695 + $0x1c] sm:$0xf]
        %v712 = vunpack.c.l.b16 %v696
        %v713 = vunpack.c.l.b16 %v697
        %v714 = vunpack.c.l.b16 %v698
        %v715 = vunpack.c.l.b16 %v699
        %v716 = vunpack.c.l.b16 %v700
        %v717 = vunpack.c.l.b16 %v701
        %v718 = vunpack.c.l.b16 %v702
        %v719 = vunpack.c.l.b16 %v703
        %v720 = vpack.c.b16 %v713, %v712
        %v721 = vpack.c.b16 %v715, %v714
        %v722 = vpack.c.b16 %v717, %v716
        %v723 = vpack.c.b16 %v719, %v718
        %vm728 = vcmask 523264
        %v730 = vsel %vm728, %v694, 0
        %732 = vmatprep.subr.bf16.mxu0 0
        %733 = vmatpush1.bf16.msra.mxu0 %v720
        %734 = vmatprep.subr.bf16.mxu0 0
        %735 = vmatpush1.bf16.msra.mxu0 %v721
        %736 = vmatprep.subr.bf16.mxu0 0
        %737 = vmatpush1.bf16.msra.mxu0 %v722
        %738 = vmatprep.subr.bf16.mxu0 0
        %739 = vmatpush1.bf16.msra.mxu0 %v723
        %740 = vmatprep.subr.bf16.mxu0 0
        %741 = vmatpush1.bf16.msra.mxu0 0
        %742 = vmatprep.subr.bf16.mxu0 0
        %743 = vmatpush1.bf16.msra.mxu0 0
        %744 = vmatprep.subr.bf16.mxu0 0
        %745 = vmatpush1.bf16.msra.mxu0 0
        %746 = vmatprep.subr.bf16.mxu0 0
        %747 = vmatpush1.bf16.msra.mxu0 0
        %748 = vmatprep.subr.bf16.mxu0 0
        %749 = vmatpush1.bf16.msra.mxu0 0
        %750 = vmatprep.subr.bf16.mxu0 0
        %751 = vmatpush1.bf16.msra.mxu0 0
        %752 = vmatprep.subr.bf16.mxu0 0
        %753 = vmatpush1.bf16.msra.mxu0 0
        %754 = vmatprep.subr.bf16.mxu0 0
        %755 = vmatpush1.bf16.msra.mxu0 0
        %756 = vmatprep.subr.bf16.mxu0 0
        %757 = vmatpush1.bf16.msra.mxu0 0
        %758 = vmatprep.subr.bf16.mxu0 0
        %759 = vmatpush1.bf16.msra.mxu0 0
        %760 = vmatprep.subr.bf16.mxu0 0
        %761 = vmatpush1.bf16.msra.mxu0 0
        %762 = vmatprep.subr.bf16.mxu0 0
        %763 = vmatpush1.bf16.msra.mxu0 0
        %764 = vmatprep.mubr.bf16.mxu0 0
        %765 = vmatmul.mubr.bf16.gmra.mrb[0].mxu0 %v730
        %v766 = vpop.f32.mrb[0].mxu0
        %v767 = vadd.f32 0.0, %v766
        %v768 = vpop.f32.mrb[0].mxu0
        %v769 = vpop.f32.mrb[0].mxu0
        %v770 = vpop.f32.mrb[0].mxu0
        %771 = vdwg.mxu0
        %v780 = vunpack.c.l.b16 %v641
        %v781 = vunpack.c.l.b16 %v642
        %v782 = vunpack.c.l.b16 %v643
        %v783 = vunpack.c.l.b16 %v644
        %v784 = vunpack.c.l.b16 %v645
        %v785 = vunpack.c.l.b16 %v646
        %v786 = vunpack.c.l.b16 %v647
        %v787 = vunpack.c.l.b16 %v648
        %v788 = vpack.c.b16 %v781, %v780
        %v789 = vpack.c.b16 %v783, %v782
        %v790 = vpack.c.b16 %v785, %v784
        %v791 = vpack.c.b16 %v787, %v786
        %v797 = vsel %vm728, %v640, 0
        %799 = vmatprep.subr.bf16.mxu0 0
        %800 = vmatpush1.bf16.msra.mxu0 %v788
        %801 = vmatprep.subr.bf16.mxu0 0
        %802 = vmatpush1.bf16.msra.mxu0 %v789
        %803 = vmatprep.subr.bf16.mxu0 0
        %804 = vmatpush1.bf16.msra.mxu0 %v790
        %805 = vmatprep.subr.bf16.mxu0 0
        %806 = vmatpush1.bf16.msra.mxu0 %v791
        %807 = vmatprep.subr.bf16.mxu0 0
        %808 = vmatpush1.bf16.msra.mxu0 0
        %809 = vmatprep.subr.bf16.mxu0 0
        %810 = vmatpush1.bf16.msra.mxu0 0
        %811 = vmatprep.subr.bf16.mxu0 0
        %812 = vmatpush1.bf16.msra.mxu0 0
        %813 = vmatprep.subr.bf16.mxu0 0
        %814 = vmatpush1.bf16.msra.mxu0 0
        %815 = vmatprep.subr.bf16.mxu0 0
        %816 = vmatpush1.bf16.msra.mxu0 0
        %817 = vmatprep.subr.bf16.mxu0 0
        %818 = vmatpush1.bf16.msra.mxu0 0
        %819 = vmatprep.subr.bf16.mxu0 0
        %820 = vmatpush1.bf16.msra.mxu0 0
        %821 = vmatprep.subr.bf16.mxu0 0
        %822 = vmatpush1.bf16.msra.mxu0 0
        %823 = vmatprep.subr.bf16.mxu0 0
        %824 = vmatpush1.bf16.msra.mxu0 0
        %825 = vmatprep.subr.bf16.mxu0 0
        %826 = vmatpush1.bf16.msra.mxu0 0
        %827 = vmatprep.subr.bf16.mxu0 0
        %828 = vmatpush1.bf16.msra.mxu0 0
        %829 = vmatprep.subr.bf16.mxu0 0
        %830 = vmatpush1.bf16.msra.mxu0 0
        %831 = vmatprep.mubr.bf16.mxu0 0
        %832 = vmatmul.mubr.bf16.gmra.mrb[0].mxu0 %v797
        %v833 = vpop.f32.mrb[0].mxu0
        %v834 = vadd.f32 %v767, %v833
        %v835 = vpop.f32.mrb[0].mxu0
        %v836 = vpop.f32.mrb[0].mxu0
        %v837 = vpop.f32.mrb[0].mxu0
        %838 = vdwg.mxu0
        %s839 = scalar_lea.vmem %s1, 8
        %v840 = vld [vmem:[%s839] sm:$0xf]
        %v842 = vsel %vm596, %v840, 0
        %844 = vmatprep.subr.bf16.mxu0 0
        %845 = vmatpush1.bf16.msra.mxu0 %v594
        %846 = vmatprep.subr.bf16.mxu0 0
        %847 = vmatpush1.bf16.msra.mxu0 0
        %848 = vmatprep.subr.bf16.mxu0 0
        %849 = vmatpush1.bf16.msra.mxu0 0
        %850 = vmatprep.subr.bf16.mxu0 0
        %851 = vmatpush1.bf16.msra.mxu0 0
        %852 = vmatprep.subr.bf16.mxu0 0
        %853 = vmatpush1.bf16.msra.mxu0 0
        %854 = vmatprep.subr.bf16.mxu0 0
        %855 = vmatpush1.bf16.msra.mxu0 0
        %856 = vmatprep.subr.bf16.mxu0 0
        %857 = vmatpush1.bf16.msra.mxu0 0
        %858 = vmatprep.subr.bf16.mxu0 0
        %859 = vmatpush1.bf16.msra.mxu0 0
        %860 = vmatprep.subr.bf16.mxu0 0
        %861 = vmatpush1.bf16.msra.mxu0 0
        %862 = vmatprep.subr.bf16.mxu0 0
        %863 = vmatpush1.bf16.msra.mxu0 0
        %864 = vmatprep.subr.bf16.mxu0 0
        %865 = vmatpush1.bf16.msra.mxu0 0
        %866 = vmatprep.subr.bf16.mxu0 0
        %867 = vmatpush1.bf16.msra.mxu0 0
        %868 = vmatprep.subr.bf16.mxu0 0
        %869 = vmatpush1.bf16.msra.mxu0 0
        %870 = vmatprep.subr.bf16.mxu0 0
        %871 = vmatpush1.bf16.msra.mxu0 0
        %872 = vmatprep.subr.bf16.mxu0 0
        %873 = vmatpush1.bf16.msra.mxu0 0
        %874 = vmatprep.subr.bf16.mxu0 0
        %875 = vmatpush1.bf16.msra.mxu0 0
        %876 = vmatprep.mubr.bf16.mxu0 0
        %877 = vmatmul.mubr.bf16.gmra.mrb[0].mxu0 %v842
        %v878 = vpop.f32.mrb[0].mxu0
        %v879 = vadd.f32 0.0, %v878
        %v880 = vpop.f32.mrb[0].mxu0
        %v881 = vpop.f32.mrb[0].mxu0
        %v882 = vpop.f32.mrb[0].mxu0
        %883 = vdwg.mxu0
        %v884 = vpack.c.bf16 %v879, %v879
        %s885 = scalar_lea.vmem %s2, 64
        %v886 = vld [vmem:[%s885] sm:$0xf]
        %v887 = vld [vmem:[%s885 + $0x4] sm:$0xf]
        %v888 = vld [vmem:[%s885 + $0x8] sm:$0xf]
        %v889 = vld [vmem:[%s885 + $0xc] sm:$0xf]
        %v890 = vld [vmem:[%s885 + $0x10] sm:$0xf]
        %v891 = vld [vmem:[%s885 + $0x14] sm:$0xf]
        %v892 = vld [vmem:[%s885 + $0x18] sm:$0xf]
        %v893 = vld [vmem:[%s885 + $0x1c] sm:$0xf]
        %v902 = vunpack.c.l.b16 %v886
        %v903 = vunpack.c.l.b16 %v887
        %v904 = vunpack.c.l.b16 %v888
        %v905 = vunpack.c.l.b16 %v889
        %v906 = vunpack.c.l.b16 %v890
        %v907 = vunpack.c.l.b16 %v891
        %v908 = vunpack.c.l.b16 %v892
        %v909 = vunpack.c.l.b16 %v893
        %v910 = vpack.c.b16 %v903, %v902
        %v911 = vpack.c.b16 %v905, %v904
        %v912 = vpack.c.b16 %v907, %v906
        %v913 = vpack.c.b16 %v909, %v908
        %v919 = vsel %vm728, %v884, 0
        %921 = vmatprep.subr.bf16.mxu0 0
        %922 = vmatpush1.bf16.msra.mxu0 %v910
        %923 = vmatprep.subr.bf16.mxu0 0
        %924 = vmatpush1.bf16.msra.mxu0 %v911
        %925 = vmatprep.subr.bf16.mxu0 0
        %926 = vmatpush1.bf16.msra.mxu0 %v912
        %927 = vmatprep.subr.bf16.mxu0 0
        %928 = vmatpush1.bf16.msra.mxu0 %v913
        %929 = vmatprep.subr.bf16.mxu0 0
        %930 = vmatpush1.bf16.msra.mxu0 0
        %931 = vmatprep.subr.bf16.mxu0 0
        %932 = vmatpush1.bf16.msra.mxu0 0
        %933 = vmatprep.subr.bf16.mxu0 0
        %934 = vmatpush1.bf16.msra.mxu0 0
        %935 = vmatprep.subr.bf16.mxu0 0
        %936 = vmatpush1.bf16.msra.mxu0 0
        %937 = vmatprep.subr.bf16.mxu0 0
        %938 = vmatpush1.bf16.msra.mxu0 0
        %939 = vmatprep.subr.bf16.mxu0 0
        %940 = vmatpush1.bf16.msra.mxu0 0
        %941 = vmatprep.subr.bf16.mxu0 0
        %942 = vmatpush1.bf16.msra.mxu0 0
        %943 = vmatprep.subr.bf16.mxu0 0
        %944 = vmatpush1.bf16.msra.mxu0 0
        %945 = vmatprep.subr.bf16.mxu0 0
        %946 = vmatpush1.bf16.msra.mxu0 0
        %947 = vmatprep.subr.bf16.mxu0 0
        %948 = vmatpush1.bf16.msra.mxu0 0
        %949 = vmatprep.subr.bf16.mxu0 0
        %950 = vmatpush1.bf16.msra.mxu0 0
        %951 = vmatprep.subr.bf16.mxu0 0
        %952 = vmatpush1.bf16.msra.mxu0 0
        %953 = vmatprep.mubr.bf16.mxu0 0
        %954 = vmatmul.mubr.bf16.gmra.mrb[0].mxu0 %v919
        %v955 = vpop.f32.mrb[0].mxu0
        %v956 = vadd.f32 0.0, %v955
        %v957 = vpop.f32.mrb[0].mxu0
        %v958 = vpop.f32.mrb[0].mxu0
        %v959 = vpop.f32.mrb[0].mxu0
        %960 = vdwg.mxu0
        %v961 = vadd.f32 %v834, %v956
        %s962 = scalar_lea.vmem %s1, 12
        %v963 = vld [vmem:[%s962] sm:$0xf]
        %v965 = vsel %vm596, %v963, 0
        %967 = vmatprep.subr.bf16.mxu0 0
        %968 = vmatpush1.bf16.msra.mxu0 %v594
        %969 = vmatprep.subr.bf16.mxu0 0
        %970 = vmatpush1.bf16.msra.mxu0 0
        %971 = vmatprep.subr.bf16.mxu0 0
        %972 = vmatpush1.bf16.msra.mxu0 0
        %973 = vmatprep.subr.bf16.mxu0 0
        %974 = vmatpush1.bf16.msra.mxu0 0
        %975 = vmatprep.subr.bf16.mxu0 0
        %976 = vmatpush1.bf16.msra.mxu0 0
        %977 = vmatprep.subr.bf16.mxu0 0
        %978 = vmatpush1.bf16.msra.mxu0 0
        %979 = vmatprep.subr.bf16.mxu0 0
        %980 = vmatpush1.bf16.msra.mxu0 0
        %981 = vmatprep.subr.bf16.mxu0 0
        %982 = vmatpush1.bf16.msra.mxu0 0
        %983 = vmatprep.subr.bf16.mxu0 0
        %984 = vmatpush1.bf16.msra.mxu0 0
        %985 = vmatprep.subr.bf16.mxu0 0
        %986 = vmatpush1.bf16.msra.mxu0 0
        %987 = vmatprep.subr.bf16.mxu0 0
        %988 = vmatpush1.bf16.msra.mxu0 0
        %989 = vmatprep.subr.bf16.mxu0 0
        %990 = vmatpush1.bf16.msra.mxu0 0
        %991 = vmatprep.subr.bf16.mxu0 0
        %992 = vmatpush1.bf16.msra.mxu0 0
        %993 = vmatprep.subr.bf16.mxu0 0
        %994 = vmatpush1.bf16.msra.mxu0 0
        %995 = vmatprep.subr.bf16.mxu0 0
        %996 = vmatpush1.bf16.msra.mxu0 0
        %997 = vmatprep.subr.bf16.mxu0 0
        %998 = vmatpush1.bf16.msra.mxu0 0
        %999 = vmatprep.mubr.bf16.mxu0 0
        %1000 = vmatmul.mubr.bf16.gmra.mrb[0].mxu0 %v965
        %v1001 = vpop.f32.mrb[0].mxu0
        %v1002 = vadd.f32 0.0, %v1001
        %v1003 = vpop.f32.mrb[0].mxu0
        %v1004 = vpop.f32.mrb[0].mxu0
        %v1005 = vpop.f32.mrb[0].mxu0
        %1006 = vdwg.mxu0
        %v1007 = vpack.c.bf16 %v1002, %v1002
        %s1008 = scalar_lea.vmem %s2, 96
        %v1009 = vld [vmem:[%s1008] sm:$0xf]
        %v1010 = vld [vmem:[%s1008 + $0x4] sm:$0xf]
        %v1011 = vld [vmem:[%s1008 + $0x8] sm:$0xf]
        %v1012 = vld [vmem:[%s1008 + $0xc] sm:$0xf]
        %v1013 = vld [vmem:[%s1008 + $0x10] sm:$0xf]
        %v1014 = vld [vmem:[%s1008 + $0x14] sm:$0xf]
        %v1015 = vld [vmem:[%s1008 + $0x18] sm:$0xf]
        %v1016 = vld [vmem:[%s1008 + $0x1c] sm:$0xf]
        %v1025 = vunpack.c.l.b16 %v1009
        %v1026 = vunpack.c.l.b16 %v1010
        %v1027 = vunpack.c.l.b16 %v1011
        %v1028 = vunpack.c.l.b16 %v1012
        %v1029 = vunpack.c.l.b16 %v1013
        %v1030 = vunpack.c.l.b16 %v1014
        %v1031 = vunpack.c.l.b16 %v1015
        %v1032 = vunpack.c.l.b16 %v1016
        %v1033 = vpack.c.b16 %v1026, %v1025
        %v1034 = vpack.c.b16 %v1028, %v1027
        %v1035 = vpack.c.b16 %v1030, %v1029
        %v1036 = vpack.c.b16 %v1032, %v1031
        %v1042 = vsel %vm728, %v1007, 0
        %1044 = vmatprep.subr.bf16.mxu0 0
        %1045 = vmatpush1.bf16.msra.mxu0 %v1033
        %1046 = vmatprep.subr.bf16.mxu0 0
        %1047 = vmatpush1.bf16.msra.mxu0 %v1034
        %1048 = vmatprep.subr.bf16.mxu0 0
        %1049 = vmatpush1.bf16.msra.mxu0 %v1035
        %1050 = vmatprep.subr.bf16.mxu0 0
        %1051 = vmatpush1.bf16.msra.mxu0 %v1036
        %1052 = vmatprep.subr.bf16.mxu0 0
        %1053 = vmatpush1.bf16.msra.mxu0 0
        %1054 = vmatprep.subr.bf16.mxu0 0
        %1055 = vmatpush1.bf16.msra.mxu0 0
        %1056 = vmatprep.subr.bf16.mxu0 0
        %1057 = vmatpush1.bf16.msra.mxu0 0
        %1058 = vmatprep.subr.bf16.mxu0 0
        %1059 = vmatpush1.bf16.msra.mxu0 0
        %1060 = vmatprep.subr.bf16.mxu0 0
        %1061 = vmatpush1.bf16.msra.mxu0 0
        %1062 = vmatprep.subr.bf16.mxu0 0
        %1063 = vmatpush1.bf16.msra.mxu0 0
        %1064 = vmatprep.subr.bf16.mxu0 0
        %1065 = vmatpush1.bf16.msra.mxu0 0
        %1066 = vmatprep.subr.bf16.mxu0 0
        %1067 = vmatpush1.bf16.msra.mxu0 0
        %1068 = vmatprep.subr.bf16.mxu0 0
        %1069 = vmatpush1.bf16.msra.mxu0 0
        %1070 = vmatprep.subr.bf16.mxu0 0
        %1071 = vmatpush1.bf16.msra.mxu0 0
        %1072 = vmatprep.subr.bf16.mxu0 0
        %1073 = vmatpush1.bf16.msra.mxu0 0
        %1074 = vmatprep.subr.bf16.mxu0 0
        %1075 = vmatpush1.bf16.msra.mxu0 0
        %1076 = vmatprep.mubr.bf16.mxu0 0
        %1077 = vmatmul.mubr.bf16.gmra.mrb[0].mxu0 %v1042
        %v1078 = vpop.f32.mrb[0].mxu0
        %v1079 = vadd.f32 0.0, %v1078
        %v1080 = vpop.f32.mrb[0].mxu0
        %v1081 = vpop.f32.mrb[0].mxu0
        %v1082 = vpop.f32.mrb[0].mxu0
        %1083 = vdwg.mxu0
        %v1084 = vadd.f32 %v961, %v1079
        %v1085 = vld [vmem:[%s3] sm:$0x1]
        %v1087 = vlaneseq
        %v1088 = vshrl.u32 %v1087, 7
        %v1089 = vsub.s32 0, %v1088
        %v1090 = vrot.slane %v1085, %v1089
        %v1092 = vadd.f32 %v1084, %v1090
        %vm1093 = vcmp.ge.f32.partialorder %v1092, 0.0
        %v1094 = vmul.f32 %v1092, 0.2
        %v1095 = vsel %vm1093, %v1092, %v1094
        %v1096 = vpack.c.bf16 %v1095, %v1095
        %v1097 = vld [vmem:[#allocation2] sm:$0x3]
        %vm1098 = vcmask 64512
        %v1100 = vsel %vm1098, %v1097, 0
        %vm1102 = vcmask 1043456
        %v1104 = vsel %vm1102, %v1096, 0
        %1106 = vmatprep.subr.bf16.mxu0 0
        %1107 = vmatpush1.bf16.msra.mxu0 %v1104
        %1108 = vmatprep.subr.bf16.mxu0 0
        %1109 = vmatpush1.bf16.msra.mxu0 0
        %1110 = vmatprep.subr.bf16.mxu0 0
        %1111 = vmatpush1.bf16.msra.mxu0 0
        %1112 = vmatprep.subr.bf16.mxu0 0
        %1113 = vmatpush1.bf16.msra.mxu0 0
        %1114 = vmatprep.subr.bf16.mxu0 0
        %1115 = vmatpush1.bf16.msra.mxu0 0
        %1116 = vmatprep.subr.bf16.mxu0 0
        %1117 = vmatpush1.bf16.msra.mxu0 0
        %1118 = vmatprep.subr.bf16.mxu0 0
        %1119 = vmatpush1.bf16.msra.mxu0 0
        %1120 = vmatprep.subr.bf16.mxu0 0
        %1121 = vmatpush1.bf16.msra.mxu0 0
        %1122 = vmatprep.subr.bf16.mxu0 0
        %1123 = vmatpush1.bf16.msra.mxu0 0
        %1124 = vmatprep.subr.bf16.mxu0 0
        %1125 = vmatpush1.bf16.msra.mxu0 0
        %1126 = vmatprep.subr.bf16.mxu0 0
        %1127 = vmatpush1.bf16.msra.mxu0 0
        %1128 = vmatprep.subr.bf16.mxu0 0
        %1129 = vmatpush1.bf16.msra.mxu0 0
        %1130 = vmatprep.subr.bf16.mxu0 0
        %1131 = vmatpush1.bf16.msra.mxu0 0
        %1132 = vmatprep.subr.bf16.mxu0 0
        %1133 = vmatpush1.bf16.msra.mxu0 0
        %1134 = vmatprep.subr.bf16.mxu0 0
        %1135 = vmatpush1.bf16.msra.mxu0 0
        %1136 = vmatprep.subr.bf16.mxu0 0
        %1137 = vmatpush1.bf16.msra.mxu0 0
        %1138 = vmatprep.mubr.bf16.mxu0 0
        %1139 = vmatmul.mubr.bf16.gmra.mrb[0].mxu0 %v1100
        %v1140 = vpop.f32.mrb[0].mxu0
        %v1141 = vadd.f32 0.0, %v1140
        %v1142 = vpop.f32.mrb[0].mxu0
        %v1143 = vpop.f32.mrb[0].mxu0
        %v1144 = vpop.f32.mrb[0].mxu0
        %1145 = vdwg.mxu0
        %v1146 = vpack.c.bf16 %v1141, %v1141
        %v1147 = vld [vmem:[%s5] sm:$0xf]
        %v1148 = vld [vmem:[%s5 + $0x4] sm:$0xf]
        %v1149 = vld [vmem:[%s5 + $0x8] sm:$0xf]
        %v1150 = vld [vmem:[%s5 + $0xc] sm:$0xf]
        %v1151 = vld [vmem:[%s5 + $0x10] sm:$0xf]
        %v1152 = vld [vmem:[%s5 + $0x14] sm:$0xf]
        %v1153 = vld [vmem:[%s5 + $0x18] sm:$0xf]
        %v1154 = vld [vmem:[%s5 + $0x1c] sm:$0xf]
        %s1155 = scalar_lea.vmem [#allocation2], 2
        %v1156 = vld [vmem:[%s1155] sm:$0x3]
        %v1158 = vsel %vm1098, %v1156, 0
        %1160 = vmatprep.subr.bf16.mxu0 0
        %1161 = vmatpush1.bf16.msra.mxu0 %v1104
        %1162 = vmatprep.subr.bf16.mxu0 0
        %1163 = vmatpush1.bf16.msra.mxu0 0
        %1164 = vmatprep.subr.bf16.mxu0 0
        %1165 = vmatpush1.bf16.msra.mxu0 0
        %1166 = vmatprep.subr.bf16.mxu0 0
        %1167 = vmatpush1.bf16.msra.mxu0 0
        %1168 = vmatprep.subr.bf16.mxu0 0
        %1169 = vmatpush1.bf16.msra.mxu0 0
        %1170 = vmatprep.subr.bf16.mxu0 0
        %1171 = vmatpush1.bf16.msra.mxu0 0
        %1172 = vmatprep.subr.bf16.mxu0 0
        %1173 = vmatpush1.bf16.msra.mxu0 0
        %1174 = vmatprep.subr.bf16.mxu0 0
        %1175 = vmatpush1.bf16.msra.mxu0 0
        %1176 = vmatprep.subr.bf16.mxu0 0
        %1177 = vmatpush1.bf16.msra.mxu0 0
        %1178 = vmatprep.subr.bf16.mxu0 0
        %1179 = vmatpush1.bf16.msra.mxu0 0
        %1180 = vmatprep.subr.bf16.mxu0 0
        %1181 = vmatpush1.bf16.msra.mxu0 0
        %1182 = vmatprep.subr.bf16.mxu0 0
        %1183 = vmatpush1.bf16.msra.mxu0 0
        %1184 = vmatprep.subr.bf16.mxu0 0
        %1185 = vmatpush1.bf16.msra.mxu0 0
        %1186 = vmatprep.subr.bf16.mxu0 0
        %1187 = vmatpush1.bf16.msra.mxu0 0
        %1188 = vmatprep.subr.bf16.mxu0 0
        %1189 = vmatpush1.bf16.msra.mxu0 0
        %1190 = vmatprep.subr.bf16.mxu0 0
        %1191 = vmatpush1.bf16.msra.mxu0 0
        %1192 = vmatprep.mubr.bf16.mxu0 0
        %1193 = vmatmul.mubr.bf16.gmra.mrb[0].mxu0 %v1158
        %v1194 = vpop.f32.mrb[0].mxu0
        %v1195 = vadd.f32 0.0, %v1194
        %v1196 = vpop.f32.mrb[0].mxu0
        %v1197 = vpop.f32.mrb[0].mxu0
        %v1198 = vpop.f32.mrb[0].mxu0
        %1199 = vdwg.mxu0
        %v1200 = vpack.c.bf16 %v1195, %v1195
        %s1201 = scalar_lea.vmem %s5, 32
        %v1202 = vld [vmem:[%s1201] sm:$0xf]
        %v1203 = vld [vmem:[%s1201 + $0x4] sm:$0xf]
        %v1204 = vld [vmem:[%s1201 + $0x8] sm:$0xf]
        %v1205 = vld [vmem:[%s1201 + $0xc] sm:$0xf]
        %v1206 = vld [vmem:[%s1201 + $0x10] sm:$0xf]
        %v1207 = vld [vmem:[%s1201 + $0x14] sm:$0xf]
        %v1208 = vld [vmem:[%s1201 + $0x18] sm:$0xf]
        %v1209 = vld [vmem:[%s1201 + $0x1c] sm:$0xf]
        %v1218 = vunpack.c.l.b16 %v1202
        %v1219 = vunpack.c.l.b16 %v1203
        %v1220 = vunpack.c.l.b16 %v1204
        %v1221 = vunpack.c.l.b16 %v1205
        %v1222 = vunpack.c.l.b16 %v1206
        %v1223 = vunpack.c.l.b16 %v1207
        %v1224 = vunpack.c.l.b16 %v1208
        %v1225 = vunpack.c.l.b16 %v1209
        %v1226 = vpack.c.b16 %v1219, %v1218
        %v1227 = vpack.c.b16 %v1221, %v1220
        %v1228 = vpack.c.b16 %v1223, %v1222
        %v1229 = vpack.c.b16 %v1225, %v1224
        %v1235 = vsel %vm728, %v1200, 0
        %1237 = vmatprep.subr.bf16.mxu0 0
        %1238 = vmatpush1.bf16.msra.mxu0 %v1226
        %1239 = vmatprep.subr.bf16.mxu0 0
        %1240 = vmatpush1.bf16.msra.mxu0 %v1227
        %1241 = vmatprep.subr.bf16.mxu0 0
        %1242 = vmatpush1.bf16.msra.mxu0 %v1228
        %1243 = vmatprep.subr.bf16.mxu0 0
        %1244 = vmatpush1.bf16.msra.mxu0 %v1229
        %1245 = vmatprep.subr.bf16.mxu0 0
        %1246 = vmatpush1.bf16.msra.mxu0 0
        %1247 = vmatprep.subr.bf16.mxu0 0
        %1248 = vmatpush1.bf16.msra.mxu0 0
        %1249 = vmatprep.subr.bf16.mxu0 0
        %1250 = vmatpush1.bf16.msra.mxu0 0
        %1251 = vmatprep.subr.bf16.mxu0 0
        %1252 = vmatpush1.bf16.msra.mxu0 0
        %1253 = vmatprep.subr.bf16.mxu0 0
        %1254 = vmatpush1.bf16.msra.mxu0 0
        %1255 = vmatprep.subr.bf16.mxu0 0
        %1256 = vmatpush1.bf16.msra.mxu0 0
        %1257 = vmatprep.subr.bf16.mxu0 0
        %1258 = vmatpush1.bf16.msra.mxu0 0
        %1259 = vmatprep.subr.bf16.mxu0 0
        %1260 = vmatpush1.bf16.msra.mxu0 0
        %1261 = vmatprep.subr.bf16.mxu0 0
        %1262 = vmatpush1.bf16.msra.mxu0 0
        %1263 = vmatprep.subr.bf16.mxu0 0
        %1264 = vmatpush1.bf16.msra.mxu0 0
        %1265 = vmatprep.subr.bf16.mxu0 0
        %1266 = vmatpush1.bf16.msra.mxu0 0
        %1267 = vmatprep.subr.bf16.mxu0 0
        %1268 = vmatpush1.bf16.msra.mxu0 0
        %1269 = vmatprep.mubr.bf16.mxu0 0
        %1270 = vmatmul.mubr.bf16.gmra.mrb[0].mxu0 %v1235
        %v1271 = vpop.f32.mrb[0].mxu0
        %v1272 = vadd.f32 0.0, %v1271
        %v1273 = vpop.f32.mrb[0].mxu0
        %v1274 = vpop.f32.mrb[0].mxu0
        %v1275 = vpop.f32.mrb[0].mxu0
        %1276 = vdwg.mxu0
        %v1285 = vunpack.c.l.b16 %v1147
        %v1286 = vunpack.c.l.b16 %v1148
        %v1287 = vunpack.c.l.b16 %v1149
        %v1288 = vunpack.c.l.b16 %v1150
        %v1289 = vunpack.c.l.b16 %v1151
        %v1290 = vunpack.c.l.b16 %v1152
        %v1291 = vunpack.c.l.b16 %v1153
        %v1292 = vunpack.c.l.b16 %v1154
        %v1293 = vpack.c.b16 %v1286, %v1285
        %v1294 = vpack.c.b16 %v1288, %v1287
        %v1295 = vpack.c.b16 %v1290, %v1289
        %v1296 = vpack.c.b16 %v1292, %v1291
        %v1302 = vsel %vm728, %v1146, 0
        %1304 = vmatprep.subr.bf16.mxu0 0
        %1305 = vmatpush1.bf16.msra.mxu0 %v1293
        %1306 = vmatprep.subr.bf16.mxu0 0
        %1307 = vmatpush1.bf16.msra.mxu0 %v1294
        %1308 = vmatprep.subr.bf16.mxu0 0
        %1309 = vmatpush1.bf16.msra.mxu0 %v1295
        %1310 = vmatprep.subr.bf16.mxu0 0
        %1311 = vmatpush1.bf16.msra.mxu0 %v1296
        %1312 = vmatprep.subr.bf16.mxu0 0
        %1313 = vmatpush1.bf16.msra.mxu0 0
        %1314 = vmatprep.subr.bf16.mxu0 0
        %1315 = vmatpush1.bf16.msra.mxu0 0
        %1316 = vmatprep.subr.bf16.mxu0 0
        %1317 = vmatpush1.bf16.msra.mxu0 0
        %1318 = vmatprep.subr.bf16.mxu0 0
        %1319 = vmatpush1.bf16.msra.mxu0 0
        %1320 = vmatprep.subr.bf16.mxu0 0
        %1321 = vmatpush1.bf16.msra.mxu0 0
        %1322 = vmatprep.subr.bf16.mxu0 0
        %1323 = vmatpush1.bf16.msra.mxu0 0
        %1324 = vmatprep.subr.bf16.mxu0 0
        %1325 = vmatpush1.bf16.msra.mxu0 0
        %1326 = vmatprep.subr.bf16.mxu0 0
        %1327 = vmatpush1.bf16.msra.mxu0 0
        %1328 = vmatprep.subr.bf16.mxu0 0
        %1329 = vmatpush1.bf16.msra.mxu0 0
        %1330 = vmatprep.subr.bf16.mxu0 0
        %1331 = vmatpush1.bf16.msra.mxu0 0
        %1332 = vmatprep.subr.bf16.mxu0 0
        %1333 = vmatpush1.bf16.msra.mxu0 0
        %1334 = vmatprep.subr.bf16.mxu0 0
        %1335 = vmatpush1.bf16.msra.mxu0 0
        %1336 = vmatprep.mubr.bf16.mxu0 0
        %1337 = vmatmul.mubr.bf16.gmra.mrb[0].mxu0 %v1302
        %v1338 = vpop.f32.mrb[0].mxu0
        %v1339 = vadd.f32 %v1272, %v1338
        %v1340 = vpop.f32.mrb[0].mxu0
        %v1341 = vpop.f32.mrb[0].mxu0
        %v1342 = vpop.f32.mrb[0].mxu0
        %1343 = vdwg.mxu0
        %s1344 = scalar_lea.vmem [#allocation2], 4
        %v1345 = vld [vmem:[%s1344] sm:$0x3]
        %v1347 = vsel %vm1098, %v1345, 0
        %1349 = vmatprep.subr.bf16.mxu0 0
        %1350 = vmatpush1.bf16.msra.mxu0 %v1104
        %1351 = vmatprep.subr.bf16.mxu0 0
        %1352 = vmatpush1.bf16.msra.mxu0 0
        %1353 = vmatprep.subr.bf16.mxu0 0
        %1354 = vmatpush1.bf16.msra.mxu0 0
        %1355 = vmatprep.subr.bf16.mxu0 0
        %1356 = vmatpush1.bf16.msra.mxu0 0
        %1357 = vmatprep.subr.bf16.mxu0 0
        %1358 = vmatpush1.bf16.msra.mxu0 0
        %1359 = vmatprep.subr.bf16.mxu0 0
        %1360 = vmatpush1.bf16.msra.mxu0 0
        %1361 = vmatprep.subr.bf16.mxu0 0
        %1362 = vmatpush1.bf16.msra.mxu0 0
        %1363 = vmatprep.subr.bf16.mxu0 0
        %1364 = vmatpush1.bf16.msra.mxu0 0
        %1365 = vmatprep.subr.bf16.mxu0 0
        %1366 = vmatpush1.bf16.msra.mxu0 0
        %1367 = vmatprep.subr.bf16.mxu0 0
        %1368 = vmatpush1.bf16.msra.mxu0 0
        %1369 = vmatprep.subr.bf16.mxu0 0
        %1370 = vmatpush1.bf16.msra.mxu0 0
        %1371 = vmatprep.subr.bf16.mxu0 0
        %1372 = vmatpush1.bf16.msra.mxu0 0
        %1373 = vmatprep.subr.bf16.mxu0 0
        %1374 = vmatpush1.bf16.msra.mxu0 0
        %1375 = vmatprep.subr.bf16.mxu0 0
        %1376 = vmatpush1.bf16.msra.mxu0 0
        %1377 = vmatprep.subr.bf16.mxu0 0
        %1378 = vmatpush1.bf16.msra.mxu0 0
        %1379 = vmatprep.subr.bf16.mxu0 0
        %1380 = vmatpush1.bf16.msra.mxu0 0
        %1381 = vmatprep.mubr.bf16.mxu0 0
        %1382 = vmatmul.mubr.bf16.gmra.mrb[0].mxu0 %v1347
        %v1383 = vpop.f32.mrb[0].mxu0
        %v1384 = vadd.f32 0.0, %v1383
        %v1385 = vpop.f32.mrb[0].mxu0
        %v1386 = vpop.f32.mrb[0].mxu0
        %v1387 = vpop.f32.mrb[0].mxu0
        %1388 = vdwg.mxu0
        %v1389 = vpack.c.bf16 %v1384, %v1384
        %s1390 = scalar_lea.vmem %s5, 64
        %v1391 = vld [vmem:[%s1390] sm:$0xf]
        %v1392 = vld [vmem:[%s1390 + $0x4] sm:$0xf]
        %v1393 = vld [vmem:[%s1390 + $0x8] sm:$0xf]
        %v1394 = vld [vmem:[%s1390 + $0xc] sm:$0xf]
        %v1395 = vld [vmem:[%s1390 + $0x10] sm:$0xf]
        %v1396 = vld [vmem:[%s1390 + $0x14] sm:$0xf]
        %v1397 = vld [vmem:[%s1390 + $0x18] sm:$0xf]
        %v1398 = vld [vmem:[%s1390 + $0x1c] sm:$0xf]
        %v1407 = vunpack.c.l.b16 %v1391
        %v1408 = vunpack.c.l.b16 %v1392
        %v1409 = vunpack.c.l.b16 %v1393
        %v1410 = vunpack.c.l.b16 %v1394
        %v1411 = vunpack.c.l.b16 %v1395
        %v1412 = vunpack.c.l.b16 %v1396
        %v1413 = vunpack.c.l.b16 %v1397
        %v1414 = vunpack.c.l.b16 %v1398
        %v1415 = vpack.c.b16 %v1408, %v1407
        %v1416 = vpack.c.b16 %v1410, %v1409
        %v1417 = vpack.c.b16 %v1412, %v1411
        %v1418 = vpack.c.b16 %v1414, %v1413
        %v1424 = vsel %vm728, %v1389, 0
        %1426 = vmatprep.subr.bf16.mxu0 0
        %1427 = vmatpush1.bf16.msra.mxu0 %v1415
        %1428 = vmatprep.subr.bf16.mxu0 0
        %1429 = vmatpush1.bf16.msra.mxu0 %v1416
        %1430 = vmatprep.subr.bf16.mxu0 0
        %1431 = vmatpush1.bf16.msra.mxu0 %v1417
        %1432 = vmatprep.subr.bf16.mxu0 0
        %1433 = vmatpush1.bf16.msra.mxu0 %v1418
        %1434 = vmatprep.subr.bf16.mxu0 0
        %1435 = vmatpush1.bf16.msra.mxu0 0
        %1436 = vmatprep.subr.bf16.mxu0 0
        %1437 = vmatpush1.bf16.msra.mxu0 0
        %1438 = vmatprep.subr.bf16.mxu0 0
        %1439 = vmatpush1.bf16.msra.mxu0 0
        %1440 = vmatprep.subr.bf16.mxu0 0
        %1441 = vmatpush1.bf16.msra.mxu0 0
        %1442 = vmatprep.subr.bf16.mxu0 0
        %1443 = vmatpush1.bf16.msra.mxu0 0
        %1444 = vmatprep.subr.bf16.mxu0 0
        %1445 = vmatpush1.bf16.msra.mxu0 0
        %1446 = vmatprep.subr.bf16.mxu0 0
        %1447 = vmatpush1.bf16.msra.mxu0 0
        %1448 = vmatprep.subr.bf16.mxu0 0
        %1449 = vmatpush1.bf16.msra.mxu0 0
        %1450 = vmatprep.subr.bf16.mxu0 0
        %1451 = vmatpush1.bf16.msra.mxu0 0
        %1452 = vmatprep.subr.bf16.mxu0 0
        %1453 = vmatpush1.bf16.msra.mxu0 0
        %1454 = vmatprep.subr.bf16.mxu0 0
        %1455 = vmatpush1.bf16.msra.mxu0 0
        %1456 = vmatprep.subr.bf16.mxu0 0
        %1457 = vmatpush1.bf16.msra.mxu0 0
        %1458 = vmatprep.mubr.bf16.mxu0 0
        %1459 = vmatmul.mubr.bf16.gmra.mrb[0].mxu0 %v1424
        %v1460 = vpop.f32.mrb[0].mxu0
        %v1461 = vadd.f32 0.0, %v1460
        %v1462 = vpop.f32.mrb[0].mxu0
        %v1463 = vpop.f32.mrb[0].mxu0
        %v1464 = vpop.f32.mrb[0].mxu0
        %1465 = vdwg.mxu0
        %v1466 = vadd.f32 %v1339, %v1461
        %s1467 = scalar_lea.vmem [#allocation2], 6
        %v1468 = vld [vmem:[%s1467] sm:$0x3]
        %v1470 = vsel %vm1098, %v1468, 0
        %1472 = vmatprep.subr.bf16.mxu0 0
        %1473 = vmatpush1.bf16.msra.mxu0 %v1104
        %1474 = vmatprep.subr.bf16.mxu0 0
        %1475 = vmatpush1.bf16.msra.mxu0 0
        %1476 = vmatprep.subr.bf16.mxu0 0
        %1477 = vmatpush1.bf16.msra.mxu0 0
        %1478 = vmatprep.subr.bf16.mxu0 0
        %1479 = vmatpush1.bf16.msra.mxu0 0
        %1480 = vmatprep.subr.bf16.mxu0 0
        %1481 = vmatpush1.bf16.msra.mxu0 0
        %1482 = vmatprep.subr.bf16.mxu0 0
        %1483 = vmatpush1.bf16.msra.mxu0 0
        %1484 = vmatprep.subr.bf16.mxu0 0
        %1485 = vmatpush1.bf16.msra.mxu0 0
        %1486 = vmatprep.subr.bf16.mxu0 0
        %1487 = vmatpush1.bf16.msra.mxu0 0
        %1488 = vmatprep.subr.bf16.mxu0 0
        %1489 = vmatpush1.bf16.msra.mxu0 0
        %1490 = vmatprep.subr.bf16.mxu0 0
        %1491 = vmatpush1.bf16.msra.mxu0 0
        %1492 = vmatprep.subr.bf16.mxu0 0
        %1493 = vmatpush1.bf16.msra.mxu0 0
        %1494 = vmatprep.subr.bf16.mxu0 0
        %1495 = vmatpush1.bf16.msra.mxu0 0
        %1496 = vmatprep.subr.bf16.mxu0 0
        %1497 = vmatpush1.bf16.msra.mxu0 0
        %1498 = vmatprep.subr.bf16.mxu0 0
        %1499 = vmatpush1.bf16.msra.mxu0 0
        %1500 = vmatprep.subr.bf16.mxu0 0
        %1501 = vmatpush1.bf16.msra.mxu0 0
        %1502 = vmatprep.subr.bf16.mxu0 0
        %1503 = vmatpush1.bf16.msra.mxu0 0
        %1504 = vmatprep.mubr.bf16.mxu0 0
        %1505 = vmatmul.mubr.bf16.gmra.mrb[0].mxu0 %v1470
        %v1506 = vpop.f32.mrb[0].mxu0
        %v1507 = vadd.f32 0.0, %v1506
        %v1508 = vpop.f32.mrb[0].mxu0
        %v1509 = vpop.f32.mrb[0].mxu0
        %v1510 = vpop.f32.mrb[0].mxu0
        %1511 = vdwg.mxu0
        %v1512 = vpack.c.bf16 %v1507, %v1507
        %s1513 = scalar_lea.vmem %s5, 96
        %v1514 = vld [vmem:[%s1513] sm:$0xf]
        %v1515 = vld [vmem:[%s1513 + $0x4] sm:$0xf]
        %v1516 = vld [vmem:[%s1513 + $0x8] sm:$0xf]
        %v1517 = vld [vmem:[%s1513 + $0xc] sm:$0xf]
        %v1518 = vld [vmem:[%s1513 + $0x10] sm:$0xf]
        %v1519 = vld [vmem:[%s1513 + $0x14] sm:$0xf]
        %v1520 = vld [vmem:[%s1513 + $0x18] sm:$0xf]
        %v1521 = vld [vmem:[%s1513 + $0x1c] sm:$0xf]
        %v1530 = vunpack.c.l.b16 %v1514
        %v1531 = vunpack.c.l.b16 %v1515
        %v1532 = vunpack.c.l.b16 %v1516
        %v1533 = vunpack.c.l.b16 %v1517
        %v1534 = vunpack.c.l.b16 %v1518
        %v1535 = vunpack.c.l.b16 %v1519
        %v1536 = vunpack.c.l.b16 %v1520
        %v1537 = vunpack.c.l.b16 %v1521
        %v1538 = vpack.c.b16 %v1531, %v1530
        %v1539 = vpack.c.b16 %v1533, %v1532
        %v1540 = vpack.c.b16 %v1535, %v1534
        %v1541 = vpack.c.b16 %v1537, %v1536
        %v1547 = vsel %vm728, %v1512, 0
        %1549 = vmatprep.subr.bf16.mxu0 0
        %1550 = vmatpush1.bf16.msra.mxu0 %v1538
        %1551 = vmatprep.subr.bf16.mxu0 0
        %1552 = vmatpush1.bf16.msra.mxu0 %v1539
        %1553 = vmatprep.subr.bf16.mxu0 0
        %1554 = vmatpush1.bf16.msra.mxu0 %v1540
        %1555 = vmatprep.subr.bf16.mxu0 0
        %1556 = vmatpush1.bf16.msra.mxu0 %v1541
        %1557 = vmatprep.subr.bf16.mxu0 0
        %1558 = vmatpush1.bf16.msra.mxu0 0
        %1559 = vmatprep.subr.bf16.mxu0 0
        %1560 = vmatpush1.bf16.msra.mxu0 0
        %1561 = vmatprep.subr.bf16.mxu0 0
        %1562 = vmatpush1.bf16.msra.mxu0 0
        %1563 = vmatprep.subr.bf16.mxu0 0
        %1564 = vmatpush1.bf16.msra.mxu0 0
        %1565 = vmatprep.subr.bf16.mxu0 0
        %1566 = vmatpush1.bf16.msra.mxu0 0
        %1567 = vmatprep.subr.bf16.mxu0 0
        %1568 = vmatpush1.bf16.msra.mxu0 0
        %1569 = vmatprep.subr.bf16.mxu0 0
        %1570 = vmatpush1.bf16.msra.mxu0 0
        %1571 = vmatprep.subr.bf16.mxu0 0
        %1572 = vmatpush1.bf16.msra.mxu0 0
        %1573 = vmatprep.subr.bf16.mxu0 0
        %1574 = vmatpush1.bf16.msra.mxu0 0
        %1575 = vmatprep.subr.bf16.mxu0 0
        %1576 = vmatpush1.bf16.msra.mxu0 0
        %1577 = vmatprep.subr.bf16.mxu0 0
        %1578 = vmatpush1.bf16.msra.mxu0 0
        %1579 = vmatprep.subr.bf16.mxu0 0
        %1580 = vmatpush1.bf16.msra.mxu0 0
        %1581 = vmatprep.mubr.bf16.mxu0 0
        %1582 = vmatmul.mubr.bf16.gmra.mrb[0].mxu0 %v1547
        %v1583 = vpop.f32.mrb[0].mxu0
        %v1584 = vadd.f32 0.0, %v1583
        %v1585 = vpop.f32.mrb[0].mxu0
        %v1586 = vpop.f32.mrb[0].mxu0
        %v1587 = vpop.f32.mrb[0].mxu0
        %1588 = vdwg.mxu0
        %v1589 = vadd.f32 %v1466, %v1584
        %v1590 = vld [vmem:[#allocation5] sm:$0x1]
        %v1592 = vlaneseq
        %v1593 = vshrl.u32 %v1592, 7
        %v1594 = vsub.s32 0, %v1593
        %v1595 = vrot.slane %v1590, %v1594
        %v1597 = vadd.f32 %v1589, %v1595
        %vm1598 = vcmask 519168
        %v1599 = vsel %vm1598, %v1597, 0.0
        %v1600 = vrot.slane %v1599, 4
        %v1601 = vadd.f32 %v1599, %v1600
        %v1602 = vrot.slane %v1601, 2
        %v1603 = vadd.f32 %v1601, %v1602
        %v1604 = vrot.slane %v1603, 1
        %v1605 = vadd.f32 %v1603, %v1604
        %v1606 = vld [vmem:[#allocation7] sm:$0xff]
        %v1607 = vld [vmem:[#allocation7 + $0x8] sm:$0xff]
        %v1608 = vld [vmem:[#allocation7 + $0x10] sm:$0xff]
        %v1609 = vld [vmem:[#allocation7 + $0x18] sm:$0xff]
        %v1610 = vld [vmem:[#allocation7 + $0x20] sm:$0xff]
        %v1611 = vld [vmem:[#allocation7 + $0x28] sm:$0xff]
        %v1612 = vld [vmem:[#allocation7 + $0x30] sm:$0xff]
        %v1613 = vld [vmem:[#allocation7 + $0x38] sm:$0xff]
        %v1615 = vsel %vm728, %v1605, 0
        %1617 = vmatprep.subr.mxu0 0.0
        %1618 = vmatpush1.msra.mxu0 %v1606
        %1619 = vmatprep.subr.mxu0 0.0
        %1620 = vmatpush1.msra.mxu0 %v1607
        %1621 = vmatprep.subr.mxu0 0.0
        %1622 = vmatpush1.msra.mxu0 %v1608
        %1623 = vmatprep.subr.mxu0 0.0
        %1624 = vmatpush1.msra.mxu0 %v1609
        %1625 = vmatprep.subr.mxu0 0.0
        %1626 = vmatpush1.msra.mxu0 %v1610
        %1627 = vmatprep.subr.mxu0 0.0
        %1628 = vmatpush1.msra.mxu0 %v1611
        %1629 = vmatprep.subr.mxu0 0.0
        %1630 = vmatpush1.msra.mxu0 %v1612
        %1631 = vmatprep.subr.mxu0 0.0
        %1632 = vmatpush1.msra.mxu0 %v1613
        %1633 = vmatprep.subr.mxu0 0.0
        %1634 = vmatpush1.msra.mxu0 0.0
        %1635 = vmatprep.subr.mxu0 0.0
        %1636 = vmatpush1.msra.mxu0 0.0
        %1637 = vmatprep.subr.mxu0 0.0
        %1638 = vmatpush1.msra.mxu0 0.0
        %1639 = vmatprep.subr.mxu0 0.0
        %1640 = vmatpush1.msra.mxu0 0.0
        %1641 = vmatprep.subr.mxu0 0.0
        %1642 = vmatpush1.msra.mxu0 0.0
        %1643 = vmatprep.subr.mxu0 0.0
        %1644 = vmatpush1.msra.mxu0 0.0
        %1645 = vmatprep.subr.mxu0 0.0
        %1646 = vmatpush1.msra.mxu0 0.0
        %1647 = vmatprep.subr.mxu0 0.0
        %1648 = vmatpush1.msra.mxu0 0.0
        %1649 = vmatprep.subr.mxu0 0.0
        %1650 = vmatpush1.msra.mxu0 0.0
        %1651 = vmatprep.subr.mxu0 0.0
        %1652 = vmatpush1.msra.mxu0 0.0
        %1653 = vmatprep.subr.mxu0 0.0
        %1654 = vmatpush1.msra.mxu0 0.0
        %1655 = vmatprep.subr.mxu0 0.0
        %1656 = vmatpush1.msra.mxu0 0.0
        %1657 = vmatprep.subr.mxu0 0.0
        %1658 = vmatpush1.msra.mxu0 0.0
        %1659 = vmatprep.subr.mxu0 0.0
        %1660 = vmatpush1.msra.mxu0 0.0
        %1661 = vmatprep.subr.mxu0 0.0
        %1662 = vmatpush1.msra.mxu0 0.0
        %1663 = vmatprep.subr.mxu0 0.0
        %1664 = vmatpush1.msra.mxu0 0.0
        %1665 = vmatprep.subr.mxu0 0.0
        %1666 = vmatpush1.msra.mxu0 0.0
        %1667 = vmatprep.subr.mxu0 0.0
        %1668 = vmatpush1.msra.mxu0 0.0
        %1669 = vmatprep.subr.mxu0 0.0
        %1670 = vmatpush1.msra.mxu0 0.0
        %1671 = vmatprep.subr.mxu0 0.0
        %1672 = vmatpush1.msra.mxu0 0.0
        %1673 = vmatprep.subr.mxu0 0.0
        %1674 = vmatpush1.msra.mxu0 0.0
        %1675 = vmatprep.subr.mxu0 0.0
        %1676 = vmatpush1.msra.mxu0 0.0
        %1677 = vmatprep.subr.mxu0 0.0
        %1678 = vmatpush1.msra.mxu0 0.0
        %1679 = vmatprep.subr.mxu0 0.0
        %1680 = vmatpush1.msra.mxu0 0.0
        %1681 = vmatprep.mubr.f32.mxu0 0.0
        %1682 = vmatmul.mubr.f32.gmra.mrb[0].mxu0 %v1615
        %v1683 = vpop.f32.mrb[0].mxu0
        %v1684 = vadd.f32 0.0, %v1683
        %v1685 = vpop.f32.mrb[0].mxu0
        %1686 = vdwg.mxu0
        %v1687 = vlaneseq
        %v1688 = vshrl.u32 %v1687, 7
        %v1689 = vsub.s32 0, %v1688
        %v1690 = vrot.slane %v1684, %v1689
        %v1691 = vsub.f32 %v1597, %v1690
        %v1692 = vmul.f32 %v1691, %v1691
        %v1693 = vsel %vm1598, %v1692, 0.0
        %v1694 = vrot.slane %v1693, 4
        %v1695 = vadd.f32 %v1693, %v1694
        %v1696 = vrot.slane %v1695, 2
        %v1697 = vadd.f32 %v1695, %v1696
        %v1698 = vrot.slane %v1697, 1
        %v1699 = vadd.f32 %v1697, %v1698
        %v1701 = vsel %vm728, %v1699, 0
        %1703 = vmatprep.subr.mxu0 0.0
        %1704 = vmatpush1.msra.mxu0 %v1606
        %1705 = vmatprep.subr.mxu0 0.0
        %1706 = vmatpush1.msra.mxu0 %v1607
        %1707 = vmatprep.subr.mxu0 0.0
        %1708 = vmatpush1.msra.mxu0 %v1608
        %1709 = vmatprep.subr.mxu0 0.0
        %1710 = vmatpush1.msra.mxu0 %v1609
        %1711 = vmatprep.subr.mxu0 0.0
        %1712 = vmatpush1.msra.mxu0 %v1610
        %1713 = vmatprep.subr.mxu0 0.0
        %1714 = vmatpush1.msra.mxu0 %v1611
        %1715 = vmatprep.subr.mxu0 0.0
        %1716 = vmatpush1.msra.mxu0 %v1612
        %1717 = vmatprep.subr.mxu0 0.0
        %1718 = vmatpush1.msra.mxu0 %v1613
        %1719 = vmatprep.subr.mxu0 0.0
        %1720 = vmatpush1.msra.mxu0 0.0
        %1721 = vmatprep.subr.mxu0 0.0
        %1722 = vmatpush1.msra.mxu0 0.0
        %1723 = vmatprep.subr.mxu0 0.0
        %1724 = vmatpush1.msra.mxu0 0.0
        %1725 = vmatprep.subr.mxu0 0.0
        %1726 = vmatpush1.msra.mxu0 0.0
        %1727 = vmatprep.subr.mxu0 0.0
        %1728 = vmatpush1.msra.mxu0 0.0
        %1729 = vmatprep.subr.mxu0 0.0
        %1730 = vmatpush1.msra.mxu0 0.0
        %1731 = vmatprep.subr.mxu0 0.0
        %1732 = vmatpush1.msra.mxu0 0.0
        %1733 = vmatprep.subr.mxu0 0.0
        %1734 = vmatpush1.msra.mxu0 0.0
        %1735 = vmatprep.subr.mxu0 0.0
        %1736 = vmatpush1.msra.mxu0 0.0
        %1737 = vmatprep.subr.mxu0 0.0
        %1738 = vmatpush1.msra.mxu0 0.0
        %1739 = vmatprep.subr.mxu0 0.0
        %1740 = vmatpush1.msra.mxu0 0.0
        %1741 = vmatprep.subr.mxu0 0.0
        %1742 = vmatpush1.msra.mxu0 0.0
        %1743 = vmatprep.subr.mxu0 0.0
        %1744 = vmatpush1.msra.mxu0 0.0
        %1745 = vmatprep.subr.mxu0 0.0
        %1746 = vmatpush1.msra.mxu0 0.0
        %1747 = vmatprep.subr.mxu0 0.0
        %1748 = vmatpush1.msra.mxu0 0.0
        %1749 = vmatprep.subr.mxu0 0.0
        %1750 = vmatpush1.msra.mxu0 0.0
        %1751 = vmatprep.subr.mxu0 0.0
        %1752 = vmatpush1.msra.mxu0 0.0
        %1753 = vmatprep.subr.mxu0 0.0
        %1754 = vmatpush1.msra.mxu0 0.0
        %1755 = vmatprep.subr.mxu0 0.0
        %1756 = vmatpush1.msra.mxu0 0.0
        %1757 = vmatprep.subr.mxu0 0.0
        %1758 = vmatpush1.msra.mxu0 0.0
        %1759 = vmatprep.subr.mxu0 0.0
        %1760 = vmatpush1.msra.mxu0 0.0
        %1761 = vmatprep.subr.mxu0 0.0
        %1762 = vmatpush1.msra.mxu0 0.0
        %1763 = vmatprep.subr.mxu0 0.0
        %1764 = vmatpush1.msra.mxu0 0.0
        %1765 = vmatprep.subr.mxu0 0.0
        %1766 = vmatpush1.msra.mxu0 0.0
        %1767 = vmatprep.mubr.f32.mxu0 0.0
        %1768 = vmatmul.mubr.f32.gmra.mrb[0].mxu0 %v1701
        %v1769 = vpop.f32.mrb[0].mxu0
        %v1770 = vadd.f32 1e-05, %v1769
        %v1771 = vpop.f32.mrb[0].mxu0
        %1772 = vdwg.mxu0
        %v1773 = vrsqrt.pop %v1770
        %v1774 = vlaneseq
        %v1775 = vshrl.u32 %v1774, 7
        %v1776 = vsub.s32 0, %v1775
        %v1777 = vrot.slane %v1773, %v1776
        %v1778 = vmul.f32 %v1691, %v1777
        %vm1779 = vcmp.ge.f32.partialorder %v1778, 0.0
        %v1780 = vmul.f32 %v1778, 0.2
        %v1781 = vsel %vm1779, %v1778, %v1780
        %v1782 = vpack.c.bf16 %v1781, %v1781
        %v1783 = vld [vmem:[#allocation8] sm:$0x3]
        %vm1784 = vcmask 31744
        %v1786 = vsel %vm1784, %v1783, 0
        %vm1788 = vcmask 1041408
        %v1790 = vsel %vm1788, %v1782, 0
        %1792 = vmatprep.subr.bf16.mxu0 0
        %1793 = vmatpush1.bf16.msra.mxu0 %v1790
        %1794 = vmatprep.subr.bf16.mxu0 0
        %1795 = vmatpush1.bf16.msra.mxu0 0
        %1796 = vmatprep.subr.bf16.mxu0 0
        %1797 = vmatpush1.bf16.msra.mxu0 0
        %1798 = vmatprep.subr.bf16.mxu0 0
        %1799 = vmatpush1.bf16.msra.mxu0 0
        %1800 = vmatprep.subr.bf16.mxu0 0
        %1801 = vmatpush1.bf16.msra.mxu0 0
        %1802 = vmatprep.subr.bf16.mxu0 0
        %1803 = vmatpush1.bf16.msra.mxu0 0
        %1804 = vmatprep.subr.bf16.mxu0 0
        %1805 = vmatpush1.bf16.msra.mxu0 0
        %1806 = vmatprep.subr.bf16.mxu0 0
        %1807 = vmatpush1.bf16.msra.mxu0 0
        %1808 = vmatprep.subr.bf16.mxu0 0
        %1809 = vmatpush1.bf16.msra.mxu0 0
        %1810 = vmatprep.subr.bf16.mxu0 0
        %1811 = vmatpush1.bf16.msra.mxu0 0
        %1812 = vmatprep.subr.bf16.mxu0 0
        %1813 = vmatpush1.bf16.msra.mxu0 0
        %1814 = vmatprep.subr.bf16.mxu0 0
        %1815 = vmatpush1.bf16.msra.mxu0 0
        %1816 = vmatprep.subr.bf16.mxu0 0
        %1817 = vmatpush1.bf16.msra.mxu0 0
        %1818 = vmatprep.subr.bf16.mxu0 0
        %1819 = vmatpush1.bf16.msra.mxu0 0
        %1820 = vmatprep.subr.bf16.mxu0 0
        %1821 = vmatpush1.bf16.msra.mxu0 0
        %1822 = vmatprep.subr.bf16.mxu0 0
        %1823 = vmatpush1.bf16.msra.mxu0 0
        %1824 = vmatprep.mubr.bf16.mxu0 0
        %1825 = vmatmul.mubr.bf16.gmra.mrb[0].mxu0 %v1786
        %v1826 = vpop.f32.mrb[0].mxu0
        %v1827 = vadd.f32 0.0, %v1826
        %v1828 = vpop.f32.mrb[0].mxu0
        %v1829 = vpop.f32.mrb[0].mxu0
        %v1830 = vpop.f32.mrb[0].mxu0
        %1831 = vdwg.mxu0
        %v1832 = vpack.c.bf16 %v1827, %v1827
        %v1833 = vld [vmem:[#allocation10] sm:$0xf]
        %v1834 = vld [vmem:[#allocation10 + $0x4] sm:$0xf]
        %v1835 = vld [vmem:[#allocation10 + $0x8] sm:$0xf]
        %v1836 = vld [vmem:[#allocation10 + $0xc] sm:$0xf]
        %v1837 = vld [vmem:[#allocation10 + $0x10] sm:$0xf]
        %v1838 = vld [vmem:[#allocation10 + $0x14] sm:$0xf]
        %v1839 = vld [vmem:[#allocation10 + $0x18] sm:$0xf]
        %v1840 = vld [vmem:[#allocation10 + $0x1c] sm:$0xf]
        %s1841 = scalar_lea.vmem [#allocation8], 2
        %v1842 = vld [vmem:[%s1841] sm:$0x3]
        %v1844 = vsel %vm1784, %v1842, 0
        %1846 = vmatprep.subr.bf16.mxu0 0
        %1847 = vmatpush1.bf16.msra.mxu0 %v1790
        %1848 = vmatprep.subr.bf16.mxu0 0
        %1849 = vmatpush1.bf16.msra.mxu0 0
        %1850 = vmatprep.subr.bf16.mxu0 0
        %1851 = vmatpush1.bf16.msra.mxu0 0
        %1852 = vmatprep.subr.bf16.mxu0 0
        %1853 = vmatpush1.bf16.msra.mxu0 0
        %1854 = vmatprep.subr.bf16.mxu0 0
        %1855 = vmatpush1.bf16.msra.mxu0 0
        %1856 = vmatprep.subr.bf16.mxu0 0
        %1857 = vmatpush1.bf16.msra.mxu0 0
        %1858 = vmatprep.subr.bf16.mxu0 0
        %1859 = vmatpush1.bf16.msra.mxu0 0
        %1860 = vmatprep.subr.bf16.mxu0 0
        %1861 = vmatpush1.bf16.msra.mxu0 0
        %1862 = vmatprep.subr.bf16.mxu0 0
        %1863 = vmatpush1.bf16.msra.mxu0 0
        %1864 = vmatprep.subr.bf16.mxu0 0
        %1865 = vmatpush1.bf16.msra.mxu0 0
        %1866 = vmatprep.subr.bf16.mxu0 0
        %1867 = vmatpush1.bf16.msra.mxu0 0
        %1868 = vmatprep.subr.bf16.mxu0 0
        %1869 = vmatpush1.bf16.msra.mxu0 0
        %1870 = vmatprep.subr.bf16.mxu0 0
        %1871 = vmatpush1.bf16.msra.mxu0 0
        %1872 = vmatprep.subr.bf16.mxu0 0
        %1873 = vmatpush1.bf16.msra.mxu0 0
        %1874 = vmatprep.subr.bf16.mxu0 0
        %1875 = vmatpush1.bf16.msra.mxu0 0
        %1876 = vmatprep.subr.bf16.mxu0 0
        %1877 = vmatpush1.bf16.msra.mxu0 0
        %1878 = vmatprep.mubr.bf16.mxu0 0
        %1879 = vmatmul.mubr.bf16.gmra.mrb[0].mxu0 %v1844
        %v1880 = vpop.f32.mrb[0].mxu0
        %v1881 = vadd.f32 0.0, %v1880
        %v1882 = vpop.f32.mrb[0].mxu0
        %v1883 = vpop.f32.mrb[0].mxu0
        %v1884 = vpop.f32.mrb[0].mxu0
        %1885 = vdwg.mxu0
        %v1886 = vpack.c.bf16 %v1881, %v1881
        %s1887 = scalar_lea.vmem [#allocation10], 32
        %v1888 = vld [vmem:[%s1887] sm:$0xf]
        %v1889 = vld [vmem:[%s1887 + $0x4] sm:$0xf]
        %v1890 = vld [vmem:[%s1887 + $0x8] sm:$0xf]
        %v1891 = vld [vmem:[%s1887 + $0xc] sm:$0xf]
        %v1892 = vld [vmem:[%s1887 + $0x10] sm:$0xf]
        %v1893 = vld [vmem:[%s1887 + $0x14] sm:$0xf]
        %v1894 = vld [vmem:[%s1887 + $0x18] sm:$0xf]
        %v1895 = vld [vmem:[%s1887 + $0x1c] sm:$0xf]
        %v1904 = vunpack.c.l.b16 %v1888
        %v1905 = vunpack.c.l.b16 %v1889
        %v1906 = vunpack.c.l.b16 %v1890
        %v1907 = vunpack.c.l.b16 %v1891
        %v1908 = vunpack.c.l.b16 %v1892
        %v1909 = vunpack.c.l.b16 %v1893
        %v1910 = vunpack.c.l.b16 %v1894
        %v1911 = vunpack.c.l.b16 %v1895
        %v1912 = vpack.c.b16 %v1905, %v1904
        %v1913 = vpack.c.b16 %v1907, %v1906
        %v1914 = vpack.c.b16 %v1909, %v1908
        %v1915 = vpack.c.b16 %v1911, %v1910
        %v1921 = vsel %vm728, %v1886, 0
        %1923 = vmatprep.subr.bf16.mxu0 0
        %1924 = vmatpush1.bf16.msra.mxu0 %v1912
        %1925 = vmatprep.subr.bf16.mxu0 0
        %1926 = vmatpush1.bf16.msra.mxu0 %v1913
        %1927 = vmatprep.subr.bf16.mxu0 0
        %1928 = vmatpush1.bf16.msra.mxu0 %v1914
        %1929 = vmatprep.subr.bf16.mxu0 0
        %1930 = vmatpush1.bf16.msra.mxu0 %v1915
        %1931 = vmatprep.subr.bf16.mxu0 0
        %1932 = vmatpush1.bf16.msra.mxu0 0
        %1933 = vmatprep.subr.bf16.mxu0 0
        %1934 = vmatpush1.bf16.msra.mxu0 0
        %1935 = vmatprep.subr.bf16.mxu0 0
        %1936 = vmatpush1.bf16.msra.mxu0 0
        %1937 = vmatprep.subr.bf16.mxu0 0
        %1938 = vmatpush1.bf16.msra.mxu0 0
        %1939 = vmatprep.subr.bf16.mxu0 0
        %1940 = vmatpush1.bf16.msra.mxu0 0
        %1941 = vmatprep.subr.bf16.mxu0 0
        %1942 = vmatpush1.bf16.msra.mxu0 0
        %1943 = vmatprep.subr.bf16.mxu0 0
        %1944 = vmatpush1.bf16.msra.mxu0 0
        %1945 = vmatprep.subr.bf16.mxu0 0
        %1946 = vmatpush1.bf16.msra.mxu0 0
        %1947 = vmatprep.subr.bf16.mxu0 0
        %1948 = vmatpush1.bf16.msra.mxu0 0
        %1949 = vmatprep.subr.bf16.mxu0 0
        %1950 = vmatpush1.bf16.msra.mxu0 0
        %1951 = vmatprep.subr.bf16.mxu0 0
        %1952 = vmatpush1.bf16.msra.mxu0 0
        %1953 = vmatprep.subr.bf16.mxu0 0
        %1954 = vmatpush1.bf16.msra.mxu0 0
        %1955 = vmatprep.mubr.bf16.mxu0 0
        %1956 = vmatmul.mubr.bf16.gmra.mrb[0].mxu0 %v1921
        %v1957 = vpop.f32.mrb[0].mxu0
        %v1958 = vadd.f32 0.0, %v1957
        %v1959 = vpop.f32.mrb[0].mxu0
        %v1960 = vpop.f32.mrb[0].mxu0
        %v1961 = vpop.f32.mrb[0].mxu0
        %1962 = vdwg.mxu0
        %v1971 = vunpack.c.l.b16 %v1833
        %v1972 = vunpack.c.l.b16 %v1834
        %v1973 = vunpack.c.l.b16 %v1835
        %v1974 = vunpack.c.l.b16 %v1836
        %v1975 = vunpack.c.l.b16 %v1837
        %v1976 = vunpack.c.l.b16 %v1838
        %v1977 = vunpack.c.l.b16 %v1839
        %v1978 = vunpack.c.l.b16 %v1840
        %v1979 = vpack.c.b16 %v1972, %v1971
        %v1980 = vpack.c.b16 %v1974, %v1973
        %v1981 = vpack.c.b16 %v1976, %v1975
        %v1982 = vpack.c.b16 %v1978, %v1977
        %v1988 = vsel %vm728, %v1832, 0
        %1990 = vmatprep.subr.bf16.mxu0 0
        %1991 = vmatpush1.bf16.msra.mxu0 %v1979
        %1992 = vmatprep.subr.bf16.mxu0 0
        %1993 = vmatpush1.bf16.msra.mxu0 %v1980
        %1994 = vmatprep.subr.bf16.mxu0 0
        %1995 = vmatpush1.bf16.msra.mxu0 %v1981
        %1996 = vmatprep.subr.bf16.mxu0 0
        %1997 = vmatpush1.bf16.msra.mxu0 %v1982
        %1998 = vmatprep.subr.bf16.mxu0 0
        %1999 = vmatpush1.bf16.msra.mxu0 0
        %2000 = vmatprep.subr.bf16.mxu0 0
        %2001 = vmatpush1.bf16.msra.mxu0 0
        %2002 = vmatprep.subr.bf16.mxu0 0
        %2003 = vmatpush1.bf16.msra.mxu0 0
        %2004 = vmatprep.subr.bf16.mxu0 0
        %2005 = vmatpush1.bf16.msra.mxu0 0
        %2006 = vmatprep.subr.bf16.mxu0 0
        %2007 = vmatpush1.bf16.msra.mxu0 0
        %2008 = vmatprep.subr.bf16.mxu0 0
        %2009 = vmatpush1.bf16.msra.mxu0 0
        %2010 = vmatprep.subr.bf16.mxu0 0
        %2011 = vmatpush1.bf16.msra.mxu0 0
        %2012 = vmatprep.subr.bf16.mxu0 0
        %2013 = vmatpush1.bf16.msra.mxu0 0
        %2014 = vmatprep.subr.bf16.mxu0 0
        %2015 = vmatpush1.bf16.msra.mxu0 0
        %2016 = vmatprep.subr.bf16.mxu0 0
        %2017 = vmatpush1.bf16.msra.mxu0 0
        %2018 = vmatprep.subr.bf16.mxu0 0
        %2019 = vmatpush1.bf16.msra.mxu0 0
        %2020 = vmatprep.subr.bf16.mxu0 0
        %2021 = vmatpush1.bf16.msra.mxu0 0
        %2022 = vmatprep.mubr.bf16.mxu0 0
        %2023 = vmatmul.mubr.bf16.gmra.mrb[0].mxu0 %v1988
        %v2024 = vpop.f32.mrb[0].mxu0
        %v2025 = vadd.f32 %v1958, %v2024
        %v2026 = vpop.f32.mrb[0].mxu0
        %v2027 = vpop.f32.mrb[0].mxu0
        %v2028 = vpop.f32.mrb[0].mxu0
        %2029 = vdwg.mxu0
        %s2030 = scalar_lea.vmem [#allocation8], 4
        %v2031 = vld [vmem:[%s2030] sm:$0x3]
        %v2033 = vsel %vm1784, %v2031, 0
        %2035 = vmatprep.subr.bf16.mxu0 0
        %2036 = vmatpush1.bf16.msra.mxu0 %v1790
        %2037 = vmatprep.subr.bf16.mxu0 0
        %2038 = vmatpush1.bf16.msra.mxu0 0
        %2039 = vmatprep.subr.bf16.mxu0 0
        %2040 = vmatpush1.bf16.msra.mxu0 0
        %2041 = vmatprep.subr.bf16.mxu0 0
        %2042 = vmatpush1.bf16.msra.mxu0 0
        %2043 = vmatprep.subr.bf16.mxu0 0
        %2044 = vmatpush1.bf16.msra.mxu0 0
        %2045 = vmatprep.subr.bf16.mxu0 0
        %2046 = vmatpush1.bf16.msra.mxu0 0
        %2047 = vmatprep.subr.bf16.mxu0 0
        %2048 = vmatpush1.bf16.msra.mxu0 0
        %2049 = vmatprep.subr.bf16.mxu0 0
        %2050 = vmatpush1.bf16.msra.mxu0 0
        %2051 = vmatprep.subr.bf16.mxu0 0
        %2052 = vmatpush1.bf16.msra.mxu0 0
        %2053 = vmatprep.subr.bf16.mxu0 0
        %2054 = vmatpush1.bf16.msra.mxu0 0
        %2055 = vmatprep.subr.bf16.mxu0 0
        %2056 = vmatpush1.bf16.msra.mxu0 0
        %2057 = vmatprep.subr.bf16.mxu0 0
        %2058 = vmatpush1.bf16.msra.mxu0 0
        %2059 = vmatprep.subr.bf16.mxu0 0
        %2060 = vmatpush1.bf16.msra.mxu0 0
        %2061 = vmatprep.subr.bf16.mxu0 0
        %2062 = vmatpush1.bf16.msra.mxu0 0
        %2063 = vmatprep.subr.bf16.mxu0 0
        %2064 = vmatpush1.bf16.msra.mxu0 0
        %2065 = vmatprep.subr.bf16.mxu0 0
        %2066 = vmatpush1.bf16.msra.mxu0 0
        %2067 = vmatprep.mubr.bf16.mxu0 0
        %2068 = vmatmul.mubr.bf16.gmra.mrb[0].mxu0 %v2033
        %v2069 = vpop.f32.mrb[0].mxu0
        %v2070 = vadd.f32 0.0, %v2069
        %v2071 = vpop.f32.mrb[0].mxu0
        %v2072 = vpop.f32.mrb[0].mxu0
        %v2073 = vpop.f32.mrb[0].mxu0
        %2074 = vdwg.mxu0
        %v2075 = vpack.c.bf16 %v2070, %v2070
        %s2076 = scalar_lea.vmem [#allocation10], 64
        %v2077 = vld [vmem:[%s2076] sm:$0xf]
        %v2078 = vld [vmem:[%s2076 + $0x4] sm:$0xf]
        %v2079 = vld [vmem:[%s2076 + $0x8] sm:$0xf]
        %v2080 = vld [vmem:[%s2076 + $0xc] sm:$0xf]
        %v2081 = vld [vmem:[%s2076 + $0x10] sm:$0xf]
        %v2082 = vld [vmem:[%s2076 + $0x14] sm:$0xf]
        %v2083 = vld [vmem:[%s2076 + $0x18] sm:$0xf]
        %v2084 = vld [vmem:[%s2076 + $0x1c] sm:$0xf]
        %v2093 = vunpack.c.l.b16 %v2077
        %v2094 = vunpack.c.l.b16 %v2078
        %v2095 = vunpack.c.l.b16 %v2079
        %v2096 = vunpack.c.l.b16 %v2080
        %v2097 = vunpack.c.l.b16 %v2081
        %v2098 = vunpack.c.l.b16 %v2082
        %v2099 = vunpack.c.l.b16 %v2083
        %v2100 = vunpack.c.l.b16 %v2084
        %v2101 = vpack.c.b16 %v2094, %v2093
        %v2102 = vpack.c.b16 %v2096, %v2095
        %v2103 = vpack.c.b16 %v2098, %v2097
        %v2104 = vpack.c.b16 %v2100, %v2099
        %v2110 = vsel %vm728, %v2075, 0
        %2112 = vmatprep.subr.bf16.mxu0 0
        %2113 = vmatpush1.bf16.msra.mxu0 %v2101
        %2114 = vmatprep.subr.bf16.mxu0 0
        %2115 = vmatpush1.bf16.msra.mxu0 %v2102
        %2116 = vmatprep.subr.bf16.mxu0 0
        %2117 = vmatpush1.bf16.msra.mxu0 %v2103
        %2118 = vmatprep.subr.bf16.mxu0 0
        %2119 = vmatpush1.bf16.msra.mxu0 %v2104
        %2120 = vmatprep.subr.bf16.mxu0 0
        %2121 = vmatpush1.bf16.msra.mxu0 0
        %2122 = vmatprep.subr.bf16.mxu0 0
        %2123 = vmatpush1.bf16.msra.mxu0 0
        %2124 = vmatprep.subr.bf16.mxu0 0
        %2125 = vmatpush1.bf16.msra.mxu0 0
        %2126 = vmatprep.subr.bf16.mxu0 0
        %2127 = vmatpush1.bf16.msra.mxu0 0
        %2128 = vmatprep.subr.bf16.mxu0 0
        %2129 = vmatpush1.bf16.msra.mxu0 0
        %2130 = vmatprep.subr.bf16.mxu0 0
        %2131 = vmatpush1.bf16.msra.mxu0 0
        %2132 = vmatprep.subr.bf16.mxu0 0
        %2133 = vmatpush1.bf16.msra.mxu0 0
        %2134 = vmatprep.subr.bf16.mxu0 0
        %2135 = vmatpush1.bf16.msra.mxu0 0
        %2136 = vmatprep.subr.bf16.mxu0 0
        %2137 = vmatpush1.bf16.msra.mxu0 0
        %2138 = vmatprep.subr.bf16.mxu0 0
        %2139 = vmatpush1.bf16.msra.mxu0 0
        %2140 = vmatprep.subr.bf16.mxu0 0
        %2141 = vmatpush1.bf16.msra.mxu0 0
        %2142 = vmatprep.subr.bf16.mxu0 0
        %2143 = vmatpush1.bf16.msra.mxu0 0
        %2144 = vmatprep.mubr.bf16.mxu0 0
        %2145 = vmatmul.mubr.bf16.gmra.mrb[0].mxu0 %v2110
        %v2146 = vpop.f32.mrb[0].mxu0
        %v2147 = vadd.f32 0.0, %v2146
        %v2148 = vpop.f32.mrb[0].mxu0
        %v2149 = vpop.f32.mrb[0].mxu0
        %v2150 = vpop.f32.mrb[0].mxu0
        %2151 = vdwg.mxu0
        %v2152 = vadd.f32 %v2025, %v2147
        %s2153 = scalar_lea.vmem [#allocation8], 6
        %v2154 = vld [vmem:[%s2153] sm:$0x3]
        %v2156 = vsel %vm1784, %v2154, 0
        %2158 = vmatprep.subr.bf16.mxu0 0
        %2159 = vmatpush1.bf16.msra.mxu0 %v1790
        %2160 = vmatprep.subr.bf16.mxu0 0
        %2161 = vmatpush1.bf16.msra.mxu0 0
        %2162 = vmatprep.subr.bf16.mxu0 0
        %2163 = vmatpush1.bf16.msra.mxu0 0
        %2164 = vmatprep.subr.bf16.mxu0 0
        %2165 = vmatpush1.bf16.msra.mxu0 0
        %2166 = vmatprep.subr.bf16.mxu0 0
        %2167 = vmatpush1.bf16.msra.mxu0 0
        %2168 = vmatprep.subr.bf16.mxu0 0
        %2169 = vmatpush1.bf16.msra.mxu0 0
        %2170 = vmatprep.subr.bf16.mxu0 0
        %2171 = vmatpush1.bf16.msra.mxu0 0
        %2172 = vmatprep.subr.bf16.mxu0 0
        %2173 = vmatpush1.bf16.msra.mxu0 0
        %2174 = vmatprep.subr.bf16.mxu0 0
        %2175 = vmatpush1.bf16.msra.mxu0 0
        %2176 = vmatprep.subr.bf16.mxu0 0
        %2177 = vmatpush1.bf16.msra.mxu0 0
        %2178 = vmatprep.subr.bf16.mxu0 0
        %2179 = vmatpush1.bf16.msra.mxu0 0
        %2180 = vmatprep.subr.bf16.mxu0 0
        %2181 = vmatpush1.bf16.msra.mxu0 0
        %2182 = vmatprep.subr.bf16.mxu0 0
        %2183 = vmatpush1.bf16.msra.mxu0 0
        %2184 = vmatprep.subr.bf16.mxu0 0
        %2185 = vmatpush1.bf16.msra.mxu0 0
        %2186 = vmatprep.subr.bf16.mxu0 0
        %2187 = vmatpush1.bf16.msra.mxu0 0
        %2188 = vmatprep.subr.bf16.mxu0 0
        %2189 = vmatpush1.bf16.msra.mxu0 0
        %2190 = vmatprep.mubr.bf16.mxu0 0
        %2191 = vmatmul.mubr.bf16.gmra.mrb[0].mxu0 %v2156
        %v2192 = vpop.f32.mrb[0].mxu0
        %v2193 = vadd.f32 0.0, %v2192
        %v2194 = vpop.f32.mrb[0].mxu0
        %v2195 = vpop.f32.mrb[0].mxu0
        %v2196 = vpop.f32.mrb[0].mxu0
        %2197 = vdwg.mxu0
        %v2198 = vpack.c.bf16 %v2193, %v2193
        %s2199 = scalar_lea.vmem [#allocation10], 96
        %v2200 = vld [vmem:[%s2199] sm:$0xf]
        %v2201 = vld [vmem:[%s2199 + $0x4] sm:$0xf]
        %v2202 = vld [vmem:[%s2199 + $0x8] sm:$0xf]
        %v2203 = vld [vmem:[%s2199 + $0xc] sm:$0xf]
        %v2204 = vld [vmem:[%s2199 + $0x10] sm:$0xf]
        %v2205 = vld [vmem:[%s2199 + $0x14] sm:$0xf]
        %v2206 = vld [vmem:[%s2199 + $0x18] sm:$0xf]
        %v2207 = vld [vmem:[%s2199 + $0x1c] sm:$0xf]
        %v2216 = vunpack.c.l.b16 %v2200
        %v2217 = vunpack.c.l.b16 %v2201
        %v2218 = vunpack.c.l.b16 %v2202
        %v2219 = vunpack.c.l.b16 %v2203
        %v2220 = vunpack.c.l.b16 %v2204
        %v2221 = vunpack.c.l.b16 %v2205
        %v2222 = vunpack.c.l.b16 %v2206
        %v2223 = vunpack.c.l.b16 %v2207
        %v2224 = vpack.c.b16 %v2217, %v2216
        %v2225 = vpack.c.b16 %v2219, %v2218
        %v2226 = vpack.c.b16 %v2221, %v2220
        %v2227 = vpack.c.b16 %v2223, %v2222
        %v2233 = vsel %vm728, %v2198, 0
        %2235 = vmatprep.subr.bf16.mxu0 0
        %2236 = vmatpush1.bf16.msra.mxu0 %v2224
        %2237 = vmatprep.subr.bf16.mxu0 0
        %2238 = vmatpush1.bf16.msra.mxu0 %v2225
        %2239 = vmatprep.subr.bf16.mxu0 0
        %2240 = vmatpush1.bf16.msra.mxu0 %v2226
        %2241 = vmatprep.subr.bf16.mxu0 0
        %2242 = vmatpush1.bf16.msra.mxu0 %v2227
        %2243 = vmatprep.subr.bf16.mxu0 0
        %2244 = vmatpush1.bf16.msra.mxu0 0
        %2245 = vmatprep.subr.bf16.mxu0 0
        %2246 = vmatpush1.bf16.msra.mxu0 0
        %2247 = vmatprep.subr.bf16.mxu0 0
        %2248 = vmatpush1.bf16.msra.mxu0 0
        %2249 = vmatprep.subr.bf16.mxu0 0
        %2250 = vmatpush1.bf16.msra.mxu0 0
        %2251 = vmatprep.subr.bf16.mxu0 0
        %2252 = vmatpush1.bf16.msra.mxu0 0
        %2253 = vmatprep.subr.bf16.mxu0 0
        %2254 = vmatpush1.bf16.msra.mxu0 0
        %2255 = vmatprep.subr.bf16.mxu0 0
        %2256 = vmatpush1.bf16.msra.mxu0 0
        %2257 = vmatprep.subr.bf16.mxu0 0
        %2258 = vmatpush1.bf16.msra.mxu0 0
        %2259 = vmatprep.subr.bf16.mxu0 0
        %2260 = vmatpush1.bf16.msra.mxu0 0
        %2261 = vmatprep.subr.bf16.mxu0 0
        %2262 = vmatpush1.bf16.msra.mxu0 0
        %2263 = vmatprep.subr.bf16.mxu0 0
        %2264 = vmatpush1.bf16.msra.mxu0 0
        %2265 = vmatprep.subr.bf16.mxu0 0
        %2266 = vmatpush1.bf16.msra.mxu0 0
        %2267 = vmatprep.mubr.bf16.mxu0 0
        %2268 = vmatmul.mubr.bf16.gmra.mrb[0].mxu0 %v2233
        %v2269 = vpop.f32.mrb[0].mxu0
        %v2270 = vadd.f32 0.0, %v2269
        %v2271 = vpop.f32.mrb[0].mxu0
        %v2272 = vpop.f32.mrb[0].mxu0
        %v2273 = vpop.f32.mrb[0].mxu0
        %2274 = vdwg.mxu0
        %v2275 = vadd.f32 %v2152, %v2270
        %v2276 = vld [vmem:[#allocation11] sm:$0x1]
        %v2278 = vlaneseq
        %v2279 = vshrl.u32 %v2278, 7
        %v2280 = vsub.s32 0, %v2279
        %v2281 = vrot.slane %v2276, %v2280
        %v2283 = vadd.f32 %v2275, %v2281
        %vm2284 = vcmask 780288
        %v2285 = vsel %vm2284, %v2283, 0.0
        %v2286 = vrot.slane %v2285, 4
        %v2287 = vadd.f32 %v2285, %v2286
        %v2288 = vrot.slane %v2287, 2
        %v2289 = vadd.f32 %v2287, %v2288
        %v2290 = vrot.slane %v2289, 1
        %v2291 = vadd.f32 %v2289, %v2290
        %v2292 = vld [vmem:[#allocation13] sm:$0xff]
        %v2293 = vld [vmem:[#allocation13 + $0x8] sm:$0xff]
        %v2294 = vld [vmem:[#allocation13 + $0x10] sm:$0xff]
        %v2295 = vld [vmem:[#allocation13 + $0x18] sm:$0xff]
        %v2296 = vld [vmem:[#allocation13 + $0x20] sm:$0xff]
        %v2297 = vld [vmem:[#allocation13 + $0x28] sm:$0xff]
        %v2298 = vld [vmem:[#allocation13 + $0x30] sm:$0xff]
        %v2299 = vld [vmem:[#allocation13 + $0x38] sm:$0xff]
        %v2300 = vld [vmem:[#allocation13 + $0x40] sm:$0xff]
        %v2301 = vld [vmem:[#allocation13 + $0x48] sm:$0xff]
        %v2302 = vld [vmem:[#allocation13 + $0x50] sm:$0xff]
        %v2303 = vld [vmem:[#allocation13 + $0x58] sm:$0xff]
        %vm2304 = vcmask 785408
        %v2306 = vsel %vm2304, %v2291, 0
        %2308 = vmatprep.subr.mxu0 0.0
        %2309 = vmatpush1.msra.mxu0 %v2292
        %2310 = vmatprep.subr.mxu0 0.0
        %2311 = vmatpush1.msra.mxu0 %v2293
        %2312 = vmatprep.subr.mxu0 0.0
        %2313 = vmatpush1.msra.mxu0 %v2294
        %2314 = vmatprep.subr.mxu0 0.0
        %2315 = vmatpush1.msra.mxu0 %v2295
        %2316 = vmatprep.subr.mxu0 0.0
        %2317 = vmatpush1.msra.mxu0 %v2296
        %2318 = vmatprep.subr.mxu0 0.0
        %2319 = vmatpush1.msra.mxu0 %v2297
        %2320 = vmatprep.subr.mxu0 0.0
        %2321 = vmatpush1.msra.mxu0 %v2298
        %2322 = vmatprep.subr.mxu0 0.0
        %2323 = vmatpush1.msra.mxu0 %v2299
        %2324 = vmatprep.subr.mxu0 0.0
        %2325 = vmatpush1.msra.mxu0 %v2300
        %2326 = vmatprep.subr.mxu0 0.0
        %2327 = vmatpush1.msra.mxu0 %v2301
        %2328 = vmatprep.subr.mxu0 0.0
        %2329 = vmatpush1.msra.mxu0 %v2302
        %2330 = vmatprep.subr.mxu0 0.0
        %2331 = vmatpush1.msra.mxu0 %v2303
        %2332 = vmatprep.subr.mxu0 0.0
        %2333 = vmatpush1.msra.mxu0 0.0
        %2334 = vmatprep.subr.mxu0 0.0
        %2335 = vmatpush1.msra.mxu0 0.0
        %2336 = vmatprep.subr.mxu0 0.0
        %2337 = vmatpush1.msra.mxu0 0.0
        %2338 = vmatprep.subr.mxu0 0.0
        %2339 = vmatpush1.msra.mxu0 0.0
        %2340 = vmatprep.subr.mxu0 0.0
        %2341 = vmatpush1.msra.mxu0 0.0
        %2342 = vmatprep.subr.mxu0 0.0
        %2343 = vmatpush1.msra.mxu0 0.0
        %2344 = vmatprep.subr.mxu0 0.0
        %2345 = vmatpush1.msra.mxu0 0.0
        %2346 = vmatprep.subr.mxu0 0.0
        %2347 = vmatpush1.msra.mxu0 0.0
        %2348 = vmatprep.subr.mxu0 0.0
        %2349 = vmatpush1.msra.mxu0 0.0
        %2350 = vmatprep.subr.mxu0 0.0
        %2351 = vmatpush1.msra.mxu0 0.0
        %2352 = vmatprep.subr.mxu0 0.0
        %2353 = vmatpush1.msra.mxu0 0.0
        %2354 = vmatprep.subr.mxu0 0.0
        %2355 = vmatpush1.msra.mxu0 0.0
        %2356 = vmatprep.subr.mxu0 0.0
        %2357 = vmatpush1.msra.mxu0 0.0
        %2358 = vmatprep.subr.mxu0 0.0
        %2359 = vmatpush1.msra.mxu0 0.0
        %2360 = vmatprep.subr.mxu0 0.0
        %2361 = vmatpush1.msra.mxu0 0.0
        %2362 = vmatprep.subr.mxu0 0.0
        %2363 = vmatpush1.msra.mxu0 0.0
        %2364 = vmatprep.subr.mxu0 0.0
        %2365 = vmatpush1.msra.mxu0 0.0
        %2366 = vmatprep.subr.mxu0 0.0
        %2367 = vmatpush1.msra.mxu0 0.0
        %2368 = vmatprep.subr.mxu0 0.0
        %2369 = vmatpush1.msra.mxu0 0.0
        %2370 = vmatprep.subr.mxu0 0.0
        %2371 = vmatpush1.msra.mxu0 0.0
        %2372 = vmatprep.mubr.f32.mxu0 0.0
        %2373 = vmatmul.mubr.f32.gmra.mrb[0].mxu0 %v2306
        %v2374 = vpop.f32.mrb[0].mxu0
        %v2375 = vadd.f32 0.0, %v2374
        %v2376 = vpop.f32.mrb[0].mxu0
        %2377 = vdwg.mxu0
        %v2378 = vlaneseq
        %v2379 = vshrl.u32 %v2378, 7
        %v2380 = vsub.s32 0, %v2379
        %v2381 = vrot.slane %v2375, %v2380
        %v2382 = vsub.f32 %v2283, %v2381
        %v2383 = vmul.f32 %v2382, %v2382
        %v2384 = vsel %vm2284, %v2383, 0.0
        %v2385 = vrot.slane %v2384, 4
        %v2386 = vadd.f32 %v2384, %v2385
        %v2387 = vrot.slane %v2386, 2
        %v2388 = vadd.f32 %v2386, %v2387
        %v2389 = vrot.slane %v2388, 1
        %v2390 = vadd.f32 %v2388, %v2389
        %v2392 = vsel %vm2304, %v2390, 0
        %2394 = vmatprep.subr.mxu0 0.0
        %2395 = vmatpush1.msra.mxu0 %v2292
        %2396 = vmatprep.subr.mxu0 0.0
        %2397 = vmatpush1.msra.mxu0 %v2293
        %2398 = vmatprep.subr.mxu0 0.0
        %2399 = vmatpush1.msra.mxu0 %v2294
        %2400 = vmatprep.subr.mxu0 0.0
        %2401 = vmatpush1.msra.mxu0 %v2295
        %2402 = vmatprep.subr.mxu0 0.0
        %2403 = vmatpush1.msra.mxu0 %v2296
        %2404 = vmatprep.subr.mxu0 0.0
        %2405 = vmatpush1.msra.mxu0 %v2297
        %2406 = vmatprep.subr.mxu0 0.0
        %2407 = vmatpush1.msra.mxu0 %v2298
        %2408 = vmatprep.subr.mxu0 0.0
        %2409 = vmatpush1.msra.mxu0 %v2299
        %2410 = vmatprep.subr.mxu0 0.0
        %2411 = vmatpush1.msra.mxu0 %v2300
        %2412 = vmatprep.subr.mxu0 0.0
        %2413 = vmatpush1.msra.mxu0 %v2301
        %2414 = vmatprep.subr.mxu0 0.0
        %2415 = vmatpush1.msra.mxu0 %v2302
        %2416 = vmatprep.subr.mxu0 0.0
        %2417 = vmatpush1.msra.mxu0 %v2303
        %2418 = vmatprep.subr.mxu0 0.0
        %2419 = vmatpush1.msra.mxu0 0.0
        %2420 = vmatprep.subr.mxu0 0.0
        %2421 = vmatpush1.msra.mxu0 0.0
        %2422 = vmatprep.subr.mxu0 0.0
        %2423 = vmatpush1.msra.mxu0 0.0
        %2424 = vmatprep.subr.mxu0 0.0
        %2425 = vmatpush1.msra.mxu0 0.0
        %2426 = vmatprep.subr.mxu0 0.0
        %2427 = vmatpush1.msra.mxu0 0.0
        %2428 = vmatprep.subr.mxu0 0.0
        %2429 = vmatpush1.msra.mxu0 0.0
        %2430 = vmatprep.subr.mxu0 0.0
        %2431 = vmatpush1.msra.mxu0 0.0
        %2432 = vmatprep.subr.mxu0 0.0
        %2433 = vmatpush1.msra.mxu0 0.0
        %2434 = vmatprep.subr.mxu0 0.0
        %2435 = vmatpush1.msra.mxu0 0.0
        %2436 = vmatprep.subr.mxu0 0.0
        %2437 = vmatpush1.msra.mxu0 0.0
        %2438 = vmatprep.subr.mxu0 0.0
        %2439 = vmatpush1.msra.mxu0 0.0
        %2440 = vmatprep.subr.mxu0 0.0
        %2441 = vmatpush1.msra.mxu0 0.0
        %2442 = vmatprep.subr.mxu0 0.0
        %2443 = vmatpush1.msra.mxu0 0.0
        %2444 = vmatprep.subr.mxu0 0.0
        %2445 = vmatpush1.msra.mxu0 0.0
        %2446 = vmatprep.subr.mxu0 0.0
        %2447 = vmatpush1.msra.mxu0 0.0
        %2448 = vmatprep.subr.mxu0 0.0
        %2449 = vmatpush1.msra.mxu0 0.0
        %2450 = vmatprep.subr.mxu0 0.0
        %2451 = vmatpush1.msra.mxu0 0.0
        %2452 = vmatprep.subr.mxu0 0.0
        %2453 = vmatpush1.msra.mxu0 0.0
        %2454 = vmatprep.subr.mxu0 0.0
        %2455 = vmatpush1.msra.mxu0 0.0
        %2456 = vmatprep.subr.mxu0 0.0
        %2457 = vmatpush1.msra.mxu0 0.0
        %2458 = vmatprep.mubr.f32.mxu0 0.0
        %2459 = vmatmul.mubr.f32.gmra.mrb[0].mxu0 %v2392
        %v2460 = vpop.f32.mrb[0].mxu0
        %v2461 = vadd.f32 1e-05, %v2460
        %v2462 = vpop.f32.mrb[0].mxu0
        %2463 = vdwg.mxu0
        %v2464 = vrsqrt.pop %v2461
        %v2465 = vlaneseq
        %v2466 = vshrl.u32 %v2465, 7
        %v2467 = vsub.s32 0, %v2466
        %v2468 = vrot.slane %v2464, %v2467
        %v2469 = vmul.f32 %v2382, %v2468
        %vm2470 = vcmp.ge.f32.partialorder %v2469, 0.0
        %v2471 = vmul.f32 %v2469, 0.2
        %v2472 = vsel %vm2470, %v2469, %v2471
        %v2473 = vpack.c.bf16 %v2472, %v2472
        %v2474 = vld [vmem:[%s12] sm:$0x1]
        %vm2475 = vcmask 23552
        %v2477 = vsel %vm2475, %v2474, 0
        %vm2479 = vcmask 1040384
        %v2480 = vsel %vm2479, 4294967295, 65535
        %v2481 = vsel %vm1788, %v2480, 0
        %v2483 = vand.u32 %v2473, %v2481
        %2485 = vmatprep.subr.bf16.mxu0 0
        %2486 = vmatpush1.bf16.msra.mxu0 %v2483
        %2487 = vmatprep.subr.bf16.mxu0 0
        %2488 = vmatpush1.bf16.msra.mxu0 0
        %2489 = vmatprep.subr.bf16.mxu0 0
        %2490 = vmatpush1.bf16.msra.mxu0 0
        %2491 = vmatprep.subr.bf16.mxu0 0
        %2492 = vmatpush1.bf16.msra.mxu0 0
        %2493 = vmatprep.subr.bf16.mxu0 0
        %2494 = vmatpush1.bf16.msra.mxu0 0
        %2495 = vmatprep.subr.bf16.mxu0 0
        %2496 = vmatpush1.bf16.msra.mxu0 0
        %2497 = vmatprep.subr.bf16.mxu0 0
        %2498 = vmatpush1.bf16.msra.mxu0 0
        %2499 = vmatprep.subr.bf16.mxu0 0
        %2500 = vmatpush1.bf16.msra.mxu0 0
        %2501 = vmatprep.subr.bf16.mxu0 0
        %2502 = vmatpush1.bf16.msra.mxu0 0
        %2503 = vmatprep.subr.bf16.mxu0 0
        %2504 = vmatpush1.bf16.msra.mxu0 0
        %2505 = vmatprep.subr.bf16.mxu0 0
        %2506 = vmatpush1.bf16.msra.mxu0 0
        %2507 = vmatprep.subr.bf16.mxu0 0
        %2508 = vmatpush1.bf16.msra.mxu0 0
        %2509 = vmatprep.subr.bf16.mxu0 0
        %2510 = vmatpush1.bf16.msra.mxu0 0
        %2511 = vmatprep.subr.bf16.mxu0 0
        %2512 = vmatpush1.bf16.msra.mxu0 0
        %2513 = vmatprep.subr.bf16.mxu0 0
        %2514 = vmatpush1.bf16.msra.mxu0 0
        %2515 = vmatprep.subr.bf16.mxu0 0
        %2516 = vmatpush1.bf16.msra.mxu0 0
        %2517 = vmatprep.mubr.bf16.mxu0 0
        %2518 = vmatmul.mubr.bf16.gmra.mrb[0].mxu0 %v2477
        %v2519 = vpop.f32.mrb[0].mxu0
        %v2520 = vadd.f32 0.0, %v2519
        %v2521 = vpop.f32.mrb[0].mxu0
        %v2522 = vpop.f32.mrb[0].mxu0
        %v2523 = vpop.f32.mrb[0].mxu0
        %2524 = vdwg.mxu0
        %v2525 = vpack.c.bf16 %v2520, %v2520
        %v2526 = vld [vmem:[%s13] sm:$0xf]
        %v2527 = vld [vmem:[%s13 + $0x4] sm:$0xf]
        %v2528 = vld [vmem:[%s13 + $0x8] sm:$0xf]
        %v2529 = vld [vmem:[%s13 + $0xc] sm:$0xf]
        %v2530 = vld [vmem:[%s13 + $0x10] sm:$0xf]
        %v2531 = vld [vmem:[%s13 + $0x14] sm:$0xf]
        %v2532 = vld [vmem:[%s13 + $0x18] sm:$0xf]
        %v2533 = vld [vmem:[%s13 + $0x1c] sm:$0xf]
        %v2534 = vld [vmem:[%s13 + $0x20] sm:$0xf]
        %v2535 = vld [vmem:[%s13 + $0x24] sm:$0xf]
        %v2536 = vld [vmem:[%s13 + $0x28] sm:$0xf]
        %v2537 = vld [vmem:[%s13 + $0x2c] sm:$0xf]
        %s2538 = scalar_lea.vmem %s12, 1
        %v2539 = vld [vmem:[%s2538] sm:$0x1]
        %v2541 = vsel %vm2475, %v2539, 0
        %2543 = vmatprep.subr.bf16.mxu0 0
        %2544 = vmatpush1.bf16.msra.mxu0 %v2483
        %2545 = vmatprep.subr.bf16.mxu0 0
        %2546 = vmatpush1.bf16.msra.mxu0 0
        %2547 = vmatprep.subr.bf16.mxu0 0
        %2548 = vmatpush1.bf16.msra.mxu0 0
        %2549 = vmatprep.subr.bf16.mxu0 0
        %2550 = vmatpush1.bf16.msra.mxu0 0
        %2551 = vmatprep.subr.bf16.mxu0 0
        %2552 = vmatpush1.bf16.msra.mxu0 0
        %2553 = vmatprep.subr.bf16.mxu0 0
        %2554 = vmatpush1.bf16.msra.mxu0 0
        %2555 = vmatprep.subr.bf16.mxu0 0
        %2556 = vmatpush1.bf16.msra.mxu0 0
        %2557 = vmatprep.subr.bf16.mxu0 0
        %2558 = vmatpush1.bf16.msra.mxu0 0
        %2559 = vmatprep.subr.bf16.mxu0 0
        %2560 = vmatpush1.bf16.msra.mxu0 0
        %2561 = vmatprep.subr.bf16.mxu0 0
        %2562 = vmatpush1.bf16.msra.mxu0 0
        %2563 = vmatprep.subr.bf16.mxu0 0
        %2564 = vmatpush1.bf16.msra.mxu0 0
        %2565 = vmatprep.subr.bf16.mxu0 0
        %2566 = vmatpush1.bf16.msra.mxu0 0
        %2567 = vmatprep.subr.bf16.mxu0 0
        %2568 = vmatpush1.bf16.msra.mxu0 0
        %2569 = vmatprep.subr.bf16.mxu0 0
        %2570 = vmatpush1.bf16.msra.mxu0 0
        %2571 = vmatprep.subr.bf16.mxu0 0
        %2572 = vmatpush1.bf16.msra.mxu0 0
        %2573 = vmatprep.subr.bf16.mxu0 0
        %2574 = vmatpush1.bf16.msra.mxu0 0
        %2575 = vmatprep.mubr.bf16.mxu0 0
        %2576 = vmatmul.mubr.bf16.gmra.mrb[0].mxu0 %v2541
        %v2577 = vpop.f32.mrb[0].mxu0
        %v2578 = vadd.f32 0.0, %v2577
        %v2579 = vpop.f32.mrb[0].mxu0
        %v2580 = vpop.f32.mrb[0].mxu0
        %v2581 = vpop.f32.mrb[0].mxu0
        %2582 = vdwg.mxu0
        %v2583 = vpack.c.bf16 %v2578, %v2578
        %s2584 = scalar_lea.vmem %s13, 48
        %v2585 = vld [vmem:[%s2584] sm:$0xf]
        %v2586 = vld [vmem:[%s2584 + $0x4] sm:$0xf]
        %v2587 = vld [vmem:[%s2584 + $0x8] sm:$0xf]
        %v2588 = vld [vmem:[%s2584 + $0xc] sm:$0xf]
        %v2589 = vld [vmem:[%s2584 + $0x10] sm:$0xf]
        %v2590 = vld [vmem:[%s2584 + $0x14] sm:$0xf]
        %v2591 = vld [vmem:[%s2584 + $0x18] sm:$0xf]
        %v2592 = vld [vmem:[%s2584 + $0x1c] sm:$0xf]
        %v2593 = vld [vmem:[%s2584 + $0x20] sm:$0xf]
        %v2594 = vld [vmem:[%s2584 + $0x24] sm:$0xf]
        %v2595 = vld [vmem:[%s2584 + $0x28] sm:$0xf]
        %v2596 = vld [vmem:[%s2584 + $0x2c] sm:$0xf]
        %v2609 = vunpack.c.l.b16 %v2585
        %v2610 = vunpack.c.l.b16 %v2586
        %v2611 = vunpack.c.l.b16 %v2587
        %v2612 = vunpack.c.l.b16 %v2588
        %v2613 = vunpack.c.l.b16 %v2589
        %v2614 = vunpack.c.l.b16 %v2590
        %v2615 = vunpack.c.l.b16 %v2591
        %v2616 = vunpack.c.l.b16 %v2592
        %v2617 = vunpack.c.l.b16 %v2593
        %v2618 = vunpack.c.l.b16 %v2594
        %v2619 = vunpack.c.l.b16 %v2595
        %v2620 = vunpack.c.l.b16 %v2596
        %v2621 = vpack.c.b16 %v2610, %v2609
        %v2622 = vpack.c.b16 %v2612, %v2611
        %v2623 = vpack.c.b16 %v2614, %v2613
        %v2624 = vpack.c.b16 %v2616, %v2615
        %v2625 = vpack.c.b16 %v2618, %v2617
        %v2626 = vpack.c.b16 %v2620, %v2619
        %v2634 = vsel %vm2304, %v2583, 0
        %2636 = vmatprep.subr.bf16.mxu0 0
        %2637 = vmatpush1.bf16.msra.mxu0 %v2621
        %2638 = vmatprep.subr.bf16.mxu0 0
        %2639 = vmatpush1.bf16.msra.mxu0 %v2622
        %2640 = vmatprep.subr.bf16.mxu0 0
        %2641 = vmatpush1.bf16.msra.mxu0 %v2623
        %2642 = vmatprep.subr.bf16.mxu0 0
        %2643 = vmatpush1.bf16.msra.mxu0 %v2624
        %2644 = vmatprep.subr.bf16.mxu0 0
        %2645 = vmatpush1.bf16.msra.mxu0 %v2625
        %2646 = vmatprep.subr.bf16.mxu0 0
        %2647 = vmatpush1.bf16.msra.mxu0 %v2626
        %2648 = vmatprep.subr.bf16.mxu0 0
        %2649 = vmatpush1.bf16.msra.mxu0 0
        %2650 = vmatprep.subr.bf16.mxu0 0
        %2651 = vmatpush1.bf16.msra.mxu0 0
        %2652 = vmatprep.subr.bf16.mxu0 0
        %2653 = vmatpush1.bf16.msra.mxu0 0
        %2654 = vmatprep.subr.bf16.mxu0 0
        %2655 = vmatpush1.bf16.msra.mxu0 0
        %2656 = vmatprep.subr.bf16.mxu0 0
        %2657 = vmatpush1.bf16.msra.mxu0 0
        %2658 = vmatprep.subr.bf16.mxu0 0
        %2659 = vmatpush1.bf16.msra.mxu0 0
        %2660 = vmatprep.subr.bf16.mxu0 0
        %2661 = vmatpush1.bf16.msra.mxu0 0
        %2662 = vmatprep.subr.bf16.mxu0 0
        %2663 = vmatpush1.bf16.msra.mxu0 0
        %2664 = vmatprep.subr.bf16.mxu0 0
        %2665 = vmatpush1.bf16.msra.mxu0 0
        %2666 = vmatprep.subr.bf16.mxu0 0
        %2667 = vmatpush1.bf16.msra.mxu0 0
        %2668 = vmatprep.mubr.bf16.mxu0 0
        %2669 = vmatmul.mubr.bf16.gmra.mrb[0].mxu0 %v2634
        %v2670 = vpop.f32.mrb[0].mxu0
        %v2671 = vadd.f32 0.0, %v2670
        %v2672 = vpop.f32.mrb[0].mxu0
        %v2673 = vpop.f32.mrb[0].mxu0
        %v2674 = vpop.f32.mrb[0].mxu0
        %2675 = vdwg.mxu0
        %v2688 = vunpack.c.l.b16 %v2526
        %v2689 = vunpack.c.l.b16 %v2527
        %v2690 = vunpack.c.l.b16 %v2528
        %v2691 = vunpack.c.l.b16 %v2529
        %v2692 = vunpack.c.l.b16 %v2530
        %v2693 = vunpack.c.l.b16 %v2531
        %v2694 = vunpack.c.l.b16 %v2532
        %v2695 = vunpack.c.l.b16 %v2533
        %v2696 = vunpack.c.l.b16 %v2534
        %v2697 = vunpack.c.l.b16 %v2535
        %v2698 = vunpack.c.l.b16 %v2536
        %v2699 = vunpack.c.l.b16 %v2537
        %v2700 = vpack.c.b16 %v2689, %v2688
        %v2701 = vpack.c.b16 %v2691, %v2690
        %v2702 = vpack.c.b16 %v2693, %v2692
        %v2703 = vpack.c.b16 %v2695, %v2694
        %v2704 = vpack.c.b16 %v2697, %v2696
        %v2705 = vpack.c.b16 %v2699, %v2698
        %v2713 = vsel %vm2304, %v2525, 0
        %2715 = vmatprep.subr.bf16.mxu0 0
        %2716 = vmatpush1.bf16.msra.mxu0 %v2700
        %2717 = vmatprep.subr.bf16.mxu0 0
        %2718 = vmatpush1.bf16.msra.mxu0 %v2701
        %2719 = vmatprep.subr.bf16.mxu0 0
        %2720 = vmatpush1.bf16.msra.mxu0 %v2702
        %2721 = vmatprep.subr.bf16.mxu0 0
        %2722 = vmatpush1.bf16.msra.mxu0 %v2703
        %2723 = vmatprep.subr.bf16.mxu0 0
        %2724 = vmatpush1.bf16.msra.mxu0 %v2704
        %2725 = vmatprep.subr.bf16.mxu0 0
        %2726 = vmatpush1.bf16.msra.mxu0 %v2705
        %2727 = vmatprep.subr.bf16.mxu0 0
        %2728 = vmatpush1.bf16.msra.mxu0 0
        %2729 = vmatprep.subr.bf16.mxu0 0
        %2730 = vmatpush1.bf16.msra.mxu0 0
        %2731 = vmatprep.subr.bf16.mxu0 0
        %2732 = vmatpush1.bf16.msra.mxu0 0
        %2733 = vmatprep.subr.bf16.mxu0 0
        %2734 = vmatpush1.bf16.msra.mxu0 0
        %2735 = vmatprep.subr.bf16.mxu0 0
        %2736 = vmatpush1.bf16.msra.mxu0 0
        %2737 = vmatprep.subr.bf16.mxu0 0
        %2738 = vmatpush1.bf16.msra.mxu0 0
        %2739 = vmatprep.subr.bf16.mxu0 0
        %2740 = vmatpush1.bf16.msra.mxu0 0
        %2741 = vmatprep.subr.bf16.mxu0 0
        %2742 = vmatpush1.bf16.msra.mxu0 0
        %2743 = vmatprep.subr.bf16.mxu0 0
        %2744 = vmatpush1.bf16.msra.mxu0 0
        %2745 = vmatprep.subr.bf16.mxu0 0
        %2746 = vmatpush1.bf16.msra.mxu0 0
        %2747 = vmatprep.mubr.bf16.mxu0 0
        %2748 = vmatmul.mubr.bf16.gmra.mrb[0].mxu0 %v2713
        %v2749 = vpop.f32.mrb[0].mxu0
        %v2750 = vadd.f32 %v2671, %v2749
        %v2751 = vpop.f32.mrb[0].mxu0
        %v2752 = vpop.f32.mrb[0].mxu0
        %v2753 = vpop.f32.mrb[0].mxu0
        %2754 = vdwg.mxu0
        %s2755 = scalar_lea.vmem %s12, 2
        %v2756 = vld [vmem:[%s2755] sm:$0x1]
        %v2758 = vsel %vm2475, %v2756, 0
        %2760 = vmatprep.subr.bf16.mxu0 0
        %2761 = vmatpush1.bf16.msra.mxu0 %v2483
        %2762 = vmatprep.subr.bf16.mxu0 0
        %2763 = vmatpush1.bf16.msra.mxu0 0
        %2764 = vmatprep.subr.bf16.mxu0 0
        %2765 = vmatpush1.bf16.msra.mxu0 0
        %2766 = vmatprep.subr.bf16.mxu0 0
        %2767 = vmatpush1.bf16.msra.mxu0 0
        %2768 = vmatprep.subr.bf16.mxu0 0
        %2769 = vmatpush1.bf16.msra.mxu0 0
        %2770 = vmatprep.subr.bf16.mxu0 0
        %2771 = vmatpush1.bf16.msra.mxu0 0
        %2772 = vmatprep.subr.bf16.mxu0 0
        %2773 = vmatpush1.bf16.msra.mxu0 0
        %2774 = vmatprep.subr.bf16.mxu0 0
        %2775 = vmatpush1.bf16.msra.mxu0 0
        %2776 = vmatprep.subr.bf16.mxu0 0
        %2777 = vmatpush1.bf16.msra.mxu0 0
        %2778 = vmatprep.subr.bf16.mxu0 0
        %2779 = vmatpush1.bf16.msra.mxu0 0
        %2780 = vmatprep.subr.bf16.mxu0 0
        %2781 = vmatpush1.bf16.msra.mxu0 0
        %2782 = vmatprep.subr.bf16.mxu0 0
        %2783 = vmatpush1.bf16.msra.mxu0 0
        %2784 = vmatprep.subr.bf16.mxu0 0
        %2785 = vmatpush1.bf16.msra.mxu0 0
        %2786 = vmatprep.subr.bf16.mxu0 0
        %2787 = vmatpush1.bf16.msra.mxu0 0
        %2788 = vmatprep.subr.bf16.mxu0 0
        %2789 = vmatpush1.bf16.msra.mxu0 0
        %2790 = vmatprep.subr.bf16.mxu0 0
        %2791 = vmatpush1.bf16.msra.mxu0 0
        %2792 = vmatprep.mubr.bf16.mxu0 0
        %2793 = vmatmul.mubr.bf16.gmra.mrb[0].mxu0 %v2758
        %v2794 = vpop.f32.mrb[0].mxu0
        %v2795 = vadd.f32 0.0, %v2794
        %v2796 = vpop.f32.mrb[0].mxu0
        %v2797 = vpop.f32.mrb[0].mxu0
        %v2798 = vpop.f32.mrb[0].mxu0
        %2799 = vdwg.mxu0
        %v2800 = vpack.c.bf16 %v2795, %v2795
        %s2801 = scalar_lea.vmem %s13, 96
        %v2802 = vld [vmem:[%s2801] sm:$0xf]
        %v2803 = vld [vmem:[%s2801 + $0x4] sm:$0xf]
        %v2804 = vld [vmem:[%s2801 + $0x8] sm:$0xf]
        %v2805 = vld [vmem:[%s2801 + $0xc] sm:$0xf]
        %v2806 = vld [vmem:[%s2801 + $0x10] sm:$0xf]
        %v2807 = vld [vmem:[%s2801 + $0x14] sm:$0xf]
        %v2808 = vld [vmem:[%s2801 + $0x18] sm:$0xf]
        %v2809 = vld [vmem:[%s2801 + $0x1c] sm:$0xf]
        %v2810 = vld [vmem:[%s2801 + $0x20] sm:$0xf]
        %v2811 = vld [vmem:[%s2801 + $0x24] sm:$0xf]
        %v2812 = vld [vmem:[%s2801 + $0x28] sm:$0xf]
        %v2813 = vld [vmem:[%s2801 + $0x2c] sm:$0xf]
        %v2826 = vunpack.c.l.b16 %v2802
        %v2827 = vunpack.c.l.b16 %v2803
        %v2828 = vunpack.c.l.b16 %v2804
        %v2829 = vunpack.c.l.b16 %v2805
        %v2830 = vunpack.c.l.b16 %v2806
        %v2831 = vunpack.c.l.b16 %v2807
        %v2832 = vunpack.c.l.b16 %v2808
        %v2833 = vunpack.c.l.b16 %v2809
        %v2834 = vunpack.c.l.b16 %v2810
        %v2835 = vunpack.c.l.b16 %v2811
        %v2836 = vunpack.c.l.b16 %v2812
        %v2837 = vunpack.c.l.b16 %v2813
        %v2838 = vpack.c.b16 %v2827, %v2826
        %v2839 = vpack.c.b16 %v2829, %v2828
        %v2840 = vpack.c.b16 %v2831, %v2830
        %v2841 = vpack.c.b16 %v2833, %v2832
        %v2842 = vpack.c.b16 %v2835, %v2834
        %v2843 = vpack.c.b16 %v2837, %v2836
        %v2851 = vsel %vm2304, %v2800, 0
        %2853 = vmatprep.subr.bf16.mxu0 0
        %2854 = vmatpush1.bf16.msra.mxu0 %v2838
        %2855 = vmatprep.subr.bf16.mxu0 0
        %2856 = vmatpush1.bf16.msra.mxu0 %v2839
        %2857 = vmatprep.subr.bf16.mxu0 0
        %2858 = vmatpush1.bf16.msra.mxu0 %v2840
        %2859 = vmatprep.subr.bf16.mxu0 0
        %2860 = vmatpush1.bf16.msra.mxu0 %v2841
        %2861 = vmatprep.subr.bf16.mxu0 0
        %2862 = vmatpush1.bf16.msra.mxu0 %v2842
        %2863 = vmatprep.subr.bf16.mxu0 0
        %2864 = vmatpush1.bf16.msra.mxu0 %v2843
        %2865 = vmatprep.subr.bf16.mxu0 0
        %2866 = vmatpush1.bf16.msra.mxu0 0
        %2867 = vmatprep.subr.bf16.mxu0 0
        %2868 = vmatpush1.bf16.msra.mxu0 0
        %2869 = vmatprep.subr.bf16.mxu0 0
        %2870 = vmatpush1.bf16.msra.mxu0 0
        %2871 = vmatprep.subr.bf16.mxu0 0
        %2872 = vmatpush1.bf16.msra.mxu0 0
        %2873 = vmatprep.subr.bf16.mxu0 0
        %2874 = vmatpush1.bf16.msra.mxu0 0
        %2875 = vmatprep.subr.bf16.mxu0 0
        %2876 = vmatpush1.bf16.msra.mxu0 0
        %2877 = vmatprep.subr.bf16.mxu0 0
        %2878 = vmatpush1.bf16.msra.mxu0 0
        %2879 = vmatprep.subr.bf16.mxu0 0
        %2880 = vmatpush1.bf16.msra.mxu0 0
        %2881 = vmatprep.subr.bf16.mxu0 0
        %2882 = vmatpush1.bf16.msra.mxu0 0
        %2883 = vmatprep.subr.bf16.mxu0 0
        %2884 = vmatpush1.bf16.msra.mxu0 0
        %2885 = vmatprep.mubr.bf16.mxu0 0
        %2886 = vmatmul.mubr.bf16.gmra.mrb[0].mxu0 %v2851
        %v2887 = vpop.f32.mrb[0].mxu0
        %v2888 = vadd.f32 0.0, %v2887
        %v2889 = vpop.f32.mrb[0].mxu0
        %v2890 = vpop.f32.mrb[0].mxu0
        %v2891 = vpop.f32.mrb[0].mxu0
        %2892 = vdwg.mxu0
        %v2893 = vadd.f32 %v2750, %v2888
        %s2894 = scalar_lea.vmem %s12, 3
        %v2895 = vld [vmem:[%s2894] sm:$0x1]
        %v2897 = vsel %vm2475, %v2895, 0
        %2899 = vmatprep.subr.bf16.mxu0 0
        %2900 = vmatpush1.bf16.msra.mxu0 %v2483
        %2901 = vmatprep.subr.bf16.mxu0 0
        %2902 = vmatpush1.bf16.msra.mxu0 0
        %2903 = vmatprep.subr.bf16.mxu0 0
        %2904 = vmatpush1.bf16.msra.mxu0 0
        %2905 = vmatprep.subr.bf16.mxu0 0
        %2906 = vmatpush1.bf16.msra.mxu0 0
        %2907 = vmatprep.subr.bf16.mxu0 0
        %2908 = vmatpush1.bf16.msra.mxu0 0
        %2909 = vmatprep.subr.bf16.mxu0 0
        %2910 = vmatpush1.bf16.msra.mxu0 0
        %2911 = vmatprep.subr.bf16.mxu0 0
        %2912 = vmatpush1.bf16.msra.mxu0 0
        %2913 = vmatprep.subr.bf16.mxu0 0
        %2914 = vmatpush1.bf16.msra.mxu0 0
        %2915 = vmatprep.subr.bf16.mxu0 0
        %2916 = vmatpush1.bf16.msra.mxu0 0
        %2917 = vmatprep.subr.bf16.mxu0 0
        %2918 = vmatpush1.bf16.msra.mxu0 0
        %2919 = vmatprep.subr.bf16.mxu0 0
        %2920 = vmatpush1.bf16.msra.mxu0 0
        %2921 = vmatprep.subr.bf16.mxu0 0
        %2922 = vmatpush1.bf16.msra.mxu0 0
        %2923 = vmatprep.subr.bf16.mxu0 0
        %2924 = vmatpush1.bf16.msra.mxu0 0
        %2925 = vmatprep.subr.bf16.mxu0 0
        %2926 = vmatpush1.bf16.msra.mxu0 0
        %2927 = vmatprep.subr.bf16.mxu0 0
        %2928 = vmatpush1.bf16.msra.mxu0 0
        %2929 = vmatprep.subr.bf16.mxu0 0
        %2930 = vmatpush1.bf16.msra.mxu0 0
        %2931 = vmatprep.mubr.bf16.mxu0 0
        %2932 = vmatmul.mubr.bf16.gmra.mrb[0].mxu0 %v2897
        %v2933 = vpop.f32.mrb[0].mxu0
        %v2934 = vadd.f32 0.0, %v2933
        %v2935 = vpop.f32.mrb[0].mxu0
        %v2936 = vpop.f32.mrb[0].mxu0
        %v2937 = vpop.f32.mrb[0].mxu0
        %2938 = vdwg.mxu0
        %v2939 = vpack.c.bf16 %v2934, %v2934
        %s2940 = scalar_lea.vmem %s13, 144
        %v2941 = vld [vmem:[%s2940] sm:$0xf]
        %v2942 = vld [vmem:[%s2940 + $0x4] sm:$0xf]
        %v2943 = vld [vmem:[%s2940 + $0x8] sm:$0xf]
        %v2944 = vld [vmem:[%s2940 + $0xc] sm:$0xf]
        %v2945 = vld [vmem:[%s2940 + $0x10] sm:$0xf]
        %v2946 = vld [vmem:[%s2940 + $0x14] sm:$0xf]
        %v2947 = vld [vmem:[%s2940 + $0x18] sm:$0xf]
        %v2948 = vld [vmem:[%s2940 + $0x1c] sm:$0xf]
        %v2949 = vld [vmem:[%s2940 + $0x20] sm:$0xf]
        %v2950 = vld [vmem:[%s2940 + $0x24] sm:$0xf]
        %v2951 = vld [vmem:[%s2940 + $0x28] sm:$0xf]
        %v2952 = vld [vmem:[%s2940 + $0x2c] sm:$0xf]
        %v2965 = vunpack.c.l.b16 %v2941
        %v2966 = vunpack.c.l.b16 %v2942
        %v2967 = vunpack.c.l.b16 %v2943
        %v2968 = vunpack.c.l.b16 %v2944
        %v2969 = vunpack.c.l.b16 %v2945
        %v2970 = vunpack.c.l.b16 %v2946
        %v2971 = vunpack.c.l.b16 %v2947
        %v2972 = vunpack.c.l.b16 %v2948
        %v2973 = vunpack.c.l.b16 %v2949
        %v2974 = vunpack.c.l.b16 %v2950
        %v2975 = vunpack.c.l.b16 %v2951
        %v2976 = vunpack.c.l.b16 %v2952
        %v2977 = vpack.c.b16 %v2966, %v2965
        %v2978 = vpack.c.b16 %v2968, %v2967
        %v2979 = vpack.c.b16 %v2970, %v2969
        %v2980 = vpack.c.b16 %v2972, %v2971
        %v2981 = vpack.c.b16 %v2974, %v2973
        %v2982 = vpack.c.b16 %v2976, %v2975
        %v2990 = vsel %vm2304, %v2939, 0
        %2992 = vmatprep.subr.bf16.mxu0 0
        %2993 = vmatpush1.bf16.msra.mxu0 %v2977
        %2994 = vmatprep.subr.bf16.mxu0 0
        %2995 = vmatpush1.bf16.msra.mxu0 %v2978
        %2996 = vmatprep.subr.bf16.mxu0 0
        %2997 = vmatpush1.bf16.msra.mxu0 %v2979
        %2998 = vmatprep.subr.bf16.mxu0 0
        %2999 = vmatpush1.bf16.msra.mxu0 %v2980
        %3000 = vmatprep.subr.bf16.mxu0 0
        %3001 = vmatpush1.bf16.msra.mxu0 %v2981
        %3002 = vmatprep.subr.bf16.mxu0 0
        %3003 = vmatpush1.bf16.msra.mxu0 %v2982
        %3004 = vmatprep.subr.bf16.mxu0 0
        %3005 = vmatpush1.bf16.msra.mxu0 0
        %3006 = vmatprep.subr.bf16.mxu0 0
        %3007 = vmatpush1.bf16.msra.mxu0 0
        %3008 = vmatprep.subr.bf16.mxu0 0
        %3009 = vmatpush1.bf16.msra.mxu0 0
        %3010 = vmatprep.subr.bf16.mxu0 0
        %3011 = vmatpush1.bf16.msra.mxu0 0
        %3012 = vmatprep.subr.bf16.mxu0 0
        %3013 = vmatpush1.bf16.msra.mxu0 0
        %3014 = vmatprep.subr.bf16.mxu0 0
        %3015 = vmatpush1.bf16.msra.mxu0 0
        %3016 = vmatprep.subr.bf16.mxu0 0
        %3017 = vmatpush1.bf16.msra.mxu0 0
        %3018 = vmatprep.subr.bf16.mxu0 0
        %3019 = vmatpush1.bf16.msra.mxu0 0
        %3020 = vmatprep.subr.bf16.mxu0 0
        %3021 = vmatpush1.bf16.msra.mxu0 0
        %3022 = vmatprep.subr.bf16.mxu0 0
        %3023 = vmatpush1.bf16.msra.mxu0 0
        %3024 = vmatprep.mubr.bf16.mxu0 0
        %3025 = vmatmul.mubr.bf16.gmra.mrb[0].mxu0 %v2990
        %v3026 = vpop.f32.mrb[0].mxu0
        %v3027 = vadd.f32 0.0, %v3026
        %v3028 = vpop.f32.mrb[0].mxu0
        %v3029 = vpop.f32.mrb[0].mxu0
        %v3030 = vpop.f32.mrb[0].mxu0
        %3031 = vdwg.mxu0
        %v3032 = vadd.f32 %v2893, %v3027
        %v3033 = vld [vmem:[%s14] sm:$0x1]
        %v3035 = vlaneseq
        %v3036 = vshrl.u32 %v3035, 7
        %v3037 = vsub.s32 0, %v3036
        %v3038 = vrot.slane %v3033, %v3037
        %v3040 = vadd.f32 %v3032, %v3038
        %vm3041 = vcmask 9216
        %3042 = vst.msk [vmem:[%s585] sm:$0x3] %vm3041, %v3040
        %s3043 = sand.u32 %s361, 1
        %s3044 = scalar_lea.sflag [#allocation4], %s3043
        %s3045 = sand.u32 %s361, 1
        %s3046 = smul.addr %s3045, 2
        %s3047 = scalar_lea.vmem [#allocation14], %s3046
        // Predicated region
        $region109: #{_lambda_.1} parent=79 // pred_check
          %p3048 = pneg %p371
        $region110: #{_lambda_.1} parent=79 // pred_check_branch
          %3050 = sbr.rel (%p3048) target = $region112
        $region111: #{_lambda_.1} parent=79 // pred_region
          %s3052 = ssub.s32 32, 32
          %3053 = vsyncadd %s3044, %s3052
          %s3054 = smul.addr %s33, 32
          %s3055 = scalar_lea.hbm %s15, %s3054
          %s3057 = sshll.u32 %s3047, 4
          %s3058 = int_to_ptr.vmem [resolvable:$true] %s3057
          %3060 = dma.vmem_to_hbm [thread:$0]  %s3058, 32, %s3055, %s3044
        $region112: #{_lambda_.1} parent=79 // pred_fallthru
          _
      $region80: #{_lambda_.1} parent=5 // pred_fallthru
        _
      %p3061 = scmp.le.s32.totalorder 2, %s28
      // Predicated region
      $region113: #{_lambda_.1} parent=5 // pred_check
        %p3062 = pneg %p3061
      $region114: #{_lambda_.1} parent=5 // pred_check_branch
        %3064 = sbr.rel (%p3062) target = $region116
      $region115: #{_lambda_.1} parent=5 // pred_region
        %s3065 = ssub.s32 %s28, 2
        // Predicated region
        $region117: #{_lambda_.1} parent=115 // pred_check
          %p3066 = pneg %p377
        $region118: #{_lambda_.1} parent=115 // pred_check_branch
          %3068 = sbr.rel (%p3066) target = $region120
        $region119: #{_lambda_.1} parent=115 // pred_region
          %s3069 = sand.u32 %s362, 1
          %s3070 = scalar_lea.sflag [#allocation4], %s3069
          %s3071 = sand.u32 %s362, 1
          %s3072 = smul.addr %s3071, 2
          %s3073 = scalar_lea.vmem [#allocation14], %s3072
          %3074 = dma.done %s3070, 32
        $region120: #{_lambda_.1} parent=115 // pred_fallthru
          _
      $region116: #{_lambda_.1} parent=5 // pred_fallthru
        _
    $region6: #{_lambda_.1} parent=1 // loop_footer
      %s32 = sadd.s32 1, %s28
    $region7: #{_lambda_.1} parent=1 // loop_footer_branch
      %27 = sbr.rel target = $region3
    $region8: #{_lambda_.1} parent=1 // loop_exit
      _
    %3075 = vsyncpa [#allocation3], 1
    %s3076 = scalar_lea.sflag [#allocation3], 1
    %3077 = vsyncpa %s3076, 1
    %3078 = vsyncpa [#allocation6], 1
    %3079 = vsyncpa [#allocation9], 1
    %3080 = vsyncpa [#allocation12], 1
    %3081 = vsyncpa [#allocation4], 1
    %s3082 = scalar_lea.sflag [#allocation4], 1
    %3083 = vsyncpa %s3082, 1

</llo_original>
